<compile_context>
chip_gen: v5e
topology: v5e:2x2
jax: 0.10.0
libtpu: 0.0.40
codegen_flags: <defaults>
</compile_context>

<pallas_src>
import math

import jax
import jax.numpy as jnp
from jax.experimental import pallas as pl
from jax.experimental.pallas import tpu as pltpu

EPS = 1e-5                        # nn.BatchNorm2d default eps
LANE = 128                        # channels padded to a multiple of the 128-lane width
W_OFF = 8                         # sublane-aligned W offset of the scratch interior
_IM2COL_LHS_MAX_BYTES = 8 << 20   # VMEM budget for the (M, 9*Cpad) im2col lhs scratch


def _round_up(x, m):
    return ((x + m - 1) // m) * m


def _make_downblock_kernel(nb_conv, N, Hp, Wp, cpad, cout, use_im2col, num_bufs):
    M = N * Hp * Wp
    inv_m = 1.0 / M

    def kernel(*refs):
        x_ref = refs[0]                              # (N, Hp, Wp, cpad) pooled, bf16
        param_refs = refs[1:1 + 3 * nb_conv]         # (w, gamma, beta) per layer
        out_ref = refs[1 + 3 * nb_conv]              # (N, Hp, Wp, cout) f32, NHWC
        scratch = refs[2 + 3 * nb_conv:]
        bufs = scratch[:num_bufs]                    # padded ping-pong activations, bf16
        lhs_ref = scratch[num_bufs] if use_im2col else None

        # ---- zero only the halo of each padded scratch, once.  Interiors are always
        # fully overwritten (all cpad lanes) before they are read, so no stale data. ----
        for buf in bufs:
            _, hb, wb, cb = buf.shape
            buf[:, 0:1, :, :] = jnp.zeros((N, 1, wb, cb), buf.dtype)
            buf[:, hb - 1:hb, :, :] = jnp.zeros((N, 1, wb, cb), buf.dtype)
            buf[:, :, 0:W_OFF, :] = jnp.zeros((N, hb, W_OFF, cb), buf.dtype)
            buf[:, :, W_OFF + Wp:wb, :] = jnp.zeros((N, hb, wb - W_OFF - Wp, cb), buf.dtype)

        # ---- pooled map (pooling + channel padding already done in the XLA wrapper):
        # one aligned, unmasked whole-slab store into the interior ----
        bufs[0][:, 1:Hp + 1, W_OFF:W_OFF + Wp, :] = x_ref[...]

        # ---- nb_conv x (3x3 conv -> train-mode BatchNorm -> ReLU) ----
        for l in range(nb_conv):
            w_ref, g_ref, be_ref = param_refs[3 * l:3 * l + 3]
            cur = bufs[l % num_bufs]

            if use_im2col:
                # Build the im2col lhs with 9 lane-aligned whole-slab stores (each tap
                # block is a full cpad = 128-lane multiple), then one MXU matmul with
                # K = 9*cpad (fills the 256-deep contraction on v6e/v7x).
                for dy in range(3):
                    for dx in range(3):
                        t = dy * 3 + dx
                        lhs_ref[:, :, :, t * cpad:(t + 1) * cpad] = \
                            cur[:, dy:dy + Hp, W_OFF - 1 + dx:W_OFF - 1 + dx + Wp, :]
                acc = jnp.dot(lhs_ref[...].reshape(M, 9 * cpad), w_ref[...],
                              preferred_element_type=jnp.float32)        # (M, cpad) f32
            else:
                # Wide layers: 9 accumulating matmuls, each already K = cpad deep.
                acc = jnp.zeros((M, cpad), jnp.float32)
                for dy in range(3):
                    for dx in range(3):
                        t = dy * 3 + dx
                        patch = cur[:, dy:dy + Hp,
                                    W_OFF - 1 + dx:W_OFF - 1 + dx + Wp, :].reshape(M, cpad)
                        acc = acc + jnp.dot(patch, w_ref[t * cpad:(t + 1) * cpad, :],
                                            preferred_element_type=jnp.float32)

            # Conv bias intentionally omitted: a per-channel constant cancels exactly
            # under train-mode (batch-statistics) BatchNorm.  (Not valid for eval mode.)
            # Single-pass statistics; all BN math in f32.  Padded channels have zero
            # weights/gamma/beta -> they stay exactly 0 through scale/shift/ReLU.
            mean = jnp.sum(acc, axis=0, keepdims=True) * inv_m            # (1, cpad)
            ex2 = jnp.sum(acc * acc, axis=0, keepdims=True) * inv_m
            var = jnp.maximum(ex2 - mean * mean, 0.0)                     # guard cancellation
            scale = g_ref[...] * jax.lax.rsqrt(var + EPS)                 # gamma folded in
            shift = be_ref[...] - mean * scale
            h = jnp.maximum(acc * scale + shift, 0.0)                     # BN affine + ReLU

            if l + 1 < nb_conv:
                nxt = bufs[(l + 1) % num_bufs]
                nxt[:, 1:Hp + 1, W_OFF:W_OFF + Wp, :] = \
                    h.astype(nxt.dtype).reshape(N, Hp, Wp, cpad)          # aligned, unmasked
            else:
                out_ref[...] = h[:, :cout].reshape(N, Hp, Wp, cout)

    return kernel


def downblock_forward(x_nchw, params, output_layout="NCHW"):
    """params: list of (w[3,3,cin,cout], b[cout], gamma[cout], beta[cout]) per conv.

    output_layout: "NCHW" (PyTorch-compatible, default) or "NHWC" (skips the final
    transpose so the lane-dense kernel output goes straight to the consumer)."""
    N, Cin, H, W = x_nchw.shape
    assert H % 2 == 0 and W % 2 == 0
    nb_conv = len(params)
    Hp, Wp = H // 2, W // 2
    M = N * Hp * Wp

    cins = [p[0].shape[2] for p in params]
    couts = [p[0].shape[3] for p in params]
    assert cins[0] == Cin
    cout = couts[-1]
    cpad = _round_up(max(cins + couts), LANE)         # uniform lane-padded channel width
    w_pad = _round_up(W_OFF + Wp + 1, 8)              # padded scratch W (sublane aligned)

    # --- MaxPool2d(2) + layout prep stay in plain XLA: NCHW -> NHWC, 2x2 max, and
    # channel zero-padding to the uniform lane width so all kernel stores are unmasked.
    x_nhwc = jnp.transpose(x_nchw, (0, 2, 3, 1)).astype(jnp.float32)
    pooled = x_nhwc.reshape(N, Hp, 2, Wp, 2, Cin).max(axis=(2, 4))
    pooled = jnp.pad(pooled, ((0, 0), (0, 0), (0, 0), (0, cpad - Cin)))
    pooled = pooled.astype(jnp.bfloat16)              # bf16 storage / MXU operand

    flat_params = []
    for (w, b, g, be) in params:
        cin_l, cout_l = w.shape[2], w.shape[3]
        # Zero-padded weight rows/lanes keep padded channels exactly 0 inside the kernel.
        wp = jnp.zeros((9, cpad, cpad), jnp.float32)
        wp = wp.at[:, :cin_l, :cout_l].set(w.reshape(9, cin_l, cout_l).astype(jnp.float32))
        flat_params.append(wp.reshape(9 * cpad, cpad).astype(jnp.bfloat16))
        flat_params.append(jnp.pad(g.astype(jnp.float32).reshape(1, cout_l),
                                   ((0, 0), (0, cpad - cout_l))))
        flat_params.append(jnp.pad(be.astype(jnp.float32).reshape(1, cout_l),
                                   ((0, 0), (0, cpad - cout_l))))
        # conv bias b is NOT passed: it cancels exactly under train-mode BatchNorm.

    def fullspec(arr):
        nd = arr.ndim
        return pl.BlockSpec(arr.shape, lambda i, _nd=nd: (0,) * _nd)

    in_specs = [fullspec(pooled)] + [fullspec(p) for p in flat_params]

    num_bufs = 1 if nb_conv == 1 else 2
    lhs_bytes = N * Hp * Wp * 9 * cpad * 2
    use_im2col = (cpad <= 128) and (lhs_bytes <= _IM2COL_LHS_MAX_BYTES)

    scratch_shapes = [pltpu.VMEM((N, Hp + 2, w_pad, cpad), jnp.bfloat16)
                      for _ in range(num_bufs)]
    if use_im2col:
        scratch_shapes.append(pltpu.VMEM((N, Hp, Wp, 9 * cpad), jnp.bfloat16))

    # VMEM budget derived from actual buffer sizes (BlockSpec double-buffers the I/O),
    # with headroom, instead of a fixed large limit (v7x only has 64 MiB physical VMEM).
    scratch_bytes = (num_bufs * N * (Hp + 2) * w_pad * cpad * 2
                     + (lhs_bytes if use_im2col else 0))
    io_bytes = 2 * (pooled.size * 2
                    + sum(int(p.size) * p.dtype.itemsize for p in flat_params)
                    + M * cout * 4)
    vmem_limit = int(min(56 << 20, max(16 << 20,
                                       1.25 * (scratch_bytes + io_bytes) + (4 << 20))))

    kernel = _make_downblock_kernel(nb_conv, N, Hp, Wp, cpad, cout, use_im2col, num_bufs)
    out_nhwc = pl.pallas_call(
        kernel,
        out_shape=jax.ShapeDtypeStruct((N, Hp, Wp, cout), jnp.float32),
        grid=(1,),
        in_specs=in_specs,
        out_specs=pl.BlockSpec((N, Hp, Wp, cout), lambda i: (0, 0, 0, 0)),
        scratch_shapes=scratch_shapes,
        compiler_params=pltpu.CompilerParams(
            dimension_semantics=("arbitrary",),
            vmem_limit_bytes=vmem_limit),
    )(pooled, *flat_params)

    if output_layout == "NHWC":
        return out_nhwc
    return jnp.transpose(out_nhwc, (0, 3, 1, 2))      # NCHW like the PyTorch module


def init_downblock_params(key, in_channels, out_channels, nb_conv):
    params = []
    cin = in_channels
    for _ in range(nb_conv):
        key, k1, k2, k3, k4 = jax.random.split(key, 5)
        w = 0.2 * jax.random.normal(k1, (3, 3, cin, out_channels), jnp.float32)
        b = 0.1 * jax.random.normal(k2, (out_channels,), jnp.float32)
        g = 1.0 + 0.1 * jax.random.normal(k3, (out_channels,), jnp.float32)
        be = 0.1 * jax.random.normal(k4, (out_channels,), jnp.float32)
        params.append((w, b, g, be))
        cin = out_channels
    return params


def downblock_reference(x_nchw, params):
    """Pure-JAX f32 reference mirroring the PyTorch DownBlock forward (train-mode BN)."""
    x = x_nchw.astype(jnp.float32)
    N, C, H, W = x.shape
    x = x.reshape(N, C, H // 2, 2, W // 2, 2).max(axis=(3, 5))   # MaxPool2d(2)
    for (w, b, g, be) in params:
        y = jax.lax.conv_general_dilated(
            x, w, window_strides=(1, 1), padding=((1, 1), (1, 1)),
            dimension_numbers=("NCHW", "HWIO", "NCHW"))
        y = y + b.reshape(1, -1, 1, 1)
        mean = y.mean(axis=(0, 2, 3), keepdims=True)
        var = ((y - mean) ** 2).mean(axis=(0, 2, 3), keepdims=True)
        y = (y - mean) * jax.lax.rsqrt(var + EPS)
        y = y * g.reshape(1, -1, 1, 1) + be.reshape(1, -1, 1, 1)
        x = jnp.maximum(y, 0.0)
    return x


if __name__ == "__main__":
    key = jax.random.PRNGKey(0)
    key, kx = jax.random.split(key)

    N, Cin, H, W = 2, 4, 16, 16
    Cout, nb_conv = 8, 2

    x = jax.random.normal(kx, (N, Cin, H, W), jnp.float32)        # NCHW like PyTorch
    params = init_downblock_params(key, Cin, Cout, nb_conv)

    out = downblock_forward(x, params)
    out = jax.block_until_ready(out)

    ref = downblock_reference(x, params)
    assert out.shape == (N, Cout, H // 2, W // 2), out.shape
    # bf16 storage / MXU operands inside the kernel -> compare with a bf16-level bound.
    max_err = float(jnp.max(jnp.abs(out - ref)))
    assert max_err < 5e-2, f"max abs error too large: {max_err}"

    print("KERNEL_OK")
</pallas_src>

<mosaic_0001>
module attributes {stable_mosaic.version = 11 : i64} {
  func.func @kernel(%arg0: i32, %arg1: memref<2x8x8x128xbf16, #tpu.memory_space<vmem>>, %arg2: memref<1152x128xbf16, #tpu.memory_space<vmem>>, %arg3: memref<1x128xf32, #tpu.memory_space<vmem>>, %arg4: memref<1x128xf32, #tpu.memory_space<vmem>>, %arg5: memref<1152x128xbf16, #tpu.memory_space<vmem>>, %arg6: memref<1x128xf32, #tpu.memory_space<vmem>>, %arg7: memref<1x128xf32, #tpu.memory_space<vmem>>, %arg8: memref<2x8x8x8xf32, #tpu.memory_space<vmem>>, %arg9: memref<2x10x24x128xbf16, #tpu.memory_space<vmem>>, %arg10: memref<2x10x24x128xbf16, #tpu.memory_space<vmem>>, %arg11: memref<2x8x8x1152xbf16, #tpu.memory_space<vmem>>) attributes {dimension_semantics = [#tpu.dimension_semantics<arbitrary>], iteration_bounds = array<i64: 1>, scalar_prefetch = 0 : i64, scratch_operands = 3 : i64, tpu.core_type = #tpu.core_type<tc>, window_params = [{pipeline_mode = #tpu.pipeline_mode<synchronous>, transform_indices = @transform_0, window_bounds = array<i64: 2, 8, 8, 128>}, {pipeline_mode = #tpu.pipeline_mode<synchronous>, transform_indices = @transform_1, window_bounds = array<i64: 1152, 128>}, {pipeline_mode = #tpu.pipeline_mode<synchronous>, transform_indices = @transform_2, window_bounds = array<i64: 1, 128>}, {pipeline_mode = #tpu.pipeline_mode<synchronous>, transform_indices = @transform_3, window_bounds = array<i64: 1, 128>}, {pipeline_mode = #tpu.pipeline_mode<synchronous>, transform_indices = @transform_4, window_bounds = array<i64: 1152, 128>}, {pipeline_mode = #tpu.pipeline_mode<synchronous>, transform_indices = @transform_5, window_bounds = array<i64: 1, 128>}, {pipeline_mode = #tpu.pipeline_mode<synchronous>, transform_indices = @transform_6, window_bounds = array<i64: 1, 128>}, {pipeline_mode = #tpu.pipeline_mode<synchronous>, transform_indices = @transform_7, window_bounds = array<i64: 2, 8, 8, 8>}]} {
    %cst = arith.constant 0.000000e+00 : bf16
    %0 = vector.broadcast %cst : bf16 to vector<2x1x24x128xbf16>
    %c0 = arith.constant 0 : index
    %c0_0 = arith.constant 0 : index
    %c0_1 = arith.constant 0 : index
    %c0_2 = arith.constant 0 : index
    %1 = vector.load %arg9[%c0, %c0_0, %c0_1, %c0_2] : memref<2x10x24x128xbf16, #tpu.memory_space<vmem>>, vector<2x1x24x128xbf16>
    tpu.vector_store %arg9[%c0, %c0_0, %c0_1, %c0_2], %0 {strides = array<i32>} : memref<2x10x24x128xbf16, #tpu.memory_space<vmem>>, vector<2x1x24x128xbf16>,
    %cst_3 = arith.constant 0.000000e+00 : bf16
    %2 = vector.broadcast %cst_3 : bf16 to vector<2x1x24x128xbf16>
    %c0_4 = arith.constant 0 : index
    %c9 = arith.constant 9 : index
    %c0_5 = arith.constant 0 : index
    %c0_6 = arith.constant 0 : index
    %3 = vector.load %arg9[%c0_4, %c9, %c0_5, %c0_6] : memref<2x10x24x128xbf16, #tpu.memory_space<vmem>>, vector<2x1x24x128xbf16>
    tpu.vector_store %arg9[%c0_4, %c9, %c0_5, %c0_6], %2 {strides = array<i32>} : memref<2x10x24x128xbf16, #tpu.memory_space<vmem>>, vector<2x1x24x128xbf16>,
    %cst_7 = arith.constant 0.000000e+00 : bf16
    %4 = vector.broadcast %cst_7 : bf16 to vector<2x10x8x128xbf16>
    %c0_8 = arith.constant 0 : index
    %c0_9 = arith.constant 0 : index
    %c0_10 = arith.constant 0 : index
    %c0_11 = arith.constant 0 : index
    %5 = vector.load %arg9[%c0_8, %c0_9, %c0_10, %c0_11] : memref<2x10x24x128xbf16, #tpu.memory_space<vmem>>, vector<2x10x8x128xbf16>
    tpu.vector_store %arg9[%c0_8, %c0_9, %c0_10, %c0_11], %4 {strides = array<i32>} : memref<2x10x24x128xbf16, #tpu.memory_space<vmem>>, vector<2x10x8x128xbf16>,
    %cst_12 = arith.constant 0.000000e+00 : bf16
    %6 = vector.broadcast %cst_12 : bf16 to vector<2x10x8x128xbf16>
    %c0_13 = arith.constant 0 : index
    %c0_14 = arith.constant 0 : index
    %c16 = arith.constant 16 : index
    %c0_15 = arith.constant 0 : index
    %7 = vector.load %arg9[%c0_13, %c0_14, %c16, %c0_15] : memref<2x10x24x128xbf16, #tpu.memory_space<vmem>>, vector<2x10x8x128xbf16>
    tpu.vector_store %arg9[%c0_13, %c0_14, %c16, %c0_15], %6 {strides = array<i32>} : memref<2x10x24x128xbf16, #tpu.memory_space<vmem>>, vector<2x10x8x128xbf16>,
    %cst_16 = arith.constant 0.000000e+00 : bf16
    %8 = vector.broadcast %cst_16 : bf16 to vector<2x1x24x128xbf16>
    %c0_17 = arith.constant 0 : index
    %c0_18 = arith.constant 0 : index
    %c0_19 = arith.constant 0 : index
    %c0_20 = arith.constant 0 : index
    %9 = vector.load %arg10[%c0_17, %c0_18, %c0_19, %c0_20] : memref<2x10x24x128xbf16, #tpu.memory_space<vmem>>, vector<2x1x24x128xbf16>
    tpu.vector_store %arg10[%c0_17, %c0_18, %c0_19, %c0_20], %8 {strides = array<i32>} : memref<2x10x24x128xbf16, #tpu.memory_space<vmem>>, vector<2x1x24x128xbf16>,
    %cst_21 = arith.constant 0.000000e+00 : bf16
    %10 = vector.broadcast %cst_21 : bf16 to vector<2x1x24x128xbf16>
    %c0_22 = arith.constant 0 : index
    %c9_23 = arith.constant 9 : index
    %c0_24 = arith.constant 0 : index
    %c0_25 = arith.constant 0 : index
    %11 = vector.load %arg10[%c0_22, %c9_23, %c0_24, %c0_25] : memref<2x10x24x128xbf16, #tpu.memory_space<vmem>>, vector<2x1x24x128xbf16>
    tpu.vector_store %arg10[%c0_22, %c9_23, %c0_24, %c0_25], %10 {strides = array<i32>} : memref<2x10x24x128xbf16, #tpu.memory_space<vmem>>, vector<2x1x24x128xbf16>,
    %cst_26 = arith.constant 0.000000e+00 : bf16
    %12 = vector.broadcast %cst_26 : bf16 to vector<2x10x8x128xbf16>
    %c0_27 = arith.constant 0 : index
    %c0_28 = arith.constant 0 : index
    %c0_29 = arith.constant 0 : index
    %c0_30 = arith.constant 0 : index
    %13 = vector.load %arg10[%c0_27, %c0_28, %c0_29, %c0_30] : memref<2x10x24x128xbf16, #tpu.memory_space<vmem>>, vector<2x10x8x128xbf16>
    tpu.vector_store %arg10[%c0_27, %c0_28, %c0_29, %c0_30], %12 {strides = array<i32>} : memref<2x10x24x128xbf16, #tpu.memory_space<vmem>>, vector<2x10x8x128xbf16>,
    %cst_31 = arith.constant 0.000000e+00 : bf16
    %14 = vector.broadcast %cst_31 : bf16 to vector<2x10x8x128xbf16>
    %c0_32 = arith.constant 0 : index
    %c0_33 = arith.constant 0 : index
    %c16_34 = arith.constant 16 : index
    %c0_35 = arith.constant 0 : index
    %15 = vector.load %arg10[%c0_32, %c0_33, %c16_34, %c0_35] : memref<2x10x24x128xbf16, #tpu.memory_space<vmem>>, vector<2x10x8x128xbf16>
    tpu.vector_store %arg10[%c0_32, %c0_33, %c16_34, %c0_35], %14 {strides = array<i32>} : memref<2x10x24x128xbf16, #tpu.memory_space<vmem>>, vector<2x10x8x128xbf16>,
    %c0_36 = arith.constant 0 : index
    %c0_37 = arith.constant 0 : index
    %c0_38 = arith.constant 0 : index
    %c0_39 = arith.constant 0 : index
    %16 = vector.load %arg1[%c0_36, %c0_37, %c0_38, %c0_39] : memref<2x8x8x128xbf16, #tpu.memory_space<vmem>>, vector<2x8x8x128xbf16>
    %c0_40 = arith.constant 0 : index
    %c1 = arith.constant 1 : index
    %c8 = arith.constant 8 : index
    %c0_41 = arith.constant 0 : index
    %17 = vector.load %arg9[%c0_40, %c1, %c8, %c0_41] : memref<2x10x24x128xbf16, #tpu.memory_space<vmem>>, vector<2x8x8x128xbf16>
    tpu.vector_store %arg9[%c0_40, %c1, %c8, %c0_41], %16 {strides = array<i32>} : memref<2x10x24x128xbf16, #tpu.memory_space<vmem>>, vector<2x8x8x128xbf16>,
    %c0_42 = arith.constant 0 : index
    %c0_43 = arith.constant 0 : index
    %c7 = arith.constant 7 : index
    %c0_44 = arith.constant 0 : index
    %18 = vector.load %arg9[%c0_42, %c0_43, %c7, %c0_44] : memref<2x10x24x128xbf16, #tpu.memory_space<vmem>>, vector<2x8x8x128xbf16>
    %c0_45 = arith.constant 0 : index
    %c0_46 = arith.constant 0 : index
    %c0_47 = arith.constant 0 : index
    %c0_48 = arith.constant 0 : index
    %19 = vector.load %arg11[%c0_45, %c0_46, %c0_47, %c0_48] : memref<2x8x8x1152xbf16, #tpu.memory_space<vmem>>, vector<2x8x8x128xbf16>
    tpu.vector_store %arg11[%c0_45, %c0_46, %c0_47, %c0_48], %18 {strides = array<i32>} : memref<2x8x8x1152xbf16, #tpu.memory_space<vmem>>, vector<2x8x8x128xbf16>,
    %c0_49 = arith.constant 0 : index
    %c0_50 = arith.constant 0 : index
    %c8_51 = arith.constant 8 : index
    %c0_52 = arith.constant 0 : index
    %20 = vector.load %arg9[%c0_49, %c0_50, %c8_51, %c0_52] : memref<2x10x24x128xbf16, #tpu.memory_space<vmem>>, vector<2x8x8x128xbf16>
    %c0_53 = arith.constant 0 : index
    %c0_54 = arith.constant 0 : index
    %c0_55 = arith.constant 0 : index
    %c128 = arith.constant 128 : index
    %21 = vector.load %arg11[%c0_53, %c0_54, %c0_55, %c128] : memref<2x8x8x1152xbf16, #tpu.memory_space<vmem>>, vector<2x8x8x128xbf16>
    tpu.vector_store %arg11[%c0_53, %c0_54, %c0_55, %c128], %20 {strides = array<i32>} : memref<2x8x8x1152xbf16, #tpu.memory_space<vmem>>, vector<2x8x8x128xbf16>,
    %c0_56 = arith.constant 0 : index
    %c0_57 = arith.constant 0 : index
    %c9_58 = arith.constant 9 : index
    %c0_59 = arith.constant 0 : index
    %22 = vector.load %arg9[%c0_56, %c0_57, %c9_58, %c0_59] : memref<2x10x24x128xbf16, #tpu.memory_space<vmem>>, vector<2x8x8x128xbf16>
    %c0_60 = arith.constant 0 : index
    %c0_61 = arith.constant 0 : index
    %c0_62 = arith.constant 0 : index
    %c256 = arith.constant 256 : index
    %23 = vector.load %arg11[%c0_60, %c0_61, %c0_62, %c256] : memref<2x8x8x1152xbf16, #tpu.memory_space<vmem>>, vector<2x8x8x128xbf16>
    tpu.vector_store %arg11[%c0_60, %c0_61, %c0_62, %c256], %22 {strides = array<i32>} : memref<2x8x8x1152xbf16, #tpu.memory_space<vmem>>, vector<2x8x8x128xbf16>,
    %c0_63 = arith.constant 0 : index
    %c1_64 = arith.constant 1 : index
    %c7_65 = arith.constant 7 : index
    %c0_66 = arith.constant 0 : index
    %24 = vector.load %arg9[%c0_63, %c1_64, %c7_65, %c0_66] : memref<2x10x24x128xbf16, #tpu.memory_space<vmem>>, vector<2x8x8x128xbf16>
    %c0_67 = arith.constant 0 : index
    %c0_68 = arith.constant 0 : index
    %c0_69 = arith.constant 0 : index
    %c384 = arith.constant 384 : index
    %25 = vector.load %arg11[%c0_67, %c0_68, %c0_69, %c384] : memref<2x8x8x1152xbf16, #tpu.memory_space<vmem>>, vector<2x8x8x128xbf16>
    tpu.vector_store %arg11[%c0_67, %c0_68, %c0_69, %c384], %24 {strides = array<i32>} : memref<2x8x8x1152xbf16, #tpu.memory_space<vmem>>, vector<2x8x8x128xbf16>,
    %c0_70 = arith.constant 0 : index
    %c1_71 = arith.constant 1 : index
    %c8_72 = arith.constant 8 : index
    %c0_73 = arith.constant 0 : index
    %26 = vector.load %arg9[%c0_70, %c1_71, %c8_72, %c0_73] : memref<2x10x24x128xbf16, #tpu.memory_space<vmem>>, vector<2x8x8x128xbf16>
    %c0_74 = arith.constant 0 : index
    %c0_75 = arith.constant 0 : index
    %c0_76 = arith.constant 0 : index
    %c512 = arith.constant 512 : index
    %27 = vector.load %arg11[%c0_74, %c0_75, %c0_76, %c512] : memref<2x8x8x1152xbf16, #tpu.memory_space<vmem>>, vector<2x8x8x128xbf16>
    tpu.vector_store %arg11[%c0_74, %c0_75, %c0_76, %c512], %26 {strides = array<i32>} : memref<2x8x8x1152xbf16, #tpu.memory_space<vmem>>, vector<2x8x8x128xbf16>,
    %c0_77 = arith.constant 0 : index
    %c1_78 = arith.constant 1 : index
    %c9_79 = arith.constant 9 : index
    %c0_80 = arith.constant 0 : index
    %28 = vector.load %arg9[%c0_77, %c1_78, %c9_79, %c0_80] : memref<2x10x24x128xbf16, #tpu.memory_space<vmem>>, vector<2x8x8x128xbf16>
    %c0_81 = arith.constant 0 : index
    %c0_82 = arith.constant 0 : index
    %c0_83 = arith.constant 0 : index
    %c640 = arith.constant 640 : index
    %29 = vector.load %arg11[%c0_81, %c0_82, %c0_83, %c640] : memref<2x8x8x1152xbf16, #tpu.memory_space<vmem>>, vector<2x8x8x128xbf16>
    tpu.vector_store %arg11[%c0_81, %c0_82, %c0_83, %c640], %28 {strides = array<i32>} : memref<2x8x8x1152xbf16, #tpu.memory_space<vmem>>, vector<2x8x8x128xbf16>,
    %c0_84 = arith.constant 0 : index
    %c2 = arith.constant 2 : index
    %c7_85 = arith.constant 7 : index
    %c0_86 = arith.constant 0 : index
    %30 = vector.load %arg9[%c0_84, %c2, %c7_85, %c0_86] : memref<2x10x24x128xbf16, #tpu.memory_space<vmem>>, vector<2x8x8x128xbf16>
    %c0_87 = arith.constant 0 : index
    %c0_88 = arith.constant 0 : index
    %c0_89 = arith.constant 0 : index
    %c768 = arith.constant 768 : index
    %31 = vector.load %arg11[%c0_87, %c0_88, %c0_89, %c768] : memref<2x8x8x1152xbf16, #tpu.memory_space<vmem>>, vector<2x8x8x128xbf16>
    tpu.vector_store %arg11[%c0_87, %c0_88, %c0_89, %c768], %30 {strides = array<i32>} : memref<2x8x8x1152xbf16, #tpu.memory_space<vmem>>, vector<2x8x8x128xbf16>,
    %c0_90 = arith.constant 0 : index
    %c2_91 = arith.constant 2 : index
    %c8_92 = arith.constant 8 : index
    %c0_93 = arith.constant 0 : index
    %32 = vector.load %arg9[%c0_90, %c2_91, %c8_92, %c0_93] : memref<2x10x24x128xbf16, #tpu.memory_space<vmem>>, vector<2x8x8x128xbf16>
    %c0_94 = arith.constant 0 : index
    %c0_95 = arith.constant 0 : index
    %c0_96 = arith.constant 0 : index
    %c896 = arith.constant 896 : index
    %33 = vector.load %arg11[%c0_94, %c0_95, %c0_96, %c896] : memref<2x8x8x1152xbf16, #tpu.memory_space<vmem>>, vector<2x8x8x128xbf16>
    tpu.vector_store %arg11[%c0_94, %c0_95, %c0_96, %c896], %32 {strides = array<i32>} : memref<2x8x8x1152xbf16, #tpu.memory_space<vmem>>, vector<2x8x8x128xbf16>,
    %c0_97 = arith.constant 0 : index
    %c2_98 = arith.constant 2 : index
    %c9_99 = arith.constant 9 : index
    %c0_100 = arith.constant 0 : index
    %34 = vector.load %arg9[%c0_97, %c2_98, %c9_99, %c0_100] : memref<2x10x24x128xbf16, #tpu.memory_space<vmem>>, vector<2x8x8x128xbf16>
    %c0_101 = arith.constant 0 : index
    %c0_102 = arith.constant 0 : index
    %c0_103 = arith.constant 0 : index
    %c1024 = arith.constant 1024 : index
    %35 = vector.load %arg11[%c0_101, %c0_102, %c0_103, %c1024] : memref<2x8x8x1152xbf16, #tpu.memory_space<vmem>>, vector<2x8x8x128xbf16>
    tpu.vector_store %arg11[%c0_101, %c0_102, %c0_103, %c1024], %34 {strides = array<i32>} : memref<2x8x8x1152xbf16, #tpu.memory_space<vmem>>, vector<2x8x8x128xbf16>,
    %c0_104 = arith.constant 0 : index
    %c0_105 = arith.constant 0 : index
    %c0_106 = arith.constant 0 : index
    %c0_107 = arith.constant 0 : index
    %36 = vector.load %arg11[%c0_104, %c0_105, %c0_106, %c0_107] : memref<2x8x8x1152xbf16, #tpu.memory_space<vmem>>, vector<2x8x8x1152xbf16>
    %37 = vector.shape_cast %36 : vector<2x8x8x1152xbf16> to vector<128x1152xbf16>
    %c0_108 = arith.constant 0 : index
    %c0_109 = arith.constant 0 : index
    %38 = vector.load %arg2[%c0_108, %c0_109] : memref<1152x128xbf16, #tpu.memory_space<vmem>>, vector<1152x128xbf16>
    %cst_110 = arith.constant dense<0.000000e+00> : vector<128x128xf32>
    %39 = tpu.matmul %37, %38, %cst_110 {dimension_numbers = #tpu.dot_dimension_numbers<[1], [0], [0], [1], [0, 0, 1, 1], [], []>} : vector<128x1152xbf16>, vector<1152x128xbf16>, vector<128x128xf32> -> vector<128x128xf32>
    %cst_111 = arith.constant dense<0.000000e+00> : vector<128xf32>
    %40 = vector.multi_reduction <add>, %39, %cst_111 [0] : vector<128x128xf32> to vector<128xf32>
    %41 = vector.shape_cast %40 : vector<128xf32> to vector<1x128xf32>
    %cst_112 = arith.constant 7.812500e-03 : f32
    %42 = vector.broadcast %cst_112 : f32 to vector<1x128xf32>
    %43 = arith.mulf %41, %42 : vector<1x128xf32>
    %44 = arith.mulf %39, %39 : vector<128x128xf32>
    %cst_113 = arith.constant dense<0.000000e+00> : vector<128xf32>
    %45 = vector.multi_reduction <add>, %44, %cst_113 [0] : vector<128x128xf32> to vector<128xf32>
    %46 = vector.shape_cast %45 : vector<128xf32> to vector<1x128xf32>
    %cst_114 = arith.constant 7.812500e-03 : f32
    %47 = vector.broadcast %cst_114 : f32 to vector<1x128xf32>
    %48 = arith.mulf %46, %47 : vector<1x128xf32>
    %49 = arith.mulf %43, %43 : vector<1x128xf32>
    %50 = arith.subf %48, %49 : vector<1x128xf32>
    %cst_115 = arith.constant 0.000000e+00 : f32
    %51 = vector.broadcast %cst_115 : f32 to vector<1x128xf32>
    %52 = arith.maximumf %50, %51 : vector<1x128xf32>
    %c0_116 = arith.constant 0 : index
    %c0_117 = arith.constant 0 : index
    %53 = vector.load %arg3[%c0_116, %c0_117] : memref<1x128xf32, #tpu.memory_space<vmem>>, vector<1x128xf32>
    %cst_118 = arith.constant 9.99999974E-6 : f32
    %54 = vector.broadcast %cst_118 : f32 to vector<1x128xf32>
    %55 = arith.addf %52, %54 : vector<1x128xf32>
    %56 = math.rsqrt %55 : vector<1x128xf32>
    %57 = arith.mulf %53, %56 : vector<1x128xf32>
    %c0_119 = arith.constant 0 : index
    %c0_120 = arith.constant 0 : index
    %58 = vector.load %arg4[%c0_119, %c0_120] : memref<1x128xf32, #tpu.memory_space<vmem>>, vector<1x128xf32>
    %59 = arith.mulf %43, %57 : vector<1x128xf32>
    %60 = arith.subf %58, %59 : vector<1x128xf32>
    %61 = vector.broadcast %57 : vector<1x128xf32> to vector<128x128xf32>
    %62 = arith.mulf %39, %61 : vector<128x128xf32>
    %63 = vector.broadcast %60 : vector<1x128xf32> to vector<128x128xf32>
    %64 = arith.addf %62, %63 : vector<128x128xf32>
    %cst_121 = arith.constant 0.000000e+00 : f32
    %65 = vector.broadcast %cst_121 : f32 to vector<128x128xf32>
    %66 = arith.maximumf %64, %65 : vector<128x128xf32>
    %67 = arith.truncf %66 : vector<128x128xf32> to vector<128x128xbf16>
    %68 = vector.shape_cast %67 : vector<128x128xbf16> to vector<2x8x8x128xbf16>
    %c0_122 = arith.constant 0 : index
    %c1_123 = arith.constant 1 : index
    %c8_124 = arith.constant 8 : index
    %c0_125 = arith.constant 0 : index
    %69 = vector.load %arg10[%c0_122, %c1_123, %c8_124, %c0_125] : memref<2x10x24x128xbf16, #tpu.memory_space<vmem>>, vector<2x8x8x128xbf16>
    tpu.vector_store %arg10[%c0_122, %c1_123, %c8_124, %c0_125], %68 {strides = array<i32>} : memref<2x10x24x128xbf16, #tpu.memory_space<vmem>>, vector<2x8x8x128xbf16>,
    %c0_126 = arith.constant 0 : index
    %c0_127 = arith.constant 0 : index
    %c7_128 = arith.constant 7 : index
    %c0_129 = arith.constant 0 : index
    %70 = vector.load %arg10[%c0_126, %c0_127, %c7_128, %c0_129] : memref<2x10x24x128xbf16, #tpu.memory_space<vmem>>, vector<2x8x8x128xbf16>
    %c0_130 = arith.constant 0 : index
    %c0_131 = arith.constant 0 : index
    %c0_132 = arith.constant 0 : index
    %c0_133 = arith.constant 0 : index
    %71 = vector.load %arg11[%c0_130, %c0_131, %c0_132, %c0_133] : memref<2x8x8x1152xbf16, #tpu.memory_space<vmem>>, vector<2x8x8x128xbf16>
    tpu.vector_store %arg11[%c0_130, %c0_131, %c0_132, %c0_133], %70 {strides = array<i32>} : memref<2x8x8x1152xbf16, #tpu.memory_space<vmem>>, vector<2x8x8x128xbf16>,
    %c0_134 = arith.constant 0 : index
    %c0_135 = arith.constant 0 : index
    %c8_136 = arith.constant 8 : index
    %c0_137 = arith.constant 0 : index
    %72 = vector.load %arg10[%c0_134, %c0_135, %c8_136, %c0_137] : memref<2x10x24x128xbf16, #tpu.memory_space<vmem>>, vector<2x8x8x128xbf16>
    %c0_138 = arith.constant 0 : index
    %c0_139 = arith.constant 0 : index
    %c0_140 = arith.constant 0 : index
    %c128_141 = arith.constant 128 : index
    %73 = vector.load %arg11[%c0_138, %c0_139, %c0_140, %c128_141] : memref<2x8x8x1152xbf16, #tpu.memory_space<vmem>>, vector<2x8x8x128xbf16>
    tpu.vector_store %arg11[%c0_138, %c0_139, %c0_140, %c128_141], %72 {strides = array<i32>} : memref<2x8x8x1152xbf16, #tpu.memory_space<vmem>>, vector<2x8x8x128xbf16>,
    %c0_142 = arith.constant 0 : index
    %c0_143 = arith.constant 0 : index
    %c9_144 = arith.constant 9 : index
    %c0_145 = arith.constant 0 : index
    %74 = vector.load %arg10[%c0_142, %c0_143, %c9_144, %c0_145] : memref<2x10x24x128xbf16, #tpu.memory_space<vmem>>, vector<2x8x8x128xbf16>
    %c0_146 = arith.constant 0 : index
    %c0_147 = arith.constant 0 : index
    %c0_148 = arith.constant 0 : index
    %c256_149 = arith.constant 256 : index
    %75 = vector.load %arg11[%c0_146, %c0_147, %c0_148, %c256_149] : memref<2x8x8x1152xbf16, #tpu.memory_space<vmem>>, vector<2x8x8x128xbf16>
    tpu.vector_store %arg11[%c0_146, %c0_147, %c0_148, %c256_149], %74 {strides = array<i32>} : memref<2x8x8x1152xbf16, #tpu.memory_space<vmem>>, vector<2x8x8x128xbf16>,
    %c0_150 = arith.constant 0 : index
    %c1_151 = arith.constant 1 : index
    %c7_152 = arith.constant 7 : index
    %c0_153 = arith.constant 0 : index
    %76 = vector.load %arg10[%c0_150, %c1_151, %c7_152, %c0_153] : memref<2x10x24x128xbf16, #tpu.memory_space<vmem>>, vector<2x8x8x128xbf16>
    %c0_154 = arith.constant 0 : index
    %c0_155 = arith.constant 0 : index
    %c0_156 = arith.constant 0 : index
    %c384_157 = arith.constant 384 : index
    %77 = vector.load %arg11[%c0_154, %c0_155, %c0_156, %c384_157] : memref<2x8x8x1152xbf16, #tpu.memory_space<vmem>>, vector<2x8x8x128xbf16>
    tpu.vector_store %arg11[%c0_154, %c0_155, %c0_156, %c384_157], %76 {strides = array<i32>} : memref<2x8x8x1152xbf16, #tpu.memory_space<vmem>>, vector<2x8x8x128xbf16>,
    %c0_158 = arith.constant 0 : index
    %c1_159 = arith.constant 1 : index
    %c8_160 = arith.constant 8 : index
    %c0_161 = arith.constant 0 : index
    %78 = vector.load %arg10[%c0_158, %c1_159, %c8_160, %c0_161] : memref<2x10x24x128xbf16, #tpu.memory_space<vmem>>, vector<2x8x8x128xbf16>
    %c0_162 = arith.constant 0 : index
    %c0_163 = arith.constant 0 : index
    %c0_164 = arith.constant 0 : index
    %c512_165 = arith.constant 512 : index
    %79 = vector.load %arg11[%c0_162, %c0_163, %c0_164, %c512_165] : memref<2x8x8x1152xbf16, #tpu.memory_space<vmem>>, vector<2x8x8x128xbf16>
    tpu.vector_store %arg11[%c0_162, %c0_163, %c0_164, %c512_165], %78 {strides = array<i32>} : memref<2x8x8x1152xbf16, #tpu.memory_space<vmem>>, vector<2x8x8x128xbf16>,
    %c0_166 = arith.constant 0 : index
    %c1_167 = arith.constant 1 : index
    %c9_168 = arith.constant 9 : index
    %c0_169 = arith.constant 0 : index
    %80 = vector.load %arg10[%c0_166, %c1_167, %c9_168, %c0_169] : memref<2x10x24x128xbf16, #tpu.memory_space<vmem>>, vector<2x8x8x128xbf16>
    %c0_170 = arith.constant 0 : index
    %c0_171 = arith.constant 0 : index
    %c0_172 = arith.constant 0 : index
    %c640_173 = arith.constant 640 : index
    %81 = vector.load %arg11[%c0_170, %c0_171, %c0_172, %c640_173] : memref<2x8x8x1152xbf16, #tpu.memory_space<vmem>>, vector<2x8x8x128xbf16>
    tpu.vector_store %arg11[%c0_170, %c0_171, %c0_172, %c640_173], %80 {strides = array<i32>} : memref<2x8x8x1152xbf16, #tpu.memory_space<vmem>>, vector<2x8x8x128xbf16>,
    %c0_174 = arith.constant 0 : index
    %c2_175 = arith.constant 2 : index
    %c7_176 = arith.constant 7 : index
    %c0_177 = arith.constant 0 : index
    %82 = vector.load %arg10[%c0_174, %c2_175, %c7_176, %c0_177] : memref<2x10x24x128xbf16, #tpu.memory_space<vmem>>, vector<2x8x8x128xbf16>
    %c0_178 = arith.constant 0 : index
    %c0_179 = arith.constant 0 : index
    %c0_180 = arith.constant 0 : index
    %c768_181 = arith.constant 768 : index
    %83 = vector.load %arg11[%c0_178, %c0_179, %c0_180, %c768_181] : memref<2x8x8x1152xbf16, #tpu.memory_space<vmem>>, vector<2x8x8x128xbf16>
    tpu.vector_store %arg11[%c0_178, %c0_179, %c0_180, %c768_181], %82 {strides = array<i32>} : memref<2x8x8x1152xbf16, #tpu.memory_space<vmem>>, vector<2x8x8x128xbf16>,
    %c0_182 = arith.constant 0 : index
    %c2_183 = arith.constant 2 : index
    %c8_184 = arith.constant 8 : index
    %c0_185 = arith.constant 0 : index
    %84 = vector.load %arg10[%c0_182, %c2_183, %c8_184, %c0_185] : memref<2x10x24x128xbf16, #tpu.memory_space<vmem>>, vector<2x8x8x128xbf16>
    %c0_186 = arith.constant 0 : index
    %c0_187 = arith.constant 0 : index
    %c0_188 = arith.constant 0 : index
    %c896_189 = arith.constant 896 : index
    %85 = vector.load %arg11[%c0_186, %c0_187, %c0_188, %c896_189] : memref<2x8x8x1152xbf16, #tpu.memory_space<vmem>>, vector<2x8x8x128xbf16>
    tpu.vector_store %arg11[%c0_186, %c0_187, %c0_188, %c896_189], %84 {strides = array<i32>} : memref<2x8x8x1152xbf16, #tpu.memory_space<vmem>>, vector<2x8x8x128xbf16>,
    %c0_190 = arith.constant 0 : index
    %c2_191 = arith.constant 2 : index
    %c9_192 = arith.constant 9 : index
    %c0_193 = arith.constant 0 : index
    %86 = vector.load %arg10[%c0_190, %c2_191, %c9_192, %c0_193] : memref<2x10x24x128xbf16, #tpu.memory_space<vmem>>, vector<2x8x8x128xbf16>
    %c0_194 = arith.constant 0 : index
    %c0_195 = arith.constant 0 : index
    %c0_196 = arith.constant 0 : index
    %c1024_197 = arith.constant 1024 : index
    %87 = vector.load %arg11[%c0_194, %c0_195, %c0_196, %c1024_197] : memref<2x8x8x1152xbf16, #tpu.memory_space<vmem>>, vector<2x8x8x128xbf16>
    tpu.vector_store %arg11[%c0_194, %c0_195, %c0_196, %c1024_197], %86 {strides = array<i32>} : memref<2x8x8x1152xbf16, #tpu.memory_space<vmem>>, vector<2x8x8x128xbf16>,
    %c0_198 = arith.constant 0 : index
    %c0_199 = arith.constant 0 : index
    %c0_200 = arith.constant 0 : index
    %c0_201 = arith.constant 0 : index
    %88 = vector.load %arg11[%c0_198, %c0_199, %c0_200, %c0_201] : memref<2x8x8x1152xbf16, #tpu.memory_space<vmem>>, vector<2x8x8x1152xbf16>
    %89 = vector.shape_cast %88 : vector<2x8x8x1152xbf16> to vector<128x1152xbf16>
    %c0_202 = arith.constant 0 : index
    %c0_203 = arith.constant 0 : index
    %90 = vector.load %arg5[%c0_202, %c0_203] : memref<1152x128xbf16, #tpu.memory_space<vmem>>, vector<1152x128xbf16>
    %cst_204 = arith.constant dense<0.000000e+00> : vector<128x128xf32>
    %91 = tpu.matmul %89, %90, %cst_204 {dimension_numbers = #tpu.dot_dimension_numbers<[1], [0], [0], [1], [0, 0, 1, 1], [], []>} : vector<128x1152xbf16>, vector<1152x128xbf16>, vector<128x128xf32> -> vector<128x128xf32>
    %cst_205 = arith.constant dense<0.000000e+00> : vector<128xf32>
    %92 = vector.multi_reduction <add>, %91, %cst_205 [0] : vector<128x128xf32> to vector<128xf32>
    %93 = vector.shape_cast %92 : vector<128xf32> to vector<1x128xf32>
    %cst_206 = arith.constant 7.812500e-03 : f32
    %94 = vector.broadcast %cst_206 : f32 to vector<1x128xf32>
    %95 = arith.mulf %93, %94 : vector<1x128xf32>
    %96 = arith.mulf %91, %91 : vector<128x128xf32>
    %cst_207 = arith.constant dense<0.000000e+00> : vector<128xf32>
    %97 = vector.multi_reduction <add>, %96, %cst_207 [0] : vector<128x128xf32> to vector<128xf32>
    %98 = vector.shape_cast %97 : vector<128xf32> to vector<1x128xf32>
    %cst_208 = arith.constant 7.812500e-03 : f32
    %99 = vector.broadcast %cst_208 : f32 to vector<1x128xf32>
    %100 = arith.mulf %98, %99 : vector<1x128xf32>
    %101 = arith.mulf %95, %95 : vector<1x128xf32>
    %102 = arith.subf %100, %101 : vector<1x128xf32>
    %cst_209 = arith.constant 0.000000e+00 : f32
    %103 = vector.broadcast %cst_209 : f32 to vector<1x128xf32>
    %104 = arith.maximumf %102, %103 : vector<1x128xf32>
    %c0_210 = arith.constant 0 : index
    %c0_211 = arith.constant 0 : index
    %105 = vector.load %arg6[%c0_210, %c0_211] : memref<1x128xf32, #tpu.memory_space<vmem>>, vector<1x128xf32>
    %cst_212 = arith.constant 9.99999974E-6 : f32
    %106 = vector.broadcast %cst_212 : f32 to vector<1x128xf32>
    %107 = arith.addf %104, %106 : vector<1x128xf32>
    %108 = math.rsqrt %107 : vector<1x128xf32>
    %109 = arith.mulf %105, %108 : vector<1x128xf32>
    %c0_213 = arith.constant 0 : index
    %c0_214 = arith.constant 0 : index
    %110 = vector.load %arg7[%c0_213, %c0_214] : memref<1x128xf32, #tpu.memory_space<vmem>>, vector<1x128xf32>
    %111 = arith.mulf %95, %109 : vector<1x128xf32>
    %112 = arith.subf %110, %111 : vector<1x128xf32>
    %113 = vector.broadcast %109 : vector<1x128xf32> to vector<128x128xf32>
    %114 = arith.mulf %91, %113 : vector<128x128xf32>
    %115 = vector.broadcast %112 : vector<1x128xf32> to vector<128x128xf32>
    %116 = arith.addf %114, %115 : vector<128x128xf32>
    %cst_215 = arith.constant 0.000000e+00 : f32
    %117 = vector.broadcast %cst_215 : f32 to vector<128x128xf32>
    %118 = arith.maximumf %116, %117 : vector<128x128xf32>
    %119 = vector.extract_strided_slice %118 {offsets = [0, 0], sizes = [128, 8], strides = [1, 1]} : vector<128x128xf32> to vector<128x8xf32>
    %120 = vector.shape_cast %119 : vector<128x8xf32> to vector<2x8x8x8xf32>
    %c0_216 = arith.constant 0 : index
    %c0_217 = arith.constant 0 : index
    %c0_218 = arith.constant 0 : index
    %c0_219 = arith.constant 0 : index
    %121 = vector.load %arg8[%c0_216, %c0_217, %c0_218, %c0_219] : memref<2x8x8x8xf32, #tpu.memory_space<vmem>>, vector<2x8x8x8xf32>
    tpu.vector_store %arg8[%c0_216, %c0_217, %c0_218, %c0_219], %120 {strides = array<i32>} : memref<2x8x8x8xf32, #tpu.memory_space<vmem>>, vector<2x8x8x8xf32>,
    return
  }
  func.func @transform_0(%arg0: i32) -> (i32, i32, i32, i32) {
    %c0_i32 = arith.constant 0 : i32
    %c0_i32_0 = arith.constant 0 : i32
    %c0_i32_1 = arith.constant 0 : i32
    %c0_i32_2 = arith.constant 0 : i32
    %c0_i32_3 = arith.constant 0 : i32
    return %c0_i32, %c0_i32_0, %c0_i32_1, %c0_i32_2 : i32, i32, i32, i32
  }
  func.func @transform_1(%arg0: i32) -> (i32, i32) {
    %c0_i32 = arith.constant 0 : i32
    %c0_i32_0 = arith.constant 0 : i32
    %c0_i32_1 = arith.constant 0 : i32
    return %c0_i32, %c0_i32_0 : i32, i32
  }
  func.func @transform_2(%arg0: i32) -> (i32, i32) {
    %c0_i32 = arith.constant 0 : i32
    %c0_i32_0 = arith.constant 0 : i32
    %c0_i32_1 = arith.constant 0 : i32
    return %c0_i32, %c0_i32_0 : i32, i32
  }
  func.func @transform_3(%arg0: i32) -> (i32, i32) {
    %c0_i32 = arith.constant 0 : i32
    %c0_i32_0 = arith.constant 0 : i32
    %c0_i32_1 = arith.constant 0 : i32
    return %c0_i32, %c0_i32_0 : i32, i32
  }
  func.func @transform_4(%arg0: i32) -> (i32, i32) {
    %c0_i32 = arith.constant 0 : i32
    %c0_i32_0 = arith.constant 0 : i32
    %c0_i32_1 = arith.constant 0 : i32
    return %c0_i32, %c0_i32_0 : i32, i32
  }
  func.func @transform_5(%arg0: i32) -> (i32, i32) {
    %c0_i32 = arith.constant 0 : i32
    %c0_i32_0 = arith.constant 0 : i32
    %c0_i32_1 = arith.constant 0 : i32
    return %c0_i32, %c0_i32_0 : i32, i32
  }
  func.func @transform_6(%arg0: i32) -> (i32, i32) {
    %c0_i32 = arith.constant 0 : i32
    %c0_i32_0 = arith.constant 0 : i32
    %c0_i32_1 = arith.constant 0 : i32
    return %c0_i32, %c0_i32_0 : i32, i32
  }
  func.func @transform_7(%arg0: i32) -> (i32, i32, i32, i32) {
    %c0_i32 = arith.constant 0 : i32
    %c0_i32_0 = arith.constant 0 : i32
    %c0_i32_1 = arith.constant 0 : i32
    %c0_i32_2 = arith.constant 0 : i32
    %c0_i32_3 = arith.constant 0 : i32
    return %c0_i32, %c0_i32_0, %c0_i32_1, %c0_i32_2 : i32, i32, i32, i32
  }
}

</mosaic_0001>

<llo_original>
// kernel: tpu_custom_call.1
$region0: #{tpu_custom_call.1}
  #allocation0 [shape = 'u32[]', space=smem, size = 0x4, offset = 0x4, fixed_abs, tag = 'smem constant byte address 0x4 - core index']
  #allocation1 [shape = 'u32[72,128]{1,0:T(1,128)}', space=vmem, size = 0x9000, scoped, tag = 'internal scratch']
  #allocation2 [shape = 'bf16[2,10,24,128]{3,2,1,0:T(8,128)(2,1)}', space=vmem, size = 0x1e000, scoped, tag = 'scratch operand']
  #allocation3 [shape = 'bf16[2,10,24,128]{3,2,1,0:T(8,128)(2,1)}', space=vmem, size = 0x1e000, scoped, tag = 'scratch operand']
  #allocation4 [shape = 'bf16[2,8,8,1152]{3,2,1,0:T(8,128)(2,1)}', space=vmem, size = 0x48000, scoped, tag = 'scratch operand']
  %s0 = inlined_call_operand.hbm [shape: bf16[2,8,8,128], index: 0, kind: input, shape index: {}]
  %s1 = inlined_call_operand.hbm [shape: bf16[1152,128], index: 1, kind: input, shape index: {}]
  %s2 = inlined_call_operand.vmem [shape: f32[1,128], index: 2, kind: input, shape index: {}]
  %s3 = inlined_call_operand.vmem [shape: f32[1,128], index: 3, kind: input, shape index: {}]
  %s4 = inlined_call_operand.hbm [shape: bf16[1152,128], index: 4, kind: input, shape index: {}]
  %s5 = inlined_call_operand.vmem [shape: f32[1,128], index: 5, kind: input, shape index: {}]
  %s6 = inlined_call_operand.vmem [shape: f32[1,128], index: 6, kind: input, shape index: {}]
  %s7 = inlined_call_operand.hbm [shape: f32[2,8,8,8], index: 7, kind: output, shape index: {}]
  %s8 = sld [smem:[#allocation0]]
  $region50: #{tpu_custom_call.1} parent=0
    _
  %s10 = ssub.s32 1, %s8
  %s11 = scalar_select 0, %s10, %s8
  $region1: #{tpu_custom_call.1} parent=0
    #allocation5 [shape = 'u8[32768]{0}', space=vmem, size = 0x8000, scoped, tag = 'input window, operand 0, single buffered']
    #allocation6 [shape = 's32[1]{0}', space=sflag, size = 0x4, scoped, tag = 'scoped memory for tpu_custom_call.1']
    #allocation7 [shape = 's32[1]{0}', space=sflag, size = 0x4, scoped, tag = 'scoped memory for tpu_custom_call.1']
    #allocation8 [shape = 'u8[294912]{0}', space=vmem, size = 0x48000, scoped, tag = 'input window, operand 1, single buffered']
    #allocation9 [shape = 's32[1]{0}', space=sflag, size = 0x4, scoped, tag = 'scoped memory for tpu_custom_call.1']
    #allocation10 [shape = 'u8[294912]{0}', space=vmem, size = 0x48000, scoped, tag = 'input window, operand 4, single buffered']
    #allocation11 [shape = 'u8[65536]{0}', space=vmem, size = 0x10000, scoped, tag = 'output window, operand 0, single buffered']
    %12 = vsyncpa [#allocation6], 0
    %13 = vsyncpa [#allocation9], 0
    %14 = vsyncpa [#allocation7], 0
    // Predicated region
    $region2: #{tpu_custom_call.1} parent=1 // pred_check
      _
    $region3: #{tpu_custom_call.1} parent=1 // pred_check_branch
      %16 = sbr.rel (0) target = $region5
    $region4: #{tpu_custom_call.1} parent=1 // pred_region
      %18 = vsyncadd [#allocation6], 0
      %s19 = sshll.u32 %s0, 4
      %s20 = int_to_ptr.hbm [resolvable:$true] %s19
      %s21 = sshll.u32 [#allocation5], 4
      %s22 = int_to_ptr.vmem [resolvable:$true] %s21
      %27 = dma.hbm_to_vmem [thread:$0]  %s20, 1024, %s22, [#allocation6], 64, 64, 4
    $region5: #{tpu_custom_call.1} parent=1 // pred_fallthru
      _
    // Predicated region
    $region6: #{tpu_custom_call.1} parent=1 // pred_check
      _
    $region7: #{tpu_custom_call.1} parent=1 // pred_check_branch
      %29 = sbr.rel (0) target = $region9
    $region8: #{tpu_custom_call.1} parent=1 // pred_region
      %31 = vsyncadd [#allocation9], 0
      %s32 = sshll.u32 %s1, 4
      %s33 = int_to_ptr.hbm [resolvable:$true] %s32
      %s34 = sshll.u32 [#allocation8], 4
      %s35 = int_to_ptr.vmem [resolvable:$true] %s34
      %40 = dma.hbm_to_vmem [thread:$0]  %s33, 9216, %s35, [#allocation9], 64, 64, 4
    $region9: #{tpu_custom_call.1} parent=1 // pred_fallthru
      _
    // Predicated region
    $region10: #{tpu_custom_call.1} parent=1 // pred_check
      _
    $region11: #{tpu_custom_call.1} parent=1 // pred_check_branch
      %42 = sbr.rel (0) target = $region13
    $region12: #{tpu_custom_call.1} parent=1 // pred_region
      _
    $region13: #{tpu_custom_call.1} parent=1 // pred_fallthru
      _
    // Predicated region
    $region14: #{tpu_custom_call.1} parent=1 // pred_check
      _
    $region15: #{tpu_custom_call.1} parent=1 // pred_check_branch
      %44 = sbr.rel (0) target = $region17
    $region16: #{tpu_custom_call.1} parent=1 // pred_region
      _
    $region17: #{tpu_custom_call.1} parent=1 // pred_fallthru
      _
    // Predicated region
    $region18: #{tpu_custom_call.1} parent=1 // pred_check
      _
    $region19: #{tpu_custom_call.1} parent=1 // pred_check_branch
      %46 = sbr.rel (0) target = $region21
    $region20: #{tpu_custom_call.1} parent=1 // pred_region
      %48 = vsyncadd [#allocation9], 0
      %s49 = sshll.u32 %s4, 4
      %s50 = int_to_ptr.hbm [resolvable:$true] %s49
      %s51 = sshll.u32 [#allocation10], 4
      %s52 = int_to_ptr.vmem [resolvable:$true] %s51
      %57 = dma.hbm_to_vmem [thread:$0]  %s50, 9216, %s52, [#allocation9], 64, 64, 4
    $region21: #{tpu_custom_call.1} parent=1 // pred_fallthru
      _
    // Predicated region
    $region22: #{tpu_custom_call.1} parent=1 // pred_check
      _
    $region23: #{tpu_custom_call.1} parent=1 // pred_check_branch
      %59 = sbr.rel (0) target = $region25
    $region24: #{tpu_custom_call.1} parent=1 // pred_region
      _
    $region25: #{tpu_custom_call.1} parent=1 // pred_fallthru
      _
    // Predicated region
    $region26: #{tpu_custom_call.1} parent=1 // pred_check
      _
    $region27: #{tpu_custom_call.1} parent=1 // pred_check_branch
      %61 = sbr.rel (0) target = $region29
    $region28: #{tpu_custom_call.1} parent=1 // pred_region
      _
    $region29: #{tpu_custom_call.1} parent=1 // pred_fallthru
      _
    // Predicated region
    $region30: #{tpu_custom_call.1} parent=1 // pred_check
      _
    $region31: #{tpu_custom_call.1} parent=1 // pred_check_branch
      %63 = sbr.rel (0) target = $region33
    $region32: #{tpu_custom_call.1} parent=1 // pred_region
      %65 = dma.done [#allocation6], 1024
    $region33: #{tpu_custom_call.1} parent=1 // pred_fallthru
      _
    // Predicated region
    $region34: #{tpu_custom_call.1} parent=1 // pred_check
      _
    $region35: #{tpu_custom_call.1} parent=1 // pred_check_branch
      %67 = sbr.rel (0) target = $region37
    $region36: #{tpu_custom_call.1} parent=1 // pred_region
      %69 = dma.done [#allocation9], 9216
    $region37: #{tpu_custom_call.1} parent=1 // pred_fallthru
      _
    // Predicated region
    $region38: #{tpu_custom_call.1} parent=1 // pred_check
      _
    $region39: #{tpu_custom_call.1} parent=1 // pred_check_branch
      %71 = sbr.rel (0) target = $region41
    $region40: #{tpu_custom_call.1} parent=1 // pred_region
      %73 = dma.done [#allocation9], 9216
    $region41: #{tpu_custom_call.1} parent=1 // pred_fallthru
      _
    %75 = vst [vmem:[#allocation2] sm:$0xf] 0
    %76 = vst [vmem:[#allocation2 + $0x4] sm:$0xf] 0
    %77 = vst [vmem:[#allocation2 + $0x8] sm:$0xf] 0
    %78 = vst [vmem:[#allocation2 + $0x78] sm:$0xf] 0
    %79 = vst [vmem:[#allocation2 + $0x7c] sm:$0xf] 0
    %80 = vst [vmem:[#allocation2 + $0x80] sm:$0xf] 0
    %s81 = scalar_lea.vmem [#allocation2], 108
    %82 = vst [vmem:[%s81] sm:$0xf] 0
    %83 = vst [vmem:[%s81 + $0x4] sm:$0xf] 0
    %84 = vst [vmem:[%s81 + $0x8] sm:$0xf] 0
    %85 = vst [vmem:[%s81 + $0x78] sm:$0xf] 0
    %86 = vst [vmem:[%s81 + $0x7c] sm:$0xf] 0
    %87 = vst [vmem:[%s81 + $0x80] sm:$0xf] 0
    %88 = vst [vmem:[#allocation2] sm:$0xf] 0
    %89 = vst [vmem:[#allocation2 + $0xc] sm:$0xf] 0
    %90 = vst [vmem:[#allocation2 + $0x18] sm:$0xf] 0
    %91 = vst [vmem:[#allocation2 + $0x24] sm:$0xf] 0
    %92 = vst [vmem:[#allocation2 + $0x30] sm:$0xf] 0
    %93 = vst [vmem:[#allocation2 + $0x3c] sm:$0xf] 0
    %94 = vst [vmem:[#allocation2 + $0x48] sm:$0xf] 0
    %95 = vst [vmem:[#allocation2 + $0x54] sm:$0xf] 0
    %96 = vst [vmem:[#allocation2 + $0x60] sm:$0xf] 0
    %97 = vst [vmem:[#allocation2 + $0x6c] sm:$0xf] 0
    %98 = vst [vmem:[#allocation2 + $0x78] sm:$0xf] 0
    %99 = vst [vmem:[#allocation2 + $0x84] sm:$0xf] 0
    %100 = vst [vmem:[#allocation2 + $0x90] sm:$0xf] 0
    %101 = vst [vmem:[#allocation2 + $0x9c] sm:$0xf] 0
    %102 = vst [vmem:[#allocation2 + $0xa8] sm:$0xf] 0
    %103 = vst [vmem:[#allocation2 + $0xb4] sm:$0xf] 0
    %104 = vst [vmem:[#allocation2 + $0xc0] sm:$0xf] 0
    %105 = vst [vmem:[#allocation2 + $0xcc] sm:$0xf] 0
    %106 = vst [vmem:[#allocation2 + $0xd8] sm:$0xf] 0
    %107 = vst [vmem:[#allocation2 + $0xe4] sm:$0xf] 0
    %108 = vst [vmem:[#allocation2 + $0x8] sm:$0xf] 0
    %109 = vst [vmem:[#allocation2 + $0x14] sm:$0xf] 0
    %110 = vst [vmem:[#allocation2 + $0x20] sm:$0xf] 0
    %111 = vst [vmem:[#allocation2 + $0x2c] sm:$0xf] 0
    %112 = vst [vmem:[#allocation2 + $0x38] sm:$0xf] 0
    %113 = vst [vmem:[#allocation2 + $0x44] sm:$0xf] 0
    %114 = vst [vmem:[#allocation2 + $0x50] sm:$0xf] 0
    %115 = vst [vmem:[#allocation2 + $0x5c] sm:$0xf] 0
    %116 = vst [vmem:[#allocation2 + $0x68] sm:$0xf] 0
    %117 = vst [vmem:[#allocation2 + $0x74] sm:$0xf] 0
    %118 = vst [vmem:[#allocation2 + $0x80] sm:$0xf] 0
    %119 = vst [vmem:[#allocation2 + $0x8c] sm:$0xf] 0
    %120 = vst [vmem:[#allocation2 + $0x98] sm:$0xf] 0
    %121 = vst [vmem:[#allocation2 + $0xa4] sm:$0xf] 0
    %122 = vst [vmem:[#allocation2 + $0xb0] sm:$0xf] 0
    %123 = vst [vmem:[#allocation2 + $0xbc] sm:$0xf] 0
    %124 = vst [vmem:[#allocation2 + $0xc8] sm:$0xf] 0
    %125 = vst [vmem:[#allocation2 + $0xd4] sm:$0xf] 0
    %126 = vst [vmem:[#allocation2 + $0xe0] sm:$0xf] 0
    %127 = vst [vmem:[#allocation2 + $0xec] sm:$0xf] 0
    %128 = vst [vmem:[#allocation3] sm:$0xf] 0
    %129 = vst [vmem:[#allocation3 + $0x4] sm:$0xf] 0
    %130 = vst [vmem:[#allocation3 + $0x8] sm:$0xf] 0
    %131 = vst [vmem:[#allocation3 + $0x78] sm:$0xf] 0
    %132 = vst [vmem:[#allocation3 + $0x7c] sm:$0xf] 0
    %133 = vst [vmem:[#allocation3 + $0x80] sm:$0xf] 0
    %s134 = scalar_lea.vmem [#allocation3], 108
    %135 = vst [vmem:[%s134] sm:$0xf] 0
    %136 = vst [vmem:[%s134 + $0x4] sm:$0xf] 0
    %137 = vst [vmem:[%s134 + $0x8] sm:$0xf] 0
    %138 = vst [vmem:[%s134 + $0x78] sm:$0xf] 0
    %139 = vst [vmem:[%s134 + $0x7c] sm:$0xf] 0
    %140 = vst [vmem:[%s134 + $0x80] sm:$0xf] 0
    %141 = vst [vmem:[#allocation3] sm:$0xf] 0
    %142 = vst [vmem:[#allocation3 + $0xc] sm:$0xf] 0
    %143 = vst [vmem:[#allocation3 + $0x18] sm:$0xf] 0
    %144 = vst [vmem:[#allocation3 + $0x24] sm:$0xf] 0
    %145 = vst [vmem:[#allocation3 + $0x30] sm:$0xf] 0
    %146 = vst [vmem:[#allocation3 + $0x3c] sm:$0xf] 0
    %147 = vst [vmem:[#allocation3 + $0x48] sm:$0xf] 0
    %148 = vst [vmem:[#allocation3 + $0x54] sm:$0xf] 0
    %149 = vst [vmem:[#allocation3 + $0x60] sm:$0xf] 0
    %150 = vst [vmem:[#allocation3 + $0x6c] sm:$0xf] 0
    %151 = vst [vmem:[#allocation3 + $0x78] sm:$0xf] 0
    %152 = vst [vmem:[#allocation3 + $0x84] sm:$0xf] 0
    %153 = vst [vmem:[#allocation3 + $0x90] sm:$0xf] 0
    %154 = vst [vmem:[#allocation3 + $0x9c] sm:$0xf] 0
    %155 = vst [vmem:[#allocation3 + $0xa8] sm:$0xf] 0
    %156 = vst [vmem:[#allocation3 + $0xb4] sm:$0xf] 0
    %157 = vst [vmem:[#allocation3 + $0xc0] sm:$0xf] 0
    %158 = vst [vmem:[#allocation3 + $0xcc] sm:$0xf] 0
    %159 = vst [vmem:[#allocation3 + $0xd8] sm:$0xf] 0
    %160 = vst [vmem:[#allocation3 + $0xe4] sm:$0xf] 0
    %161 = vst [vmem:[#allocation3 + $0x8] sm:$0xf] 0
    %162 = vst [vmem:[#allocation3 + $0x14] sm:$0xf] 0
    %163 = vst [vmem:[#allocation3 + $0x20] sm:$0xf] 0
    %164 = vst [vmem:[#allocation3 + $0x2c] sm:$0xf] 0
    %165 = vst [vmem:[#allocation3 + $0x38] sm:$0xf] 0
    %166 = vst [vmem:[#allocation3 + $0x44] sm:$0xf] 0
    %167 = vst [vmem:[#allocation3 + $0x50] sm:$0xf] 0
    %168 = vst [vmem:[#allocation3 + $0x5c] sm:$0xf] 0
    %169 = vst [vmem:[#allocation3 + $0x68] sm:$0xf] 0
    %170 = vst [vmem:[#allocation3 + $0x74] sm:$0xf] 0
    %171 = vst [vmem:[#allocation3 + $0x80] sm:$0xf] 0
    %172 = vst [vmem:[#allocation3 + $0x8c] sm:$0xf] 0
    %173 = vst [vmem:[#allocation3 + $0x98] sm:$0xf] 0
    %174 = vst [vmem:[#allocation3 + $0xa4] sm:$0xf] 0
    %175 = vst [vmem:[#allocation3 + $0xb0] sm:$0xf] 0
    %176 = vst [vmem:[#allocation3 + $0xbc] sm:$0xf] 0
    %177 = vst [vmem:[#allocation3 + $0xc8] sm:$0xf] 0
    %178 = vst [vmem:[#allocation3 + $0xd4] sm:$0xf] 0
    %179 = vst [vmem:[#allocation3 + $0xe0] sm:$0xf] 0
    %180 = vst [vmem:[#allocation3 + $0xec] sm:$0xf] 0
    %v181 = vld [vmem:[#allocation5] sm:$0xf]
    %v182 = vld [vmem:[#allocation5 + $0x4] sm:$0xf]
    %v183 = vld [vmem:[#allocation5 + $0x8] sm:$0xf]
    %v184 = vld [vmem:[#allocation5 + $0xc] sm:$0xf]
    %v185 = vld [vmem:[#allocation5 + $0x10] sm:$0xf]
    %v186 = vld [vmem:[#allocation5 + $0x14] sm:$0xf]
    %v187 = vld [vmem:[#allocation5 + $0x18] sm:$0xf]
    %v188 = vld [vmem:[#allocation5 + $0x1c] sm:$0xf]
    %v189 = vld [vmem:[#allocation5 + $0x20] sm:$0xf]
    %v190 = vld [vmem:[#allocation5 + $0x24] sm:$0xf]
    %v191 = vld [vmem:[#allocation5 + $0x28] sm:$0xf]
    %v192 = vld [vmem:[#allocation5 + $0x2c] sm:$0xf]
    %v193 = vld [vmem:[#allocation5 + $0x30] sm:$0xf]
    %v194 = vld [vmem:[#allocation5 + $0x34] sm:$0xf]
    %v195 = vld [vmem:[#allocation5 + $0x38] sm:$0xf]
    %v196 = vld [vmem:[#allocation5 + $0x3c] sm:$0xf]
    %s197 = scalar_lea.vmem [#allocation2], 12
    %198 = vst [vmem:[%s197 + $0x4] sm:$0xf] %v181
    %199 = vst [vmem:[%s197 + $0x10] sm:$0xf] %v182
    %200 = vst [vmem:[%s197 + $0x1c] sm:$0xf] %v183
    %201 = vst [vmem:[%s197 + $0x28] sm:$0xf] %v184
    %202 = vst [vmem:[%s197 + $0x34] sm:$0xf] %v185
    %203 = vst [vmem:[%s197 + $0x40] sm:$0xf] %v186
    %204 = vst [vmem:[%s197 + $0x4c] sm:$0xf] %v187
    %205 = vst [vmem:[%s197 + $0x58] sm:$0xf] %v188
    %206 = vst [vmem:[%s197 + $0x7c] sm:$0xf] %v189
    %207 = vst [vmem:[%s197 + $0x88] sm:$0xf] %v190
    %208 = vst [vmem:[%s197 + $0x94] sm:$0xf] %v191
    %209 = vst [vmem:[%s197 + $0xa0] sm:$0xf] %v192
    %210 = vst [vmem:[%s197 + $0xac] sm:$0xf] %v193
    %211 = vst [vmem:[%s197 + $0xb8] sm:$0xf] %v194
    %212 = vst [vmem:[%s197 + $0xc4] sm:$0xf] %v195
    %213 = vst [vmem:[%s197 + $0xd0] sm:$0xf] %v196
    %v214 = vld [vmem:[#allocation2] sm:$0x8]
    %v215 = vld [vmem:[#allocation2 + $0x4] sm:$0xf]
    %v216 = vld [vmem:[#allocation2 + $0xc] sm:$0x8]
    %v217 = vld [vmem:[#allocation2 + $0x10] sm:$0xf]
    %v218 = vld [vmem:[#allocation2 + $0x18] sm:$0x8]
    %v219 = vld [vmem:[#allocation2 + $0x1c] sm:$0xf]
    %v220 = vld [vmem:[#allocation2 + $0x24] sm:$0x8]
    %v221 = vld [vmem:[#allocation2 + $0x28] sm:$0xf]
    %v222 = vld [vmem:[#allocation2 + $0x30] sm:$0x8]
    %v223 = vld [vmem:[#allocation2 + $0x34] sm:$0xf]
    %v224 = vld [vmem:[#allocation2 + $0x3c] sm:$0x8]
    %v225 = vld [vmem:[#allocation2 + $0x40] sm:$0xf]
    %v226 = vld [vmem:[#allocation2 + $0x48] sm:$0x8]
    %v227 = vld [vmem:[#allocation2 + $0x4c] sm:$0xf]
    %v228 = vld [vmem:[#allocation2 + $0x54] sm:$0x8]
    %v229 = vld [vmem:[#allocation2 + $0x58] sm:$0xf]
    %v230 = vld [vmem:[#allocation2 + $0x78] sm:$0x8]
    %v231 = vld [vmem:[#allocation2 + $0x7c] sm:$0xf]
    %v232 = vld [vmem:[#allocation2 + $0x84] sm:$0x8]
    %v233 = vld [vmem:[#allocation2 + $0x88] sm:$0xf]
    %v234 = vld [vmem:[#allocation2 + $0x90] sm:$0x8]
    %v235 = vld [vmem:[#allocation2 + $0x94] sm:$0xf]
    %v236 = vld [vmem:[#allocation2 + $0x9c] sm:$0x8]
    %v237 = vld [vmem:[#allocation2 + $0xa0] sm:$0xf]
    %v238 = vld [vmem:[#allocation2 + $0xa8] sm:$0x8]
    %v239 = vld [vmem:[#allocation2 + $0xac] sm:$0xf]
    %v240 = vld [vmem:[#allocation2 + $0xb4] sm:$0x8]
    %v241 = vld [vmem:[#allocation2 + $0xb8] sm:$0xf]
    %v242 = vld [vmem:[#allocation2 + $0xc0] sm:$0x8]
    %v243 = vld [vmem:[#allocation2 + $0xc4] sm:$0xf]
    %v244 = vld [vmem:[#allocation2 + $0xcc] sm:$0x8]
    %v245 = vld [vmem:[#allocation2 + $0xd0] sm:$0xf]
    %vm246 = vsmask.f32 256
    %vm247 = vsmask.f32 4368
    %vm248 = vmor %vm246, %vm247
    %v250 = vshrl.u32 %v214, 16
    %v252 = vrot.slane %v250, 7
    %v253 = vrot.slane %v252, 4
    %v255 = vshrl.u32 %v215, 16
    %v257 = vrot.slane %v255, 7
    %v258 = vshll.u32 %v215, 16
    %v260 = vor.u32 %v257, %v258
    %v261 = vsel %vm248, %v253, %v260
    %v263 = vshrl.u32 %v216, 16
    %v265 = vrot.slane %v263, 7
    %v266 = vrot.slane %v265, 4
    %v268 = vshrl.u32 %v217, 16
    %v270 = vrot.slane %v268, 7
    %v271 = vshll.u32 %v217, 16
    %v273 = vor.u32 %v270, %v271
    %v274 = vsel %vm248, %v266, %v273
    %v276 = vshrl.u32 %v218, 16
    %v278 = vrot.slane %v276, 7
    %v279 = vrot.slane %v278, 4
    %v281 = vshrl.u32 %v219, 16
    %v283 = vrot.slane %v281, 7
    %v284 = vshll.u32 %v219, 16
    %v286 = vor.u32 %v283, %v284
    %v287 = vsel %vm248, %v279, %v286
    %v289 = vshrl.u32 %v220, 16
    %v291 = vrot.slane %v289, 7
    %v292 = vrot.slane %v291, 4
    %v294 = vshrl.u32 %v221, 16
    %v296 = vrot.slane %v294, 7
    %v297 = vshll.u32 %v221, 16
    %v299 = vor.u32 %v296, %v297
    %v300 = vsel %vm248, %v292, %v299
    %v302 = vshrl.u32 %v222, 16
    %v304 = vrot.slane %v302, 7
    %v305 = vrot.slane %v304, 4
    %v307 = vshrl.u32 %v223, 16
    %v309 = vrot.slane %v307, 7
    %v310 = vshll.u32 %v223, 16
    %v312 = vor.u32 %v309, %v310
    %v313 = vsel %vm248, %v305, %v312
    %v315 = vshrl.u32 %v224, 16
    %v317 = vrot.slane %v315, 7
    %v318 = vrot.slane %v317, 4
    %v320 = vshrl.u32 %v225, 16
    %v322 = vrot.slane %v320, 7
    %v323 = vshll.u32 %v225, 16
    %v325 = vor.u32 %v322, %v323
    %v326 = vsel %vm248, %v318, %v325
    %v328 = vshrl.u32 %v226, 16
    %v330 = vrot.slane %v328, 7
    %v331 = vrot.slane %v330, 4
    %v333 = vshrl.u32 %v227, 16
    %v335 = vrot.slane %v333, 7
    %v336 = vshll.u32 %v227, 16
    %v338 = vor.u32 %v335, %v336
    %v339 = vsel %vm248, %v331, %v338
    %v341 = vshrl.u32 %v228, 16
    %v343 = vrot.slane %v341, 7
    %v344 = vrot.slane %v343, 4
    %v346 = vshrl.u32 %v229, 16
    %v348 = vrot.slane %v346, 7
    %v349 = vshll.u32 %v229, 16
    %v351 = vor.u32 %v348, %v349
    %v352 = vsel %vm248, %v344, %v351
    %v354 = vshrl.u32 %v230, 16
    %v356 = vrot.slane %v354, 7
    %v357 = vrot.slane %v356, 4
    %v359 = vshrl.u32 %v231, 16
    %v361 = vrot.slane %v359, 7
    %v362 = vshll.u32 %v231, 16
    %v364 = vor.u32 %v361, %v362
    %v365 = vsel %vm248, %v357, %v364
    %v367 = vshrl.u32 %v232, 16
    %v369 = vrot.slane %v367, 7
    %v370 = vrot.slane %v369, 4
    %v372 = vshrl.u32 %v233, 16
    %v374 = vrot.slane %v372, 7
    %v375 = vshll.u32 %v233, 16
    %v377 = vor.u32 %v374, %v375
    %v378 = vsel %vm248, %v370, %v377
    %v380 = vshrl.u32 %v234, 16
    %v382 = vrot.slane %v380, 7
    %v383 = vrot.slane %v382, 4
    %v385 = vshrl.u32 %v235, 16
    %v387 = vrot.slane %v385, 7
    %v388 = vshll.u32 %v235, 16
    %v390 = vor.u32 %v387, %v388
    %v391 = vsel %vm248, %v383, %v390
    %v393 = vshrl.u32 %v236, 16
    %v395 = vrot.slane %v393, 7
    %v396 = vrot.slane %v395, 4
    %v398 = vshrl.u32 %v237, 16
    %v400 = vrot.slane %v398, 7
    %v401 = vshll.u32 %v237, 16
    %v403 = vor.u32 %v400, %v401
    %v404 = vsel %vm248, %v396, %v403
    %v406 = vshrl.u32 %v238, 16
    %v408 = vrot.slane %v406, 7
    %v409 = vrot.slane %v408, 4
    %v411 = vshrl.u32 %v239, 16
    %v413 = vrot.slane %v411, 7
    %v414 = vshll.u32 %v239, 16
    %v416 = vor.u32 %v413, %v414
    %v417 = vsel %vm248, %v409, %v416
    %v419 = vshrl.u32 %v240, 16
    %v421 = vrot.slane %v419, 7
    %v422 = vrot.slane %v421, 4
    %v424 = vshrl.u32 %v241, 16
    %v426 = vrot.slane %v424, 7
    %v427 = vshll.u32 %v241, 16
    %v429 = vor.u32 %v426, %v427
    %v430 = vsel %vm248, %v422, %v429
    %v432 = vshrl.u32 %v242, 16
    %v434 = vrot.slane %v432, 7
    %v435 = vrot.slane %v434, 4
    %v437 = vshrl.u32 %v243, 16
    %v439 = vrot.slane %v437, 7
    %v440 = vshll.u32 %v243, 16
    %v442 = vor.u32 %v439, %v440
    %v443 = vsel %vm248, %v435, %v442
    %v445 = vshrl.u32 %v244, 16
    %v447 = vrot.slane %v445, 7
    %v448 = vrot.slane %v447, 4
    %v450 = vshrl.u32 %v245, 16
    %v452 = vrot.slane %v450, 7
    %v453 = vshll.u32 %v245, 16
    %v455 = vor.u32 %v452, %v453
    %v456 = vsel %vm248, %v448, %v455
    %473 = vst [vmem:[#allocation4] sm:$0xf] %v261
    %474 = vst [vmem:[#allocation4 + $0x24] sm:$0xf] %v274
    %475 = vst [vmem:[#allocation4 + $0x48] sm:$0xf] %v287
    %476 = vst [vmem:[#allocation4 + $0x6c] sm:$0xf] %v300
    %477 = vst [vmem:[#allocation4 + $0x90] sm:$0xf] %v313
    %478 = vst [vmem:[#allocation4 + $0xb4] sm:$0xf] %v326
    %479 = vst [vmem:[#allocation4 + $0xd8] sm:$0xf] %v339
    %480 = vst [vmem:[#allocation4 + $0xfc] sm:$0xf] %v352
    %481 = vst [vmem:[#allocation4 + $0x120] sm:$0xf] %v365
    %482 = vst [vmem:[#allocation4 + $0x144] sm:$0xf] %v378
    %483 = vst [vmem:[#allocation4 + $0x168] sm:$0xf] %v391
    %484 = vst [vmem:[#allocation4 + $0x18c] sm:$0xf] %v404
    %485 = vst [vmem:[#allocation4 + $0x1b0] sm:$0xf] %v417
    %486 = vst [vmem:[#allocation4 + $0x1d4] sm:$0xf] %v430
    %487 = vst [vmem:[#allocation4 + $0x1f8] sm:$0xf] %v443
    %488 = vst [vmem:[#allocation4 + $0x21c] sm:$0xf] %v456
    %v489 = vld [vmem:[#allocation2 + $0x4] sm:$0xf]
    %v490 = vld [vmem:[#allocation2 + $0x10] sm:$0xf]
    %v491 = vld [vmem:[#allocation2 + $0x1c] sm:$0xf]
    %v492 = vld [vmem:[#allocation2 + $0x28] sm:$0xf]
    %v493 = vld [vmem:[#allocation2 + $0x34] sm:$0xf]
    %v494 = vld [vmem:[#allocation2 + $0x40] sm:$0xf]
    %v495 = vld [vmem:[#allocation2 + $0x4c] sm:$0xf]
    %v496 = vld [vmem:[#allocation2 + $0x58] sm:$0xf]
    %v497 = vld [vmem:[#allocation2 + $0x7c] sm:$0xf]
    %v498 = vld [vmem:[#allocation2 + $0x88] sm:$0xf]
    %v499 = vld [vmem:[#allocation2 + $0x94] sm:$0xf]
    %v500 = vld [vmem:[#allocation2 + $0xa0] sm:$0xf]
    %v501 = vld [vmem:[#allocation2 + $0xac] sm:$0xf]
    %v502 = vld [vmem:[#allocation2 + $0xb8] sm:$0xf]
    %v503 = vld [vmem:[#allocation2 + $0xc4] sm:$0xf]
    %v504 = vld [vmem:[#allocation2 + $0xd0] sm:$0xf]
    %505 = vst [vmem:[#allocation4 + $0x4] sm:$0xf] %v489
    %506 = vst [vmem:[#allocation4 + $0x28] sm:$0xf] %v490
    %507 = vst [vmem:[#allocation4 + $0x4c] sm:$0xf] %v491
    %508 = vst [vmem:[#allocation4 + $0x70] sm:$0xf] %v492
    %509 = vst [vmem:[#allocation4 + $0x94] sm:$0xf] %v493
    %510 = vst [vmem:[#allocation4 + $0xb8] sm:$0xf] %v494
    %511 = vst [vmem:[#allocation4 + $0xdc] sm:$0xf] %v495
    %512 = vst [vmem:[#allocation4 + $0x100] sm:$0xf] %v496
    %513 = vst [vmem:[#allocation4 + $0x124] sm:$0xf] %v497
    %514 = vst [vmem:[#allocation4 + $0x148] sm:$0xf] %v498
    %515 = vst [vmem:[#allocation4 + $0x16c] sm:$0xf] %v499
    %516 = vst [vmem:[#allocation4 + $0x190] sm:$0xf] %v500
    %517 = vst [vmem:[#allocation4 + $0x1b4] sm:$0xf] %v501
    %518 = vst [vmem:[#allocation4 + $0x1d8] sm:$0xf] %v502
    %519 = vst [vmem:[#allocation4 + $0x1fc] sm:$0xf] %v503
    %520 = vst [vmem:[#allocation4 + $0x220] sm:$0xf] %v504
    %v521 = vld [vmem:[#allocation2 + $0x4] sm:$0xf]
    %v522 = vld [vmem:[#allocation2 + $0x8] sm:$0x1]
    %v523 = vld [vmem:[#allocation2 + $0x10] sm:$0xf]
    %v524 = vld [vmem:[#allocation2 + $0x14] sm:$0x1]
    %v525 = vld [vmem:[#allocation2 + $0x1c] sm:$0xf]
    %v526 = vld [vmem:[#allocation2 + $0x20] sm:$0x1]
    %v527 = vld [vmem:[#allocation2 + $0x28] sm:$0xf]
    %v528 = vld [vmem:[#allocation2 + $0x2c] sm:$0x1]
    %v529 = vld [vmem:[#allocation2 + $0x34] sm:$0xf]
    %v530 = vld [vmem:[#allocation2 + $0x38] sm:$0x1]
    %v531 = vld [vmem:[#allocation2 + $0x40] sm:$0xf]
    %v532 = vld [vmem:[#allocation2 + $0x44] sm:$0x1]
    %v533 = vld [vmem:[#allocation2 + $0x4c] sm:$0xf]
    %v534 = vld [vmem:[#allocation2 + $0x50] sm:$0x1]
    %v535 = vld [vmem:[#allocation2 + $0x58] sm:$0xf]
    %v536 = vld [vmem:[#allocation2 + $0x5c] sm:$0x1]
    %v537 = vld [vmem:[#allocation2 + $0x7c] sm:$0xf]
    %v538 = vld [vmem:[#allocation2 + $0x80] sm:$0x1]
    %v539 = vld [vmem:[#allocation2 + $0x88] sm:$0xf]
    %v540 = vld [vmem:[#allocation2 + $0x8c] sm:$0x1]
    %v541 = vld [vmem:[#allocation2 + $0x94] sm:$0xf]
    %v542 = vld [vmem:[#allocation2 + $0x98] sm:$0x1]
    %v543 = vld [vmem:[#allocation2 + $0xa0] sm:$0xf]
    %v544 = vld [vmem:[#allocation2 + $0xa4] sm:$0x1]
    %v545 = vld [vmem:[#allocation2 + $0xac] sm:$0xf]
    %v546 = vld [vmem:[#allocation2 + $0xb0] sm:$0x1]
    %v547 = vld [vmem:[#allocation2 + $0xb8] sm:$0xf]
    %v548 = vld [vmem:[#allocation2 + $0xbc] sm:$0x1]
    %v549 = vld [vmem:[#allocation2 + $0xc4] sm:$0xf]
    %v550 = vld [vmem:[#allocation2 + $0xc8] sm:$0x1]
    %v551 = vld [vmem:[#allocation2 + $0xd0] sm:$0xf]
    %v552 = vld [vmem:[#allocation2 + $0xd4] sm:$0x1]
    %vm553 = vsmask.f32 3328
    %vm554 = vsmask.f32 7440
    %vm555 = vmor %vm553, %vm554
    %v557 = vshrl.u32 %v521, 16
    %v559 = vrot.slane %v557, 4
    %v560 = vshll.u32 %v521, 16
    %v562 = vrot.slane %v560, 5
    %v563 = vor.u32 %v559, %v562
    %v564 = vrot.slane %v563, 4
    %v566 = vshll.u32 %v522, 16
    %v568 = vrot.slane %v566, 5
    %v569 = vsel %vm555, %v564, %v568
    %v571 = vshrl.u32 %v523, 16
    %v573 = vrot.slane %v571, 4
    %v574 = vshll.u32 %v523, 16
    %v576 = vrot.slane %v574, 5
    %v577 = vor.u32 %v573, %v576
    %v578 = vrot.slane %v577, 4
    %v580 = vshll.u32 %v524, 16
    %v582 = vrot.slane %v580, 5
    %v583 = vsel %vm555, %v578, %v582
    %v585 = vshrl.u32 %v525, 16
    %v587 = vrot.slane %v585, 4
    %v588 = vshll.u32 %v525, 16
    %v590 = vrot.slane %v588, 5
    %v591 = vor.u32 %v587, %v590
    %v592 = vrot.slane %v591, 4
    %v594 = vshll.u32 %v526, 16
    %v596 = vrot.slane %v594, 5
    %v597 = vsel %vm555, %v592, %v596
    %v599 = vshrl.u32 %v527, 16
    %v601 = vrot.slane %v599, 4
    %v602 = vshll.u32 %v527, 16
    %v604 = vrot.slane %v602, 5
    %v605 = vor.u32 %v601, %v604
    %v606 = vrot.slane %v605, 4
    %v608 = vshll.u32 %v528, 16
    %v610 = vrot.slane %v608, 5
    %v611 = vsel %vm555, %v606, %v610
    %v613 = vshrl.u32 %v529, 16
    %v615 = vrot.slane %v613, 4
    %v616 = vshll.u32 %v529, 16
    %v618 = vrot.slane %v616, 5
    %v619 = vor.u32 %v615, %v618
    %v620 = vrot.slane %v619, 4
    %v622 = vshll.u32 %v530, 16
    %v624 = vrot.slane %v622, 5
    %v625 = vsel %vm555, %v620, %v624
    %v627 = vshrl.u32 %v531, 16
    %v629 = vrot.slane %v627, 4
    %v630 = vshll.u32 %v531, 16
    %v632 = vrot.slane %v630, 5
    %v633 = vor.u32 %v629, %v632
    %v634 = vrot.slane %v633, 4
    %v636 = vshll.u32 %v532, 16
    %v638 = vrot.slane %v636, 5
    %v639 = vsel %vm555, %v634, %v638
    %v641 = vshrl.u32 %v533, 16
    %v643 = vrot.slane %v641, 4
    %v644 = vshll.u32 %v533, 16
    %v646 = vrot.slane %v644, 5
    %v647 = vor.u32 %v643, %v646
    %v648 = vrot.slane %v647, 4
    %v650 = vshll.u32 %v534, 16
    %v652 = vrot.slane %v650, 5
    %v653 = vsel %vm555, %v648, %v652
    %v655 = vshrl.u32 %v535, 16
    %v657 = vrot.slane %v655, 4
    %v658 = vshll.u32 %v535, 16
    %v660 = vrot.slane %v658, 5
    %v661 = vor.u32 %v657, %v660
    %v662 = vrot.slane %v661, 4
    %v664 = vshll.u32 %v536, 16
    %v666 = vrot.slane %v664, 5
    %v667 = vsel %vm555, %v662, %v666
    %v669 = vshrl.u32 %v537, 16
    %v671 = vrot.slane %v669, 4
    %v672 = vshll.u32 %v537, 16
    %v674 = vrot.slane %v672, 5
    %v675 = vor.u32 %v671, %v674
    %v676 = vrot.slane %v675, 4
    %v678 = vshll.u32 %v538, 16
    %v680 = vrot.slane %v678, 5
    %v681 = vsel %vm555, %v676, %v680
    %v683 = vshrl.u32 %v539, 16
    %v685 = vrot.slane %v683, 4
    %v686 = vshll.u32 %v539, 16
    %v688 = vrot.slane %v686, 5
    %v689 = vor.u32 %v685, %v688
    %v690 = vrot.slane %v689, 4
    %v692 = vshll.u32 %v540, 16
    %v694 = vrot.slane %v692, 5
    %v695 = vsel %vm555, %v690, %v694
    %v697 = vshrl.u32 %v541, 16
    %v699 = vrot.slane %v697, 4
    %v700 = vshll.u32 %v541, 16
    %v702 = vrot.slane %v700, 5
    %v703 = vor.u32 %v699, %v702
    %v704 = vrot.slane %v703, 4
    %v706 = vshll.u32 %v542, 16
    %v708 = vrot.slane %v706, 5
    %v709 = vsel %vm555, %v704, %v708
    %v711 = vshrl.u32 %v543, 16
    %v713 = vrot.slane %v711, 4
    %v714 = vshll.u32 %v543, 16
    %v716 = vrot.slane %v714, 5
    %v717 = vor.u32 %v713, %v716
    %v718 = vrot.slane %v717, 4
    %v720 = vshll.u32 %v544, 16
    %v722 = vrot.slane %v720, 5
    %v723 = vsel %vm555, %v718, %v722
    %v725 = vshrl.u32 %v545, 16
    %v727 = vrot.slane %v725, 4
    %v728 = vshll.u32 %v545, 16
    %v730 = vrot.slane %v728, 5
    %v731 = vor.u32 %v727, %v730
    %v732 = vrot.slane %v731, 4
    %v734 = vshll.u32 %v546, 16
    %v736 = vrot.slane %v734, 5
    %v737 = vsel %vm555, %v732, %v736
    %v739 = vshrl.u32 %v547, 16
    %v741 = vrot.slane %v739, 4
    %v742 = vshll.u32 %v547, 16
    %v744 = vrot.slane %v742, 5
    %v745 = vor.u32 %v741, %v744
    %v746 = vrot.slane %v745, 4
    %v748 = vshll.u32 %v548, 16
    %v750 = vrot.slane %v748, 5
    %v751 = vsel %vm555, %v746, %v750
    %v753 = vshrl.u32 %v549, 16
    %v755 = vrot.slane %v753, 4
    %v756 = vshll.u32 %v549, 16
    %v758 = vrot.slane %v756, 5
    %v759 = vor.u32 %v755, %v758
    %v760 = vrot.slane %v759, 4
    %v762 = vshll.u32 %v550, 16
    %v764 = vrot.slane %v762, 5
    %v765 = vsel %vm555, %v760, %v764
    %v767 = vshrl.u32 %v551, 16
    %v769 = vrot.slane %v767, 4
    %v770 = vshll.u32 %v551, 16
    %v772 = vrot.slane %v770, 5
    %v773 = vor.u32 %v769, %v772
    %v774 = vrot.slane %v773, 4
    %v776 = vshll.u32 %v552, 16
    %v778 = vrot.slane %v776, 5
    %v779 = vsel %vm555, %v774, %v778
    %796 = vst [vmem:[#allocation4 + $0x8] sm:$0xf] %v569
    %797 = vst [vmem:[#allocation4 + $0x2c] sm:$0xf] %v583
    %798 = vst [vmem:[#allocation4 + $0x50] sm:$0xf] %v597
    %799 = vst [vmem:[#allocation4 + $0x74] sm:$0xf] %v611
    %800 = vst [vmem:[#allocation4 + $0x98] sm:$0xf] %v625
    %801 = vst [vmem:[#allocation4 + $0xbc] sm:$0xf] %v639
    %802 = vst [vmem:[#allocation4 + $0xe0] sm:$0xf] %v653
    %803 = vst [vmem:[#allocation4 + $0x104] sm:$0xf] %v667
    %804 = vst [vmem:[#allocation4 + $0x128] sm:$0xf] %v681
    %805 = vst [vmem:[#allocation4 + $0x14c] sm:$0xf] %v695
    %806 = vst [vmem:[#allocation4 + $0x170] sm:$0xf] %v709
    %807 = vst [vmem:[#allocation4 + $0x194] sm:$0xf] %v723
    %808 = vst [vmem:[#allocation4 + $0x1b8] sm:$0xf] %v737
    %809 = vst [vmem:[#allocation4 + $0x1dc] sm:$0xf] %v751
    %810 = vst [vmem:[#allocation4 + $0x200] sm:$0xf] %v765
    %811 = vst [vmem:[#allocation4 + $0x224] sm:$0xf] %v779
    %v812 = vld [vmem:[%s197] sm:$0x8]
    %v813 = vld [vmem:[%s197 + $0x4] sm:$0xf]
    %v814 = vld [vmem:[%s197 + $0xc] sm:$0x8]
    %v815 = vld [vmem:[%s197 + $0x10] sm:$0xf]
    %v816 = vld [vmem:[%s197 + $0x18] sm:$0x8]
    %v817 = vld [vmem:[%s197 + $0x1c] sm:$0xf]
    %v818 = vld [vmem:[%s197 + $0x24] sm:$0x8]
    %v819 = vld [vmem:[%s197 + $0x28] sm:$0xf]
    %v820 = vld [vmem:[%s197 + $0x30] sm:$0x8]
    %v821 = vld [vmem:[%s197 + $0x34] sm:$0xf]
    %v822 = vld [vmem:[%s197 + $0x3c] sm:$0x8]
    %v823 = vld [vmem:[%s197 + $0x40] sm:$0xf]
    %v824 = vld [vmem:[%s197 + $0x48] sm:$0x8]
    %v825 = vld [vmem:[%s197 + $0x4c] sm:$0xf]
    %v826 = vld [vmem:[%s197 + $0x54] sm:$0x8]
    %v827 = vld [vmem:[%s197 + $0x58] sm:$0xf]
    %v828 = vld [vmem:[%s197 + $0x78] sm:$0x8]
    %v829 = vld [vmem:[%s197 + $0x7c] sm:$0xf]
    %v830 = vld [vmem:[%s197 + $0x84] sm:$0x8]
    %v831 = vld [vmem:[%s197 + $0x88] sm:$0xf]
    %v832 = vld [vmem:[%s197 + $0x90] sm:$0x8]
    %v833 = vld [vmem:[%s197 + $0x94] sm:$0xf]
    %v834 = vld [vmem:[%s197 + $0x9c] sm:$0x8]
    %v835 = vld [vmem:[%s197 + $0xa0] sm:$0xf]
    %v836 = vld [vmem:[%s197 + $0xa8] sm:$0x8]
    %v837 = vld [vmem:[%s197 + $0xac] sm:$0xf]
    %v838 = vld [vmem:[%s197 + $0xb4] sm:$0x8]
    %v839 = vld [vmem:[%s197 + $0xb8] sm:$0xf]
    %v840 = vld [vmem:[%s197 + $0xc0] sm:$0x8]
    %v841 = vld [vmem:[%s197 + $0xc4] sm:$0xf]
    %v842 = vld [vmem:[%s197 + $0xcc] sm:$0x8]
    %v843 = vld [vmem:[%s197 + $0xd0] sm:$0xf]
    %v845 = vshrl.u32 %v812, 16
    %v847 = vrot.slane %v845, 7
    %v848 = vrot.slane %v847, 4
    %v850 = vshrl.u32 %v813, 16
    %v852 = vrot.slane %v850, 7
    %v853 = vshll.u32 %v813, 16
    %v855 = vor.u32 %v852, %v853
    %v856 = vsel %vm248, %v848, %v855
    %v858 = vshrl.u32 %v814, 16
    %v860 = vrot.slane %v858, 7
    %v861 = vrot.slane %v860, 4
    %v863 = vshrl.u32 %v815, 16
    %v865 = vrot.slane %v863, 7
    %v866 = vshll.u32 %v815, 16
    %v868 = vor.u32 %v865, %v866
    %v869 = vsel %vm248, %v861, %v868
    %v871 = vshrl.u32 %v816, 16
    %v873 = vrot.slane %v871, 7
    %v874 = vrot.slane %v873, 4
    %v876 = vshrl.u32 %v817, 16
    %v878 = vrot.slane %v876, 7
    %v879 = vshll.u32 %v817, 16
    %v881 = vor.u32 %v878, %v879
    %v882 = vsel %vm248, %v874, %v881
    %v884 = vshrl.u32 %v818, 16
    %v886 = vrot.slane %v884, 7
    %v887 = vrot.slane %v886, 4
    %v889 = vshrl.u32 %v819, 16
    %v891 = vrot.slane %v889, 7
    %v892 = vshll.u32 %v819, 16
    %v894 = vor.u32 %v891, %v892
    %v895 = vsel %vm248, %v887, %v894
    %v897 = vshrl.u32 %v820, 16
    %v899 = vrot.slane %v897, 7
    %v900 = vrot.slane %v899, 4
    %v902 = vshrl.u32 %v821, 16
    %v904 = vrot.slane %v902, 7
    %v905 = vshll.u32 %v821, 16
    %v907 = vor.u32 %v904, %v905
    %v908 = vsel %vm248, %v900, %v907
    %v910 = vshrl.u32 %v822, 16
    %v912 = vrot.slane %v910, 7
    %v913 = vrot.slane %v912, 4
    %v915 = vshrl.u32 %v823, 16
    %v917 = vrot.slane %v915, 7
    %v918 = vshll.u32 %v823, 16
    %v920 = vor.u32 %v917, %v918
    %v921 = vsel %vm248, %v913, %v920
    %v923 = vshrl.u32 %v824, 16
    %v925 = vrot.slane %v923, 7
    %v926 = vrot.slane %v925, 4
    %v928 = vshrl.u32 %v825, 16
    %v930 = vrot.slane %v928, 7
    %v931 = vshll.u32 %v825, 16
    %v933 = vor.u32 %v930, %v931
    %v934 = vsel %vm248, %v926, %v933
    %v936 = vshrl.u32 %v826, 16
    %v938 = vrot.slane %v936, 7
    %v939 = vrot.slane %v938, 4
    %v941 = vshrl.u32 %v827, 16
    %v943 = vrot.slane %v941, 7
    %v944 = vshll.u32 %v827, 16
    %v946 = vor.u32 %v943, %v944
    %v947 = vsel %vm248, %v939, %v946
    %v949 = vshrl.u32 %v828, 16
    %v951 = vrot.slane %v949, 7
    %v952 = vrot.slane %v951, 4
    %v954 = vshrl.u32 %v829, 16
    %v956 = vrot.slane %v954, 7
    %v957 = vshll.u32 %v829, 16
    %v959 = vor.u32 %v956, %v957
    %v960 = vsel %vm248, %v952, %v959
    %v962 = vshrl.u32 %v830, 16
    %v964 = vrot.slane %v962, 7
    %v965 = vrot.slane %v964, 4
    %v967 = vshrl.u32 %v831, 16
    %v969 = vrot.slane %v967, 7
    %v970 = vshll.u32 %v831, 16
    %v972 = vor.u32 %v969, %v970
    %v973 = vsel %vm248, %v965, %v972
    %v975 = vshrl.u32 %v832, 16
    %v977 = vrot.slane %v975, 7
    %v978 = vrot.slane %v977, 4
    %v980 = vshrl.u32 %v833, 16
    %v982 = vrot.slane %v980, 7
    %v983 = vshll.u32 %v833, 16
    %v985 = vor.u32 %v982, %v983
    %v986 = vsel %vm248, %v978, %v985
    %v988 = vshrl.u32 %v834, 16
    %v990 = vrot.slane %v988, 7
    %v991 = vrot.slane %v990, 4
    %v993 = vshrl.u32 %v835, 16
    %v995 = vrot.slane %v993, 7
    %v996 = vshll.u32 %v835, 16
    %v998 = vor.u32 %v995, %v996
    %v999 = vsel %vm248, %v991, %v998
    %v1001 = vshrl.u32 %v836, 16
    %v1003 = vrot.slane %v1001, 7
    %v1004 = vrot.slane %v1003, 4
    %v1006 = vshrl.u32 %v837, 16
    %v1008 = vrot.slane %v1006, 7
    %v1009 = vshll.u32 %v837, 16
    %v1011 = vor.u32 %v1008, %v1009
    %v1012 = vsel %vm248, %v1004, %v1011
    %v1014 = vshrl.u32 %v838, 16
    %v1016 = vrot.slane %v1014, 7
    %v1017 = vrot.slane %v1016, 4
    %v1019 = vshrl.u32 %v839, 16
    %v1021 = vrot.slane %v1019, 7
    %v1022 = vshll.u32 %v839, 16
    %v1024 = vor.u32 %v1021, %v1022
    %v1025 = vsel %vm248, %v1017, %v1024
    %v1027 = vshrl.u32 %v840, 16
    %v1029 = vrot.slane %v1027, 7
    %v1030 = vrot.slane %v1029, 4
    %v1032 = vshrl.u32 %v841, 16
    %v1034 = vrot.slane %v1032, 7
    %v1035 = vshll.u32 %v841, 16
    %v1037 = vor.u32 %v1034, %v1035
    %v1038 = vsel %vm248, %v1030, %v1037
    %v1040 = vshrl.u32 %v842, 16
    %v1042 = vrot.slane %v1040, 7
    %v1043 = vrot.slane %v1042, 4
    %v1045 = vshrl.u32 %v843, 16
    %v1047 = vrot.slane %v1045, 7
    %v1048 = vshll.u32 %v843, 16
    %v1050 = vor.u32 %v1047, %v1048
    %v1051 = vsel %vm248, %v1043, %v1050
    %1068 = vst [vmem:[#allocation4 + $0xc] sm:$0xf] %v856
    %1069 = vst [vmem:[#allocation4 + $0x30] sm:$0xf] %v869
    %1070 = vst [vmem:[#allocation4 + $0x54] sm:$0xf] %v882
    %1071 = vst [vmem:[#allocation4 + $0x78] sm:$0xf] %v895
    %1072 = vst [vmem:[#allocation4 + $0x9c] sm:$0xf] %v908
    %1073 = vst [vmem:[#allocation4 + $0xc0] sm:$0xf] %v921
    %1074 = vst [vmem:[#allocation4 + $0xe4] sm:$0xf] %v934
    %1075 = vst [vmem:[#allocation4 + $0x108] sm:$0xf] %v947
    %1076 = vst [vmem:[#allocation4 + $0x12c] sm:$0xf] %v960
    %1077 = vst [vmem:[#allocation4 + $0x150] sm:$0xf] %v973
    %1078 = vst [vmem:[#allocation4 + $0x174] sm:$0xf] %v986
    %1079 = vst [vmem:[#allocation4 + $0x198] sm:$0xf] %v999
    %1080 = vst [vmem:[#allocation4 + $0x1bc] sm:$0xf] %v1012
    %1081 = vst [vmem:[#allocation4 + $0x1e0] sm:$0xf] %v1025
    %1082 = vst [vmem:[#allocation4 + $0x204] sm:$0xf] %v1038
    %1083 = vst [vmem:[#allocation4 + $0x228] sm:$0xf] %v1051
    %v1084 = vld [vmem:[%s197 + $0x4] sm:$0xf]
    %v1085 = vld [vmem:[%s197 + $0x10] sm:$0xf]
    %v1086 = vld [vmem:[%s197 + $0x1c] sm:$0xf]
    %v1087 = vld [vmem:[%s197 + $0x28] sm:$0xf]
    %v1088 = vld [vmem:[%s197 + $0x34] sm:$0xf]
    %v1089 = vld [vmem:[%s197 + $0x40] sm:$0xf]
    %v1090 = vld [vmem:[%s197 + $0x4c] sm:$0xf]
    %v1091 = vld [vmem:[%s197 + $0x58] sm:$0xf]
    %v1092 = vld [vmem:[%s197 + $0x7c] sm:$0xf]
    %v1093 = vld [vmem:[%s197 + $0x88] sm:$0xf]
    %v1094 = vld [vmem:[%s197 + $0x94] sm:$0xf]
    %v1095 = vld [vmem:[%s197 + $0xa0] sm:$0xf]
    %v1096 = vld [vmem:[%s197 + $0xac] sm:$0xf]
    %v1097 = vld [vmem:[%s197 + $0xb8] sm:$0xf]
    %v1098 = vld [vmem:[%s197 + $0xc4] sm:$0xf]
    %v1099 = vld [vmem:[%s197 + $0xd0] sm:$0xf]
    %1100 = vst [vmem:[#allocation4 + $0x10] sm:$0xf] %v1084
    %1101 = vst [vmem:[#allocation4 + $0x34] sm:$0xf] %v1085
    %1102 = vst [vmem:[#allocation4 + $0x58] sm:$0xf] %v1086
    %1103 = vst [vmem:[#allocation4 + $0x7c] sm:$0xf] %v1087
    %1104 = vst [vmem:[#allocation4 + $0xa0] sm:$0xf] %v1088
    %1105 = vst [vmem:[#allocation4 + $0xc4] sm:$0xf] %v1089
    %1106 = vst [vmem:[#allocation4 + $0xe8] sm:$0xf] %v1090
    %1107 = vst [vmem:[#allocation4 + $0x10c] sm:$0xf] %v1091
    %1108 = vst [vmem:[#allocation4 + $0x130] sm:$0xf] %v1092
    %1109 = vst [vmem:[#allocation4 + $0x154] sm:$0xf] %v1093
    %1110 = vst [vmem:[#allocation4 + $0x178] sm:$0xf] %v1094
    %1111 = vst [vmem:[#allocation4 + $0x19c] sm:$0xf] %v1095
    %1112 = vst [vmem:[#allocation4 + $0x1c0] sm:$0xf] %v1096
    %1113 = vst [vmem:[#allocation4 + $0x1e4] sm:$0xf] %v1097
    %1114 = vst [vmem:[#allocation4 + $0x208] sm:$0xf] %v1098
    %1115 = vst [vmem:[#allocation4 + $0x22c] sm:$0xf] %v1099
    %v1116 = vld [vmem:[%s197 + $0x4] sm:$0xf]
    %v1117 = vld [vmem:[%s197 + $0x8] sm:$0x1]
    %v1118 = vld [vmem:[%s197 + $0x10] sm:$0xf]
    %v1119 = vld [vmem:[%s197 + $0x14] sm:$0x1]
    %v1120 = vld [vmem:[%s197 + $0x1c] sm:$0xf]
    %v1121 = vld [vmem:[%s197 + $0x20] sm:$0x1]
    %v1122 = vld [vmem:[%s197 + $0x28] sm:$0xf]
    %v1123 = vld [vmem:[%s197 + $0x2c] sm:$0x1]
    %v1124 = vld [vmem:[%s197 + $0x34] sm:$0xf]
    %v1125 = vld [vmem:[%s197 + $0x38] sm:$0x1]
    %v1126 = vld [vmem:[%s197 + $0x40] sm:$0xf]
    %v1127 = vld [vmem:[%s197 + $0x44] sm:$0x1]
    %v1128 = vld [vmem:[%s197 + $0x4c] sm:$0xf]
    %v1129 = vld [vmem:[%s197 + $0x50] sm:$0x1]
    %v1130 = vld [vmem:[%s197 + $0x58] sm:$0xf]
    %v1131 = vld [vmem:[%s197 + $0x5c] sm:$0x1]
    %v1132 = vld [vmem:[%s197 + $0x7c] sm:$0xf]
    %v1133 = vld [vmem:[%s197 + $0x80] sm:$0x1]
    %v1134 = vld [vmem:[%s197 + $0x88] sm:$0xf]
    %v1135 = vld [vmem:[%s197 + $0x8c] sm:$0x1]
    %v1136 = vld [vmem:[%s197 + $0x94] sm:$0xf]
    %v1137 = vld [vmem:[%s197 + $0x98] sm:$0x1]
    %v1138 = vld [vmem:[%s197 + $0xa0] sm:$0xf]
    %v1139 = vld [vmem:[%s197 + $0xa4] sm:$0x1]
    %v1140 = vld [vmem:[%s197 + $0xac] sm:$0xf]
    %v1141 = vld [vmem:[%s197 + $0xb0] sm:$0x1]
    %v1142 = vld [vmem:[%s197 + $0xb8] sm:$0xf]
    %v1143 = vld [vmem:[%s197 + $0xbc] sm:$0x1]
    %v1144 = vld [vmem:[%s197 + $0xc4] sm:$0xf]
    %v1145 = vld [vmem:[%s197 + $0xc8] sm:$0x1]
    %v1146 = vld [vmem:[%s197 + $0xd0] sm:$0xf]
    %v1147 = vld [vmem:[%s197 + $0xd4] sm:$0x1]
    %v1149 = vshrl.u32 %v1116, 16
    %v1151 = vrot.slane %v1149, 4
    %v1152 = vshll.u32 %v1116, 16
    %v1154 = vrot.slane %v1152, 5
    %v1155 = vor.u32 %v1151, %v1154
    %v1156 = vrot.slane %v1155, 4
    %v1158 = vshll.u32 %v1117, 16
    %v1160 = vrot.slane %v1158, 5
    %v1161 = vsel %vm555, %v1156, %v1160
    %v1163 = vshrl.u32 %v1118, 16
    %v1165 = vrot.slane %v1163, 4
    %v1166 = vshll.u32 %v1118, 16
    %v1168 = vrot.slane %v1166, 5
    %v1169 = vor.u32 %v1165, %v1168
    %v1170 = vrot.slane %v1169, 4
    %v1172 = vshll.u32 %v1119, 16
    %v1174 = vrot.slane %v1172, 5
    %v1175 = vsel %vm555, %v1170, %v1174
    %v1177 = vshrl.u32 %v1120, 16
    %v1179 = vrot.slane %v1177, 4
    %v1180 = vshll.u32 %v1120, 16
    %v1182 = vrot.slane %v1180, 5
    %v1183 = vor.u32 %v1179, %v1182
    %v1184 = vrot.slane %v1183, 4
    %v1186 = vshll.u32 %v1121, 16
    %v1188 = vrot.slane %v1186, 5
    %v1189 = vsel %vm555, %v1184, %v1188
    %v1191 = vshrl.u32 %v1122, 16
    %v1193 = vrot.slane %v1191, 4
    %v1194 = vshll.u32 %v1122, 16
    %v1196 = vrot.slane %v1194, 5
    %v1197 = vor.u32 %v1193, %v1196
    %v1198 = vrot.slane %v1197, 4
    %v1200 = vshll.u32 %v1123, 16
    %v1202 = vrot.slane %v1200, 5
    %v1203 = vsel %vm555, %v1198, %v1202
    %v1205 = vshrl.u32 %v1124, 16
    %v1207 = vrot.slane %v1205, 4
    %v1208 = vshll.u32 %v1124, 16
    %v1210 = vrot.slane %v1208, 5
    %v1211 = vor.u32 %v1207, %v1210
    %v1212 = vrot.slane %v1211, 4
    %v1214 = vshll.u32 %v1125, 16
    %v1216 = vrot.slane %v1214, 5
    %v1217 = vsel %vm555, %v1212, %v1216
    %v1219 = vshrl.u32 %v1126, 16
    %v1221 = vrot.slane %v1219, 4
    %v1222 = vshll.u32 %v1126, 16
    %v1224 = vrot.slane %v1222, 5
    %v1225 = vor.u32 %v1221, %v1224
    %v1226 = vrot.slane %v1225, 4
    %v1228 = vshll.u32 %v1127, 16
    %v1230 = vrot.slane %v1228, 5
    %v1231 = vsel %vm555, %v1226, %v1230
    %v1233 = vshrl.u32 %v1128, 16
    %v1235 = vrot.slane %v1233, 4
    %v1236 = vshll.u32 %v1128, 16
    %v1238 = vrot.slane %v1236, 5
    %v1239 = vor.u32 %v1235, %v1238
    %v1240 = vrot.slane %v1239, 4
    %v1242 = vshll.u32 %v1129, 16
    %v1244 = vrot.slane %v1242, 5
    %v1245 = vsel %vm555, %v1240, %v1244
    %v1247 = vshrl.u32 %v1130, 16
    %v1249 = vrot.slane %v1247, 4
    %v1250 = vshll.u32 %v1130, 16
    %v1252 = vrot.slane %v1250, 5
    %v1253 = vor.u32 %v1249, %v1252
    %v1254 = vrot.slane %v1253, 4
    %v1256 = vshll.u32 %v1131, 16
    %v1258 = vrot.slane %v1256, 5
    %v1259 = vsel %vm555, %v1254, %v1258
    %v1261 = vshrl.u32 %v1132, 16
    %v1263 = vrot.slane %v1261, 4
    %v1264 = vshll.u32 %v1132, 16
    %v1266 = vrot.slane %v1264, 5
    %v1267 = vor.u32 %v1263, %v1266
    %v1268 = vrot.slane %v1267, 4
    %v1270 = vshll.u32 %v1133, 16
    %v1272 = vrot.slane %v1270, 5
    %v1273 = vsel %vm555, %v1268, %v1272
    %v1275 = vshrl.u32 %v1134, 16
    %v1277 = vrot.slane %v1275, 4
    %v1278 = vshll.u32 %v1134, 16
    %v1280 = vrot.slane %v1278, 5
    %v1281 = vor.u32 %v1277, %v1280
    %v1282 = vrot.slane %v1281, 4
    %v1284 = vshll.u32 %v1135, 16
    %v1286 = vrot.slane %v1284, 5
    %v1287 = vsel %vm555, %v1282, %v1286
    %v1289 = vshrl.u32 %v1136, 16
    %v1291 = vrot.slane %v1289, 4
    %v1292 = vshll.u32 %v1136, 16
    %v1294 = vrot.slane %v1292, 5
    %v1295 = vor.u32 %v1291, %v1294
    %v1296 = vrot.slane %v1295, 4
    %v1298 = vshll.u32 %v1137, 16
    %v1300 = vrot.slane %v1298, 5
    %v1301 = vsel %vm555, %v1296, %v1300
    %v1303 = vshrl.u32 %v1138, 16
    %v1305 = vrot.slane %v1303, 4
    %v1306 = vshll.u32 %v1138, 16
    %v1308 = vrot.slane %v1306, 5
    %v1309 = vor.u32 %v1305, %v1308
    %v1310 = vrot.slane %v1309, 4
    %v1312 = vshll.u32 %v1139, 16
    %v1314 = vrot.slane %v1312, 5
    %v1315 = vsel %vm555, %v1310, %v1314
    %v1317 = vshrl.u32 %v1140, 16
    %v1319 = vrot.slane %v1317, 4
    %v1320 = vshll.u32 %v1140, 16
    %v1322 = vrot.slane %v1320, 5
    %v1323 = vor.u32 %v1319, %v1322
    %v1324 = vrot.slane %v1323, 4
    %v1326 = vshll.u32 %v1141, 16
    %v1328 = vrot.slane %v1326, 5
    %v1329 = vsel %vm555, %v1324, %v1328
    %v1331 = vshrl.u32 %v1142, 16
    %v1333 = vrot.slane %v1331, 4
    %v1334 = vshll.u32 %v1142, 16
    %v1336 = vrot.slane %v1334, 5
    %v1337 = vor.u32 %v1333, %v1336
    %v1338 = vrot.slane %v1337, 4
    %v1340 = vshll.u32 %v1143, 16
    %v1342 = vrot.slane %v1340, 5
    %v1343 = vsel %vm555, %v1338, %v1342
    %v1345 = vshrl.u32 %v1144, 16
    %v1347 = vrot.slane %v1345, 4
    %v1348 = vshll.u32 %v1144, 16
    %v1350 = vrot.slane %v1348, 5
    %v1351 = vor.u32 %v1347, %v1350
    %v1352 = vrot.slane %v1351, 4
    %v1354 = vshll.u32 %v1145, 16
    %v1356 = vrot.slane %v1354, 5
    %v1357 = vsel %vm555, %v1352, %v1356
    %v1359 = vshrl.u32 %v1146, 16
    %v1361 = vrot.slane %v1359, 4
    %v1362 = vshll.u32 %v1146, 16
    %v1364 = vrot.slane %v1362, 5
    %v1365 = vor.u32 %v1361, %v1364
    %v1366 = vrot.slane %v1365, 4
    %v1368 = vshll.u32 %v1147, 16
    %v1370 = vrot.slane %v1368, 5
    %v1371 = vsel %vm555, %v1366, %v1370
    %1388 = vst [vmem:[#allocation4 + $0x14] sm:$0xf] %v1161
    %1389 = vst [vmem:[#allocation4 + $0x38] sm:$0xf] %v1175
    %1390 = vst [vmem:[#allocation4 + $0x5c] sm:$0xf] %v1189
    %1391 = vst [vmem:[#allocation4 + $0x80] sm:$0xf] %v1203
    %1392 = vst [vmem:[#allocation4 + $0xa4] sm:$0xf] %v1217
    %1393 = vst [vmem:[#allocation4 + $0xc8] sm:$0xf] %v1231
    %1394 = vst [vmem:[#allocation4 + $0xec] sm:$0xf] %v1245
    %1395 = vst [vmem:[#allocation4 + $0x110] sm:$0xf] %v1259
    %1396 = vst [vmem:[#allocation4 + $0x134] sm:$0xf] %v1273
    %1397 = vst [vmem:[#allocation4 + $0x158] sm:$0xf] %v1287
    %1398 = vst [vmem:[#allocation4 + $0x17c] sm:$0xf] %v1301
    %1399 = vst [vmem:[#allocation4 + $0x1a0] sm:$0xf] %v1315
    %1400 = vst [vmem:[#allocation4 + $0x1c4] sm:$0xf] %v1329
    %1401 = vst [vmem:[#allocation4 + $0x1e8] sm:$0xf] %v1343
    %1402 = vst [vmem:[#allocation4 + $0x20c] sm:$0xf] %v1357
    %1403 = vst [vmem:[#allocation4 + $0x230] sm:$0xf] %v1371
    %s1404 = scalar_lea.vmem [#allocation2], 24
    %v1405 = vld [vmem:[%s1404] sm:$0x8]
    %v1406 = vld [vmem:[%s1404 + $0x4] sm:$0xf]
    %v1407 = vld [vmem:[%s1404 + $0xc] sm:$0x8]
    %v1408 = vld [vmem:[%s1404 + $0x10] sm:$0xf]
    %v1409 = vld [vmem:[%s1404 + $0x18] sm:$0x8]
    %v1410 = vld [vmem:[%s1404 + $0x1c] sm:$0xf]
    %v1411 = vld [vmem:[%s1404 + $0x24] sm:$0x8]
    %v1412 = vld [vmem:[%s1404 + $0x28] sm:$0xf]
    %v1413 = vld [vmem:[%s1404 + $0x30] sm:$0x8]
    %v1414 = vld [vmem:[%s1404 + $0x34] sm:$0xf]
    %v1415 = vld [vmem:[%s1404 + $0x3c] sm:$0x8]
    %v1416 = vld [vmem:[%s1404 + $0x40] sm:$0xf]
    %v1417 = vld [vmem:[%s1404 + $0x48] sm:$0x8]
    %v1418 = vld [vmem:[%s1404 + $0x4c] sm:$0xf]
    %v1419 = vld [vmem:[%s1404 + $0x54] sm:$0x8]
    %v1420 = vld [vmem:[%s1404 + $0x58] sm:$0xf]
    %v1421 = vld [vmem:[%s1404 + $0x78] sm:$0x8]
    %v1422 = vld [vmem:[%s1404 + $0x7c] sm:$0xf]
    %v1423 = vld [vmem:[%s1404 + $0x84] sm:$0x8]
    %v1424 = vld [vmem:[%s1404 + $0x88] sm:$0xf]
    %v1425 = vld [vmem:[%s1404 + $0x90] sm:$0x8]
    %v1426 = vld [vmem:[%s1404 + $0x94] sm:$0xf]
    %v1427 = vld [vmem:[%s1404 + $0x9c] sm:$0x8]
    %v1428 = vld [vmem:[%s1404 + $0xa0] sm:$0xf]
    %v1429 = vld [vmem:[%s1404 + $0xa8] sm:$0x8]
    %v1430 = vld [vmem:[%s1404 + $0xac] sm:$0xf]
    %v1431 = vld [vmem:[%s1404 + $0xb4] sm:$0x8]
    %v1432 = vld [vmem:[%s1404 + $0xb8] sm:$0xf]
    %v1433 = vld [vmem:[%s1404 + $0xc0] sm:$0x8]
    %v1434 = vld [vmem:[%s1404 + $0xc4] sm:$0xf]
    %v1435 = vld [vmem:[%s1404 + $0xcc] sm:$0x8]
    %v1436 = vld [vmem:[%s1404 + $0xd0] sm:$0xf]
    %v1438 = vshrl.u32 %v1405, 16
    %v1440 = vrot.slane %v1438, 7
    %v1441 = vrot.slane %v1440, 4
    %v1443 = vshrl.u32 %v1406, 16
    %v1445 = vrot.slane %v1443, 7
    %v1446 = vshll.u32 %v1406, 16
    %v1448 = vor.u32 %v1445, %v1446
    %v1449 = vsel %vm248, %v1441, %v1448
    %v1451 = vshrl.u32 %v1407, 16
    %v1453 = vrot.slane %v1451, 7
    %v1454 = vrot.slane %v1453, 4
    %v1456 = vshrl.u32 %v1408, 16
    %v1458 = vrot.slane %v1456, 7
    %v1459 = vshll.u32 %v1408, 16
    %v1461 = vor.u32 %v1458, %v1459
    %v1462 = vsel %vm248, %v1454, %v1461
    %v1464 = vshrl.u32 %v1409, 16
    %v1466 = vrot.slane %v1464, 7
    %v1467 = vrot.slane %v1466, 4
    %v1469 = vshrl.u32 %v1410, 16
    %v1471 = vrot.slane %v1469, 7
    %v1472 = vshll.u32 %v1410, 16
    %v1474 = vor.u32 %v1471, %v1472
    %v1475 = vsel %vm248, %v1467, %v1474
    %v1477 = vshrl.u32 %v1411, 16
    %v1479 = vrot.slane %v1477, 7
    %v1480 = vrot.slane %v1479, 4
    %v1482 = vshrl.u32 %v1412, 16
    %v1484 = vrot.slane %v1482, 7
    %v1485 = vshll.u32 %v1412, 16
    %v1487 = vor.u32 %v1484, %v1485
    %v1488 = vsel %vm248, %v1480, %v1487
    %v1490 = vshrl.u32 %v1413, 16
    %v1492 = vrot.slane %v1490, 7
    %v1493 = vrot.slane %v1492, 4
    %v1495 = vshrl.u32 %v1414, 16
    %v1497 = vrot.slane %v1495, 7
    %v1498 = vshll.u32 %v1414, 16
    %v1500 = vor.u32 %v1497, %v1498
    %v1501 = vsel %vm248, %v1493, %v1500
    %v1503 = vshrl.u32 %v1415, 16
    %v1505 = vrot.slane %v1503, 7
    %v1506 = vrot.slane %v1505, 4
    %v1508 = vshrl.u32 %v1416, 16
    %v1510 = vrot.slane %v1508, 7
    %v1511 = vshll.u32 %v1416, 16
    %v1513 = vor.u32 %v1510, %v1511
    %v1514 = vsel %vm248, %v1506, %v1513
    %v1516 = vshrl.u32 %v1417, 16
    %v1518 = vrot.slane %v1516, 7
    %v1519 = vrot.slane %v1518, 4
    %v1521 = vshrl.u32 %v1418, 16
    %v1523 = vrot.slane %v1521, 7
    %v1524 = vshll.u32 %v1418, 16
    %v1526 = vor.u32 %v1523, %v1524
    %v1527 = vsel %vm248, %v1519, %v1526
    %v1529 = vshrl.u32 %v1419, 16
    %v1531 = vrot.slane %v1529, 7
    %v1532 = vrot.slane %v1531, 4
    %v1534 = vshrl.u32 %v1420, 16
    %v1536 = vrot.slane %v1534, 7
    %v1537 = vshll.u32 %v1420, 16
    %v1539 = vor.u32 %v1536, %v1537
    %v1540 = vsel %vm248, %v1532, %v1539
    %v1542 = vshrl.u32 %v1421, 16
    %v1544 = vrot.slane %v1542, 7
    %v1545 = vrot.slane %v1544, 4
    %v1547 = vshrl.u32 %v1422, 16
    %v1549 = vrot.slane %v1547, 7
    %v1550 = vshll.u32 %v1422, 16
    %v1552 = vor.u32 %v1549, %v1550
    %v1553 = vsel %vm248, %v1545, %v1552
    %v1555 = vshrl.u32 %v1423, 16
    %v1557 = vrot.slane %v1555, 7
    %v1558 = vrot.slane %v1557, 4
    %v1560 = vshrl.u32 %v1424, 16
    %v1562 = vrot.slane %v1560, 7
    %v1563 = vshll.u32 %v1424, 16
    %v1565 = vor.u32 %v1562, %v1563
    %v1566 = vsel %vm248, %v1558, %v1565
    %v1568 = vshrl.u32 %v1425, 16
    %v1570 = vrot.slane %v1568, 7
    %v1571 = vrot.slane %v1570, 4
    %v1573 = vshrl.u32 %v1426, 16
    %v1575 = vrot.slane %v1573, 7
    %v1576 = vshll.u32 %v1426, 16
    %v1578 = vor.u32 %v1575, %v1576
    %v1579 = vsel %vm248, %v1571, %v1578
    %v1581 = vshrl.u32 %v1427, 16
    %v1583 = vrot.slane %v1581, 7
    %v1584 = vrot.slane %v1583, 4
    %v1586 = vshrl.u32 %v1428, 16
    %v1588 = vrot.slane %v1586, 7
    %v1589 = vshll.u32 %v1428, 16
    %v1591 = vor.u32 %v1588, %v1589
    %v1592 = vsel %vm248, %v1584, %v1591
    %v1594 = vshrl.u32 %v1429, 16
    %v1596 = vrot.slane %v1594, 7
    %v1597 = vrot.slane %v1596, 4
    %v1599 = vshrl.u32 %v1430, 16
    %v1601 = vrot.slane %v1599, 7
    %v1602 = vshll.u32 %v1430, 16
    %v1604 = vor.u32 %v1601, %v1602
    %v1605 = vsel %vm248, %v1597, %v1604
    %v1607 = vshrl.u32 %v1431, 16
    %v1609 = vrot.slane %v1607, 7
    %v1610 = vrot.slane %v1609, 4
    %v1612 = vshrl.u32 %v1432, 16
    %v1614 = vrot.slane %v1612, 7
    %v1615 = vshll.u32 %v1432, 16
    %v1617 = vor.u32 %v1614, %v1615
    %v1618 = vsel %vm248, %v1610, %v1617
    %v1620 = vshrl.u32 %v1433, 16
    %v1622 = vrot.slane %v1620, 7
    %v1623 = vrot.slane %v1622, 4
    %v1625 = vshrl.u32 %v1434, 16
    %v1627 = vrot.slane %v1625, 7
    %v1628 = vshll.u32 %v1434, 16
    %v1630 = vor.u32 %v1627, %v1628
    %v1631 = vsel %vm248, %v1623, %v1630
    %v1633 = vshrl.u32 %v1435, 16
    %v1635 = vrot.slane %v1633, 7
    %v1636 = vrot.slane %v1635, 4
    %v1638 = vshrl.u32 %v1436, 16
    %v1640 = vrot.slane %v1638, 7
    %v1641 = vshll.u32 %v1436, 16
    %v1643 = vor.u32 %v1640, %v1641
    %v1644 = vsel %vm248, %v1636, %v1643
    %1661 = vst [vmem:[#allocation4 + $0x18] sm:$0xf] %v1449
    %1662 = vst [vmem:[#allocation4 + $0x3c] sm:$0xf] %v1462
    %1663 = vst [vmem:[#allocation4 + $0x60] sm:$0xf] %v1475
    %1664 = vst [vmem:[#allocation4 + $0x84] sm:$0xf] %v1488
    %1665 = vst [vmem:[#allocation4 + $0xa8] sm:$0xf] %v1501
    %1666 = vst [vmem:[#allocation4 + $0xcc] sm:$0xf] %v1514
    %1667 = vst [vmem:[#allocation4 + $0xf0] sm:$0xf] %v1527
    %1668 = vst [vmem:[#allocation4 + $0x114] sm:$0xf] %v1540
    %1669 = vst [vmem:[#allocation4 + $0x138] sm:$0xf] %v1553
    %1670 = vst [vmem:[#allocation4 + $0x15c] sm:$0xf] %v1566
    %1671 = vst [vmem:[#allocation4 + $0x180] sm:$0xf] %v1579
    %1672 = vst [vmem:[#allocation4 + $0x1a4] sm:$0xf] %v1592
    %1673 = vst [vmem:[#allocation4 + $0x1c8] sm:$0xf] %v1605
    %1674 = vst [vmem:[#allocation4 + $0x1ec] sm:$0xf] %v1618
    %1675 = vst [vmem:[#allocation4 + $0x210] sm:$0xf] %v1631
    %1676 = vst [vmem:[#allocation4 + $0x234] sm:$0xf] %v1644
    %v1677 = vld [vmem:[%s1404 + $0x4] sm:$0xf]
    %v1678 = vld [vmem:[%s1404 + $0x10] sm:$0xf]
    %v1679 = vld [vmem:[%s1404 + $0x1c] sm:$0xf]
    %v1680 = vld [vmem:[%s1404 + $0x28] sm:$0xf]
    %v1681 = vld [vmem:[%s1404 + $0x34] sm:$0xf]
    %v1682 = vld [vmem:[%s1404 + $0x40] sm:$0xf]
    %v1683 = vld [vmem:[%s1404 + $0x4c] sm:$0xf]
    %v1684 = vld [vmem:[%s1404 + $0x58] sm:$0xf]
    %v1685 = vld [vmem:[%s1404 + $0x7c] sm:$0xf]
    %v1686 = vld [vmem:[%s1404 + $0x88] sm:$0xf]
    %v1687 = vld [vmem:[%s1404 + $0x94] sm:$0xf]
    %v1688 = vld [vmem:[%s1404 + $0xa0] sm:$0xf]
    %v1689 = vld [vmem:[%s1404 + $0xac] sm:$0xf]
    %v1690 = vld [vmem:[%s1404 + $0xb8] sm:$0xf]
    %v1691 = vld [vmem:[%s1404 + $0xc4] sm:$0xf]
    %v1692 = vld [vmem:[%s1404 + $0xd0] sm:$0xf]
    %1693 = vst [vmem:[#allocation4 + $0x1c] sm:$0xf] %v1677
    %1694 = vst [vmem:[#allocation4 + $0x40] sm:$0xf] %v1678
    %1695 = vst [vmem:[#allocation4 + $0x64] sm:$0xf] %v1679
    %1696 = vst [vmem:[#allocation4 + $0x88] sm:$0xf] %v1680
    %1697 = vst [vmem:[#allocation4 + $0xac] sm:$0xf] %v1681
    %1698 = vst [vmem:[#allocation4 + $0xd0] sm:$0xf] %v1682
    %1699 = vst [vmem:[#allocation4 + $0xf4] sm:$0xf] %v1683
    %1700 = vst [vmem:[#allocation4 + $0x118] sm:$0xf] %v1684
    %1701 = vst [vmem:[#allocation4 + $0x13c] sm:$0xf] %v1685
    %1702 = vst [vmem:[#allocation4 + $0x160] sm:$0xf] %v1686
    %1703 = vst [vmem:[#allocation4 + $0x184] sm:$0xf] %v1687
    %1704 = vst [vmem:[#allocation4 + $0x1a8] sm:$0xf] %v1688
    %1705 = vst [vmem:[#allocation4 + $0x1cc] sm:$0xf] %v1689
    %1706 = vst [vmem:[#allocation4 + $0x1f0] sm:$0xf] %v1690
    %1707 = vst [vmem:[#allocation4 + $0x214] sm:$0xf] %v1691
    %1708 = vst [vmem:[#allocation4 + $0x238] sm:$0xf] %v1692
    %v1709 = vld [vmem:[%s1404 + $0x4] sm:$0xf]
    %v1710 = vld [vmem:[%s1404 + $0x8] sm:$0x1]
    %v1711 = vld [vmem:[%s1404 + $0x10] sm:$0xf]
    %v1712 = vld [vmem:[%s1404 + $0x14] sm:$0x1]
    %v1713 = vld [vmem:[%s1404 + $0x1c] sm:$0xf]
    %v1714 = vld [vmem:[%s1404 + $0x20] sm:$0x1]
    %v1715 = vld [vmem:[%s1404 + $0x28] sm:$0xf]
    %v1716 = vld [vmem:[%s1404 + $0x2c] sm:$0x1]
    %v1717 = vld [vmem:[%s1404 + $0x34] sm:$0xf]
    %v1718 = vld [vmem:[%s1404 + $0x38] sm:$0x1]
    %v1719 = vld [vmem:[%s1404 + $0x40] sm:$0xf]
    %v1720 = vld [vmem:[%s1404 + $0x44] sm:$0x1]
    %v1721 = vld [vmem:[%s1404 + $0x4c] sm:$0xf]
    %v1722 = vld [vmem:[%s1404 + $0x50] sm:$0x1]
    %v1723 = vld [vmem:[%s1404 + $0x58] sm:$0xf]
    %v1724 = vld [vmem:[%s1404 + $0x5c] sm:$0x1]
    %v1725 = vld [vmem:[%s1404 + $0x7c] sm:$0xf]
    %v1726 = vld [vmem:[%s1404 + $0x80] sm:$0x1]
    %v1727 = vld [vmem:[%s1404 + $0x88] sm:$0xf]
    %v1728 = vld [vmem:[%s1404 + $0x8c] sm:$0x1]
    %v1729 = vld [vmem:[%s1404 + $0x94] sm:$0xf]
    %v1730 = vld [vmem:[%s1404 + $0x98] sm:$0x1]
    %v1731 = vld [vmem:[%s1404 + $0xa0] sm:$0xf]
    %v1732 = vld [vmem:[%s1404 + $0xa4] sm:$0x1]
    %v1733 = vld [vmem:[%s1404 + $0xac] sm:$0xf]
    %v1734 = vld [vmem:[%s1404 + $0xb0] sm:$0x1]
    %v1735 = vld [vmem:[%s1404 + $0xb8] sm:$0xf]
    %v1736 = vld [vmem:[%s1404 + $0xbc] sm:$0x1]
    %v1737 = vld [vmem:[%s1404 + $0xc4] sm:$0xf]
    %v1738 = vld [vmem:[%s1404 + $0xc8] sm:$0x1]
    %v1739 = vld [vmem:[%s1404 + $0xd0] sm:$0xf]
    %v1740 = vld [vmem:[%s1404 + $0xd4] sm:$0x1]
    %v1742 = vshrl.u32 %v1709, 16
    %v1744 = vrot.slane %v1742, 4
    %v1745 = vshll.u32 %v1709, 16
    %v1747 = vrot.slane %v1745, 5
    %v1748 = vor.u32 %v1744, %v1747
    %v1749 = vrot.slane %v1748, 4
    %v1751 = vshll.u32 %v1710, 16
    %v1753 = vrot.slane %v1751, 5
    %v1754 = vsel %vm555, %v1749, %v1753
    %v1756 = vshrl.u32 %v1711, 16
    %v1758 = vrot.slane %v1756, 4
    %v1759 = vshll.u32 %v1711, 16
    %v1761 = vrot.slane %v1759, 5
    %v1762 = vor.u32 %v1758, %v1761
    %v1763 = vrot.slane %v1762, 4
    %v1765 = vshll.u32 %v1712, 16
    %v1767 = vrot.slane %v1765, 5
    %v1768 = vsel %vm555, %v1763, %v1767
    %v1770 = vshrl.u32 %v1713, 16
    %v1772 = vrot.slane %v1770, 4
    %v1773 = vshll.u32 %v1713, 16
    %v1775 = vrot.slane %v1773, 5
    %v1776 = vor.u32 %v1772, %v1775
    %v1777 = vrot.slane %v1776, 4
    %v1779 = vshll.u32 %v1714, 16
    %v1781 = vrot.slane %v1779, 5
    %v1782 = vsel %vm555, %v1777, %v1781
    %v1784 = vshrl.u32 %v1715, 16
    %v1786 = vrot.slane %v1784, 4
    %v1787 = vshll.u32 %v1715, 16
    %v1789 = vrot.slane %v1787, 5
    %v1790 = vor.u32 %v1786, %v1789
    %v1791 = vrot.slane %v1790, 4
    %v1793 = vshll.u32 %v1716, 16
    %v1795 = vrot.slane %v1793, 5
    %v1796 = vsel %vm555, %v1791, %v1795
    %v1798 = vshrl.u32 %v1717, 16
    %v1800 = vrot.slane %v1798, 4
    %v1801 = vshll.u32 %v1717, 16
    %v1803 = vrot.slane %v1801, 5
    %v1804 = vor.u32 %v1800, %v1803
    %v1805 = vrot.slane %v1804, 4
    %v1807 = vshll.u32 %v1718, 16
    %v1809 = vrot.slane %v1807, 5
    %v1810 = vsel %vm555, %v1805, %v1809
    %v1812 = vshrl.u32 %v1719, 16
    %v1814 = vrot.slane %v1812, 4
    %v1815 = vshll.u32 %v1719, 16
    %v1817 = vrot.slane %v1815, 5
    %v1818 = vor.u32 %v1814, %v1817
    %v1819 = vrot.slane %v1818, 4
    %v1821 = vshll.u32 %v1720, 16
    %v1823 = vrot.slane %v1821, 5
    %v1824 = vsel %vm555, %v1819, %v1823
    %v1826 = vshrl.u32 %v1721, 16
    %v1828 = vrot.slane %v1826, 4
    %v1829 = vshll.u32 %v1721, 16
    %v1831 = vrot.slane %v1829, 5
    %v1832 = vor.u32 %v1828, %v1831
    %v1833 = vrot.slane %v1832, 4
    %v1835 = vshll.u32 %v1722, 16
    %v1837 = vrot.slane %v1835, 5
    %v1838 = vsel %vm555, %v1833, %v1837
    %v1840 = vshrl.u32 %v1723, 16
    %v1842 = vrot.slane %v1840, 4
    %v1843 = vshll.u32 %v1723, 16
    %v1845 = vrot.slane %v1843, 5
    %v1846 = vor.u32 %v1842, %v1845
    %v1847 = vrot.slane %v1846, 4
    %v1849 = vshll.u32 %v1724, 16
    %v1851 = vrot.slane %v1849, 5
    %v1852 = vsel %vm555, %v1847, %v1851
    %v1854 = vshrl.u32 %v1725, 16
    %v1856 = vrot.slane %v1854, 4
    %v1857 = vshll.u32 %v1725, 16
    %v1859 = vrot.slane %v1857, 5
    %v1860 = vor.u32 %v1856, %v1859
    %v1861 = vrot.slane %v1860, 4
    %v1863 = vshll.u32 %v1726, 16
    %v1865 = vrot.slane %v1863, 5
    %v1866 = vsel %vm555, %v1861, %v1865
    %v1868 = vshrl.u32 %v1727, 16
    %v1870 = vrot.slane %v1868, 4
    %v1871 = vshll.u32 %v1727, 16
    %v1873 = vrot.slane %v1871, 5
    %v1874 = vor.u32 %v1870, %v1873
    %v1875 = vrot.slane %v1874, 4
    %v1877 = vshll.u32 %v1728, 16
    %v1879 = vrot.slane %v1877, 5
    %v1880 = vsel %vm555, %v1875, %v1879
    %v1882 = vshrl.u32 %v1729, 16
    %v1884 = vrot.slane %v1882, 4
    %v1885 = vshll.u32 %v1729, 16
    %v1887 = vrot.slane %v1885, 5
    %v1888 = vor.u32 %v1884, %v1887
    %v1889 = vrot.slane %v1888, 4
    %v1891 = vshll.u32 %v1730, 16
    %v1893 = vrot.slane %v1891, 5
    %v1894 = vsel %vm555, %v1889, %v1893
    %v1896 = vshrl.u32 %v1731, 16
    %v1898 = vrot.slane %v1896, 4
    %v1899 = vshll.u32 %v1731, 16
    %v1901 = vrot.slane %v1899, 5
    %v1902 = vor.u32 %v1898, %v1901
    %v1903 = vrot.slane %v1902, 4
    %v1905 = vshll.u32 %v1732, 16
    %v1907 = vrot.slane %v1905, 5
    %v1908 = vsel %vm555, %v1903, %v1907
    %v1910 = vshrl.u32 %v1733, 16
    %v1912 = vrot.slane %v1910, 4
    %v1913 = vshll.u32 %v1733, 16
    %v1915 = vrot.slane %v1913, 5
    %v1916 = vor.u32 %v1912, %v1915
    %v1917 = vrot.slane %v1916, 4
    %v1919 = vshll.u32 %v1734, 16
    %v1921 = vrot.slane %v1919, 5
    %v1922 = vsel %vm555, %v1917, %v1921
    %v1924 = vshrl.u32 %v1735, 16
    %v1926 = vrot.slane %v1924, 4
    %v1927 = vshll.u32 %v1735, 16
    %v1929 = vrot.slane %v1927, 5
    %v1930 = vor.u32 %v1926, %v1929
    %v1931 = vrot.slane %v1930, 4
    %v1933 = vshll.u32 %v1736, 16
    %v1935 = vrot.slane %v1933, 5
    %v1936 = vsel %vm555, %v1931, %v1935
    %v1938 = vshrl.u32 %v1737, 16
    %v1940 = vrot.slane %v1938, 4
    %v1941 = vshll.u32 %v1737, 16
    %v1943 = vrot.slane %v1941, 5
    %v1944 = vor.u32 %v1940, %v1943
    %v1945 = vrot.slane %v1944, 4
    %v1947 = vshll.u32 %v1738, 16
    %v1949 = vrot.slane %v1947, 5
    %v1950 = vsel %vm555, %v1945, %v1949
    %v1952 = vshrl.u32 %v1739, 16
    %v1954 = vrot.slane %v1952, 4
    %v1955 = vshll.u32 %v1739, 16
    %v1957 = vrot.slane %v1955, 5
    %v1958 = vor.u32 %v1954, %v1957
    %v1959 = vrot.slane %v1958, 4
    %v1961 = vshll.u32 %v1740, 16
    %v1963 = vrot.slane %v1961, 5
    %v1964 = vsel %vm555, %v1959, %v1963
    %1981 = vst [vmem:[#allocation4 + $0x20] sm:$0xf] %v1754
    %1982 = vst [vmem:[#allocation4 + $0x44] sm:$0xf] %v1768
    %1983 = vst [vmem:[#allocation4 + $0x68] sm:$0xf] %v1782
    %1984 = vst [vmem:[#allocation4 + $0x8c] sm:$0xf] %v1796
    %1985 = vst [vmem:[#allocation4 + $0xb0] sm:$0xf] %v1810
    %1986 = vst [vmem:[#allocation4 + $0xd4] sm:$0xf] %v1824
    %1987 = vst [vmem:[#allocation4 + $0xf8] sm:$0xf] %v1838
    %1988 = vst [vmem:[#allocation4 + $0x11c] sm:$0xf] %v1852
    %1989 = vst [vmem:[#allocation4 + $0x140] sm:$0xf] %v1866
    %1990 = vst [vmem:[#allocation4 + $0x164] sm:$0xf] %v1880
    %1991 = vst [vmem:[#allocation4 + $0x188] sm:$0xf] %v1894
    %1992 = vst [vmem:[#allocation4 + $0x1ac] sm:$0xf] %v1908
    %1993 = vst [vmem:[#allocation4 + $0x1d0] sm:$0xf] %v1922
    %1994 = vst [vmem:[#allocation4 + $0x1f4] sm:$0xf] %v1936
    %1995 = vst [vmem:[#allocation4 + $0x218] sm:$0xf] %v1950
    %1996 = vst [vmem:[#allocation4 + $0x23c] sm:$0xf] %v1964
    %v1997 = vld [vmem:[#allocation4] sm:$0xff]
    %v1998 = vld [vmem:[#allocation4 + $0x8] sm:$0xff]
    %v1999 = vld [vmem:[#allocation4 + $0x10] sm:$0xff]
    %v2000 = vld [vmem:[#allocation4 + $0x18] sm:$0xff]
    %v2001 = vld [vmem:[#allocation4 + $0x20] sm:$0xf]
    %v2002 = vld [vmem:[#allocation4 + $0x24] sm:$0xff]
    %v2003 = vld [vmem:[#allocation4 + $0x2c] sm:$0xff]
    %v2004 = vld [vmem:[#allocation4 + $0x34] sm:$0xff]
    %v2005 = vld [vmem:[#allocation4 + $0x3c] sm:$0xff]
    %v2006 = vld [vmem:[#allocation4 + $0x44] sm:$0xf]
    %v2007 = vld [vmem:[#allocation4 + $0x48] sm:$0xff]
    %v2008 = vld [vmem:[#allocation4 + $0x50] sm:$0xff]
    %v2009 = vld [vmem:[#allocation4 + $0x58] sm:$0xff]
    %v2010 = vld [vmem:[#allocation4 + $0x60] sm:$0xff]
    %v2011 = vld [vmem:[#allocation4 + $0x68] sm:$0xf]
    %v2012 = vld [vmem:[#allocation4 + $0x6c] sm:$0xff]
    %v2013 = vld [vmem:[#allocation4 + $0x74] sm:$0xff]
    %v2014 = vld [vmem:[#allocation4 + $0x7c] sm:$0xff]
    %v2015 = vld [vmem:[#allocation4 + $0x84] sm:$0xff]
    %v2016 = vld [vmem:[#allocation4 + $0x8c] sm:$0xf]
    %v2017 = vld [vmem:[#allocation4 + $0x90] sm:$0xff]
    %v2018 = vld [vmem:[#allocation4 + $0x98] sm:$0xff]
    %v2019 = vld [vmem:[#allocation4 + $0xa0] sm:$0xff]
    %v2020 = vld [vmem:[#allocation4 + $0xa8] sm:$0xff]
    %v2021 = vld [vmem:[#allocation4 + $0xb0] sm:$0xf]
    %v2022 = vld [vmem:[#allocation4 + $0xb4] sm:$0xff]
    %v2023 = vld [vmem:[#allocation4 + $0xbc] sm:$0xff]
    %v2024 = vld [vmem:[#allocation4 + $0xc4] sm:$0xff]
    %v2025 = vld [vmem:[#allocation4 + $0xcc] sm:$0xff]
    %v2026 = vld [vmem:[#allocation4 + $0xd4] sm:$0xf]
    %v2027 = vld [vmem:[#allocation4 + $0xd8] sm:$0xff]
    %v2028 = vld [vmem:[#allocation4 + $0xe0] sm:$0xff]
    %v2029 = vld [vmem:[#allocation4 + $0xe8] sm:$0xff]
    %v2030 = vld [vmem:[#allocation4 + $0xf0] sm:$0xff]
    %v2031 = vld [vmem:[#allocation4 + $0xf8] sm:$0xf]
    %v2032 = vld [vmem:[#allocation4 + $0xfc] sm:$0xff]
    %v2033 = vld [vmem:[#allocation4 + $0x104] sm:$0xff]
    %v2034 = vld [vmem:[#allocation4 + $0x10c] sm:$0xff]
    %v2035 = vld [vmem:[#allocation4 + $0x114] sm:$0xff]
    %v2036 = vld [vmem:[#allocation4 + $0x11c] sm:$0xf]
    %v2037 = vld [vmem:[#allocation4 + $0x120] sm:$0xff]
    %v2038 = vld [vmem:[#allocation4 + $0x128] sm:$0xff]
    %v2039 = vld [vmem:[#allocation4 + $0x130] sm:$0xff]
    %v2040 = vld [vmem:[#allocation4 + $0x138] sm:$0xff]
    %v2041 = vld [vmem:[#allocation4 + $0x140] sm:$0xf]
    %v2042 = vld [vmem:[#allocation4 + $0x144] sm:$0xff]
    %v2043 = vld [vmem:[#allocation4 + $0x14c] sm:$0xff]
    %v2044 = vld [vmem:[#allocation4 + $0x154] sm:$0xff]
    %v2045 = vld [vmem:[#allocation4 + $0x15c] sm:$0xff]
    %v2046 = vld [vmem:[#allocation4 + $0x164] sm:$0xf]
    %v2047 = vld [vmem:[#allocation4 + $0x168] sm:$0xff]
    %v2048 = vld [vmem:[#allocation4 + $0x170] sm:$0xff]
    %v2049 = vld [vmem:[#allocation4 + $0x178] sm:$0xff]
    %v2050 = vld [vmem:[#allocation4 + $0x180] sm:$0xff]
    %v2051 = vld [vmem:[#allocation4 + $0x188] sm:$0xf]
    %v2052 = vld [vmem:[#allocation4 + $0x18c] sm:$0xff]
    %v2053 = vld [vmem:[#allocation4 + $0x194] sm:$0xff]
    %v2054 = vld [vmem:[#allocation4 + $0x19c] sm:$0xff]
    %v2055 = vld [vmem:[#allocation4 + $0x1a4] sm:$0xff]
    %v2056 = vld [vmem:[#allocation4 + $0x1ac] sm:$0xf]
    %v2057 = vld [vmem:[#allocation4 + $0x1b0] sm:$0xff]
    %v2058 = vld [vmem:[#allocation4 + $0x1b8] sm:$0xff]
    %v2059 = vld [vmem:[#allocation4 + $0x1c0] sm:$0xff]
    %v2060 = vld [vmem:[#allocation4 + $0x1c8] sm:$0xff]
    %v2061 = vld [vmem:[#allocation4 + $0x1d0] sm:$0xf]
    %v2062 = vld [vmem:[#allocation4 + $0x1d4] sm:$0xff]
    %v2063 = vld [vmem:[#allocation4 + $0x1dc] sm:$0xff]
    %v2064 = vld [vmem:[#allocation4 + $0x1e4] sm:$0xff]
    %v2065 = vld [vmem:[#allocation4 + $0x1ec] sm:$0xff]
    %v2066 = vld [vmem:[#allocation4 + $0x1f4] sm:$0xf]
    %v2067 = vld [vmem:[#allocation4 + $0x1f8] sm:$0xff]
    %v2068 = vld [vmem:[#allocation4 + $0x200] sm:$0xff]
    %v2069 = vld [vmem:[#allocation4 + $0x208] sm:$0xff]
    %v2070 = vld [vmem:[#allocation4 + $0x210] sm:$0xff]
    %v2071 = vld [vmem:[#allocation4 + $0x218] sm:$0xf]
    %v2072 = vld [vmem:[#allocation4 + $0x21c] sm:$0xff]
    %v2073 = vld [vmem:[#allocation4 + $0x224] sm:$0xff]
    %v2074 = vld [vmem:[#allocation4 + $0x22c] sm:$0xff]
    %v2075 = vld [vmem:[#allocation4 + $0x234] sm:$0xff]
    %v2076 = vld [vmem:[#allocation4 + $0x23c] sm:$0xf]
    %v2077 = vld [vmem:[#allocation8] sm:$0xf]
    %v2078 = vld [vmem:[#allocation8 + $0x4] sm:$0xf]
    %v2079 = vld [vmem:[#allocation8 + $0x8] sm:$0xf]
    %v2080 = vld [vmem:[#allocation8 + $0xc] sm:$0xf]
    %v2081 = vld [vmem:[#allocation8 + $0x10] sm:$0xf]
    %v2082 = vld [vmem:[#allocation8 + $0x14] sm:$0xf]
    %v2083 = vld [vmem:[#allocation8 + $0x18] sm:$0xf]
    %v2084 = vld [vmem:[#allocation8 + $0x1c] sm:$0xf]
    %v2085 = vld [vmem:[#allocation8 + $0x20] sm:$0xf]
    %v2086 = vld [vmem:[#allocation8 + $0x24] sm:$0xf]
    %v2087 = vld [vmem:[#allocation8 + $0x28] sm:$0xf]
    %v2088 = vld [vmem:[#allocation8 + $0x2c] sm:$0xf]
    %v2089 = vld [vmem:[#allocation8 + $0x30] sm:$0xf]
    %v2090 = vld [vmem:[#allocation8 + $0x34] sm:$0xf]
    %v2091 = vld [vmem:[#allocation8 + $0x38] sm:$0xf]
    %v2092 = vld [vmem:[#allocation8 + $0x3c] sm:$0xf]
    %v2093 = vld [vmem:[#allocation8 + $0x40] sm:$0xf]
    %v2094 = vld [vmem:[#allocation8 + $0x44] sm:$0xf]
    %v2095 = vld [vmem:[#allocation8 + $0x48] sm:$0xf]
    %v2096 = vld [vmem:[#allocation8 + $0x4c] sm:$0xf]
    %v2097 = vld [vmem:[#allocation8 + $0x50] sm:$0xf]
    %v2098 = vld [vmem:[#allocation8 + $0x54] sm:$0xf]
    %v2099 = vld [vmem:[#allocation8 + $0x58] sm:$0xf]
    %v2100 = vld [vmem:[#allocation8 + $0x5c] sm:$0xf]
    %v2101 = vld [vmem:[#allocation8 + $0x60] sm:$0xf]
    %v2102 = vld [vmem:[#allocation8 + $0x64] sm:$0xf]
    %v2103 = vld [vmem:[#allocation8 + $0x68] sm:$0xf]
    %v2104 = vld [vmem:[#allocation8 + $0x6c] sm:$0xf]
    %v2105 = vld [vmem:[#allocation8 + $0x70] sm:$0xf]
    %v2106 = vld [vmem:[#allocation8 + $0x74] sm:$0xf]
    %v2107 = vld [vmem:[#allocation8 + $0x78] sm:$0xf]
    %v2108 = vld [vmem:[#allocation8 + $0x7c] sm:$0xf]
    %v2109 = vld [vmem:[#allocation8 + $0x80] sm:$0xf]
    %v2110 = vld [vmem:[#allocation8 + $0x84] sm:$0xf]
    %v2111 = vld [vmem:[#allocation8 + $0x88] sm:$0xf]
    %v2112 = vld [vmem:[#allocation8 + $0x8c] sm:$0xf]
    %v2113 = vld [vmem:[#allocation8 + $0x90] sm:$0xf]
    %v2114 = vld [vmem:[#allocation8 + $0x94] sm:$0xf]
    %v2115 = vld [vmem:[#allocation8 + $0x98] sm:$0xf]
    %v2116 = vld [vmem:[#allocation8 + $0x9c] sm:$0xf]
    %v2117 = vld [vmem:[#allocation8 + $0xa0] sm:$0xf]
    %v2118 = vld [vmem:[#allocation8 + $0xa4] sm:$0xf]
    %v2119 = vld [vmem:[#allocation8 + $0xa8] sm:$0xf]
    %v2120 = vld [vmem:[#allocation8 + $0xac] sm:$0xf]
    %v2121 = vld [vmem:[#allocation8 + $0xb0] sm:$0xf]
    %v2122 = vld [vmem:[#allocation8 + $0xb4] sm:$0xf]
    %v2123 = vld [vmem:[#allocation8 + $0xb8] sm:$0xf]
    %v2124 = vld [vmem:[#allocation8 + $0xbc] sm:$0xf]
    %v2125 = vld [vmem:[#allocation8 + $0xc0] sm:$0xf]
    %v2126 = vld [vmem:[#allocation8 + $0xc4] sm:$0xf]
    %v2127 = vld [vmem:[#allocation8 + $0xc8] sm:$0xf]
    %v2128 = vld [vmem:[#allocation8 + $0xcc] sm:$0xf]
    %v2129 = vld [vmem:[#allocation8 + $0xd0] sm:$0xf]
    %v2130 = vld [vmem:[#allocation8 + $0xd4] sm:$0xf]
    %v2131 = vld [vmem:[#allocation8 + $0xd8] sm:$0xf]
    %v2132 = vld [vmem:[#allocation8 + $0xdc] sm:$0xf]
    %v2133 = vld [vmem:[#allocation8 + $0xe0] sm:$0xf]
    %v2134 = vld [vmem:[#allocation8 + $0xe4] sm:$0xf]
    %v2135 = vld [vmem:[#allocation8 + $0xe8] sm:$0xf]
    %v2136 = vld [vmem:[#allocation8 + $0xec] sm:$0xf]
    %v2137 = vld [vmem:[#allocation8 + $0xf0] sm:$0xf]
    %v2138 = vld [vmem:[#allocation8 + $0xf4] sm:$0xf]
    %v2139 = vld [vmem:[#allocation8 + $0xf8] sm:$0xf]
    %v2140 = vld [vmem:[#allocation8 + $0xfc] sm:$0xf]
    %v2141 = vld [vmem:[#allocation8 + $0x100] sm:$0xf]
    %v2142 = vld [vmem:[#allocation8 + $0x104] sm:$0xf]
    %v2143 = vld [vmem:[#allocation8 + $0x108] sm:$0xf]
    %v2144 = vld [vmem:[#allocation8 + $0x10c] sm:$0xf]
    %v2145 = vld [vmem:[#allocation8 + $0x110] sm:$0xf]
    %v2146 = vld [vmem:[#allocation8 + $0x114] sm:$0xf]
    %v2147 = vld [vmem:[#allocation8 + $0x118] sm:$0xf]
    %v2148 = vld [vmem:[#allocation8 + $0x11c] sm:$0xf]
    %v2149 = vld [vmem:[#allocation8 + $0x120] sm:$0xf]
    %v2150 = vld [vmem:[#allocation8 + $0x124] sm:$0xf]
    %v2151 = vld [vmem:[#allocation8 + $0x128] sm:$0xf]
    %v2152 = vld [vmem:[#allocation8 + $0x12c] sm:$0xf]
    %v2153 = vld [vmem:[#allocation8 + $0x130] sm:$0xf]
    %v2154 = vld [vmem:[#allocation8 + $0x134] sm:$0xf]
    %v2155 = vld [vmem:[#allocation8 + $0x138] sm:$0xf]
    %v2156 = vld [vmem:[#allocation8 + $0x13c] sm:$0xf]
    %v2157 = vld [vmem:[#allocation8 + $0x140] sm:$0xf]
    %v2158 = vld [vmem:[#allocation8 + $0x144] sm:$0xf]
    %v2159 = vld [vmem:[#allocation8 + $0x148] sm:$0xf]
    %v2160 = vld [vmem:[#allocation8 + $0x14c] sm:$0xf]
    %v2161 = vld [vmem:[#allocation8 + $0x150] sm:$0xf]
    %v2162 = vld [vmem:[#allocation8 + $0x154] sm:$0xf]
    %v2163 = vld [vmem:[#allocation8 + $0x158] sm:$0xf]
    %v2164 = vld [vmem:[#allocation8 + $0x15c] sm:$0xf]
    %v2165 = vld [vmem:[#allocation8 + $0x160] sm:$0xf]
    %v2166 = vld [vmem:[#allocation8 + $0x164] sm:$0xf]
    %v2167 = vld [vmem:[#allocation8 + $0x168] sm:$0xf]
    %v2168 = vld [vmem:[#allocation8 + $0x16c] sm:$0xf]
    %v2169 = vld [vmem:[#allocation8 + $0x170] sm:$0xf]
    %v2170 = vld [vmem:[#allocation8 + $0x174] sm:$0xf]
    %v2171 = vld [vmem:[#allocation8 + $0x178] sm:$0xf]
    %v2172 = vld [vmem:[#allocation8 + $0x17c] sm:$0xf]
    %v2173 = vld [vmem:[#allocation8 + $0x180] sm:$0xf]
    %v2174 = vld [vmem:[#allocation8 + $0x184] sm:$0xf]
    %v2175 = vld [vmem:[#allocation8 + $0x188] sm:$0xf]
    %v2176 = vld [vmem:[#allocation8 + $0x18c] sm:$0xf]
    %v2177 = vld [vmem:[#allocation8 + $0x190] sm:$0xf]
    %v2178 = vld [vmem:[#allocation8 + $0x194] sm:$0xf]
    %v2179 = vld [vmem:[#allocation8 + $0x198] sm:$0xf]
    %v2180 = vld [vmem:[#allocation8 + $0x19c] sm:$0xf]
    %v2181 = vld [vmem:[#allocation8 + $0x1a0] sm:$0xf]
    %v2182 = vld [vmem:[#allocation8 + $0x1a4] sm:$0xf]
    %v2183 = vld [vmem:[#allocation8 + $0x1a8] sm:$0xf]
    %v2184 = vld [vmem:[#allocation8 + $0x1ac] sm:$0xf]
    %v2185 = vld [vmem:[#allocation8 + $0x1b0] sm:$0xf]
    %v2186 = vld [vmem:[#allocation8 + $0x1b4] sm:$0xf]
    %v2187 = vld [vmem:[#allocation8 + $0x1b8] sm:$0xf]
    %v2188 = vld [vmem:[#allocation8 + $0x1bc] sm:$0xf]
    %v2189 = vld [vmem:[#allocation8 + $0x1c0] sm:$0xf]
    %v2190 = vld [vmem:[#allocation8 + $0x1c4] sm:$0xf]
    %v2191 = vld [vmem:[#allocation8 + $0x1c8] sm:$0xf]
    %v2192 = vld [vmem:[#allocation8 + $0x1cc] sm:$0xf]
    %v2193 = vld [vmem:[#allocation8 + $0x1d0] sm:$0xf]
    %v2194 = vld [vmem:[#allocation8 + $0x1d4] sm:$0xf]
    %v2195 = vld [vmem:[#allocation8 + $0x1d8] sm:$0xf]
    %v2196 = vld [vmem:[#allocation8 + $0x1dc] sm:$0xf]
    %v2197 = vld [vmem:[#allocation8 + $0x1e0] sm:$0xf]
    %v2198 = vld [vmem:[#allocation8 + $0x1e4] sm:$0xf]
    %v2199 = vld [vmem:[#allocation8 + $0x1e8] sm:$0xf]
    %v2200 = vld [vmem:[#allocation8 + $0x1ec] sm:$0xf]
    %v2201 = vld [vmem:[#allocation8 + $0x1f0] sm:$0xf]
    %v2202 = vld [vmem:[#allocation8 + $0x1f4] sm:$0xf]
    %v2203 = vld [vmem:[#allocation8 + $0x1f8] sm:$0xf]
    %v2204 = vld [vmem:[#allocation8 + $0x1fc] sm:$0xf]
    %v2205 = vld [vmem:[#allocation8 + $0x200] sm:$0xf]
    %v2206 = vld [vmem:[#allocation8 + $0x204] sm:$0xf]
    %v2207 = vld [vmem:[#allocation8 + $0x208] sm:$0xf]
    %v2208 = vld [vmem:[#allocation8 + $0x20c] sm:$0xf]
    %v2209 = vld [vmem:[#allocation8 + $0x210] sm:$0xf]
    %v2210 = vld [vmem:[#allocation8 + $0x214] sm:$0xf]
    %v2211 = vld [vmem:[#allocation8 + $0x218] sm:$0xf]
    %v2212 = vld [vmem:[#allocation8 + $0x21c] sm:$0xf]
    %v2213 = vld [vmem:[#allocation8 + $0x220] sm:$0xf]
    %v2214 = vld [vmem:[#allocation8 + $0x224] sm:$0xf]
    %v2215 = vld [vmem:[#allocation8 + $0x228] sm:$0xf]
    %v2216 = vld [vmem:[#allocation8 + $0x22c] sm:$0xf]
    %v2217 = vld [vmem:[#allocation8 + $0x230] sm:$0xf]
    %v2218 = vld [vmem:[#allocation8 + $0x234] sm:$0xf]
    %v2219 = vld [vmem:[#allocation8 + $0x238] sm:$0xf]
    %v2220 = vld [vmem:[#allocation8 + $0x23c] sm:$0xf]
    %v2301 = vunpack.c.l.b16 %v1997
    %v2302 = vunpack.c.h.b16 %v1997
    %v2303 = vunpack.c.l.b16 %v1998
    %v2304 = vunpack.c.h.b16 %v1998
    %v2305 = vunpack.c.l.b16 %v1999
    %v2306 = vunpack.c.h.b16 %v1999
    %v2307 = vunpack.c.l.b16 %v2000
    %v2308 = vunpack.c.h.b16 %v2000
    %v2309 = vunpack.c.l.b16 %v2001
    %v2310 = vunpack.c.l.b16 %v2002
    %v2311 = vunpack.c.h.b16 %v2002
    %v2312 = vunpack.c.l.b16 %v2003
    %v2313 = vunpack.c.h.b16 %v2003
    %v2314 = vunpack.c.l.b16 %v2004
    %v2315 = vunpack.c.h.b16 %v2004
    %v2316 = vunpack.c.l.b16 %v2005
    %v2317 = vunpack.c.h.b16 %v2005
    %v2318 = vunpack.c.l.b16 %v2006
    %v2319 = vunpack.c.l.b16 %v2007
    %v2320 = vunpack.c.h.b16 %v2007
    %v2321 = vunpack.c.l.b16 %v2008
    %v2322 = vunpack.c.h.b16 %v2008
    %v2323 = vunpack.c.l.b16 %v2009
    %v2324 = vunpack.c.h.b16 %v2009
    %v2325 = vunpack.c.l.b16 %v2010
    %v2326 = vunpack.c.h.b16 %v2010
    %v2327 = vunpack.c.l.b16 %v2011
    %v2328 = vunpack.c.l.b16 %v2012
    %v2329 = vunpack.c.h.b16 %v2012
    %v2330 = vunpack.c.l.b16 %v2013
    %v2331 = vunpack.c.h.b16 %v2013
    %v2332 = vunpack.c.l.b16 %v2014
    %v2333 = vunpack.c.h.b16 %v2014
    %v2334 = vunpack.c.l.b16 %v2015
    %v2335 = vunpack.c.h.b16 %v2015
    %v2336 = vunpack.c.l.b16 %v2016
    %v2337 = vunpack.c.l.b16 %v2017
    %v2338 = vunpack.c.h.b16 %v2017
    %v2339 = vunpack.c.l.b16 %v2018
    %v2340 = vunpack.c.h.b16 %v2018
    %v2341 = vunpack.c.l.b16 %v2019
    %v2342 = vunpack.c.h.b16 %v2019
    %v2343 = vunpack.c.l.b16 %v2020
    %v2344 = vunpack.c.h.b16 %v2020
    %v2345 = vunpack.c.l.b16 %v2021
    %v2346 = vunpack.c.l.b16 %v2022
    %v2347 = vunpack.c.h.b16 %v2022
    %v2348 = vunpack.c.l.b16 %v2023
    %v2349 = vunpack.c.h.b16 %v2023
    %v2350 = vunpack.c.l.b16 %v2024
    %v2351 = vunpack.c.h.b16 %v2024
    %v2352 = vunpack.c.l.b16 %v2025
    %v2353 = vunpack.c.h.b16 %v2025
    %v2354 = vunpack.c.l.b16 %v2026
    %v2355 = vunpack.c.l.b16 %v2027
    %v2356 = vunpack.c.h.b16 %v2027
    %v2357 = vunpack.c.l.b16 %v2028
    %v2358 = vunpack.c.h.b16 %v2028
    %v2359 = vunpack.c.l.b16 %v2029
    %v2360 = vunpack.c.h.b16 %v2029
    %v2361 = vunpack.c.l.b16 %v2030
    %v2362 = vunpack.c.h.b16 %v2030
    %v2363 = vunpack.c.l.b16 %v2031
    %v2364 = vunpack.c.l.b16 %v2032
    %v2365 = vunpack.c.h.b16 %v2032
    %v2366 = vunpack.c.l.b16 %v2033
    %v2367 = vunpack.c.h.b16 %v2033
    %v2368 = vunpack.c.l.b16 %v2034
    %v2369 = vunpack.c.h.b16 %v2034
    %v2370 = vunpack.c.l.b16 %v2035
    %v2371 = vunpack.c.h.b16 %v2035
    %v2372 = vunpack.c.l.b16 %v2036
    %v2373 = vunpack.c.l.b16 %v2037
    %v2374 = vunpack.c.h.b16 %v2037
    %v2375 = vunpack.c.l.b16 %v2038
    %v2376 = vunpack.c.h.b16 %v2038
    %v2377 = vunpack.c.l.b16 %v2039
    %v2378 = vunpack.c.h.b16 %v2039
    %v2379 = vunpack.c.l.b16 %v2040
    %v2380 = vunpack.c.h.b16 %v2040
    %v2381 = vunpack.c.l.b16 %v2041
    %v2382 = vunpack.c.l.b16 %v2042
    %v2383 = vunpack.c.h.b16 %v2042
    %v2384 = vunpack.c.l.b16 %v2043
    %v2385 = vunpack.c.h.b16 %v2043
    %v2386 = vunpack.c.l.b16 %v2044
    %v2387 = vunpack.c.h.b16 %v2044
    %v2388 = vunpack.c.l.b16 %v2045
    %v2389 = vunpack.c.h.b16 %v2045
    %v2390 = vunpack.c.l.b16 %v2046
    %v2391 = vunpack.c.l.b16 %v2047
    %v2392 = vunpack.c.h.b16 %v2047
    %v2393 = vunpack.c.l.b16 %v2048
    %v2394 = vunpack.c.h.b16 %v2048
    %v2395 = vunpack.c.l.b16 %v2049
    %v2396 = vunpack.c.h.b16 %v2049
    %v2397 = vunpack.c.l.b16 %v2050
    %v2398 = vunpack.c.h.b16 %v2050
    %v2399 = vunpack.c.l.b16 %v2051
    %v2400 = vunpack.c.l.b16 %v2052
    %v2401 = vunpack.c.h.b16 %v2052
    %v2402 = vunpack.c.l.b16 %v2053
    %v2403 = vunpack.c.h.b16 %v2053
    %v2404 = vunpack.c.l.b16 %v2054
    %v2405 = vunpack.c.h.b16 %v2054
    %v2406 = vunpack.c.l.b16 %v2055
    %v2407 = vunpack.c.h.b16 %v2055
    %v2408 = vunpack.c.l.b16 %v2056
    %v2409 = vunpack.c.l.b16 %v2057
    %v2410 = vunpack.c.h.b16 %v2057
    %v2411 = vunpack.c.l.b16 %v2058
    %v2412 = vunpack.c.h.b16 %v2058
    %v2413 = vunpack.c.l.b16 %v2059
    %v2414 = vunpack.c.h.b16 %v2059
    %v2415 = vunpack.c.l.b16 %v2060
    %v2416 = vunpack.c.h.b16 %v2060
    %v2417 = vunpack.c.l.b16 %v2061
    %v2418 = vunpack.c.l.b16 %v2062
    %v2419 = vunpack.c.h.b16 %v2062
    %v2420 = vunpack.c.l.b16 %v2063
    %v2421 = vunpack.c.h.b16 %v2063
    %v2422 = vunpack.c.l.b16 %v2064
    %v2423 = vunpack.c.h.b16 %v2064
    %v2424 = vunpack.c.l.b16 %v2065
    %v2425 = vunpack.c.h.b16 %v2065
    %v2426 = vunpack.c.l.b16 %v2066
    %v2427 = vunpack.c.l.b16 %v2067
    %v2428 = vunpack.c.h.b16 %v2067
    %v2429 = vunpack.c.l.b16 %v2068
    %v2430 = vunpack.c.h.b16 %v2068
    %v2431 = vunpack.c.l.b16 %v2069
    %v2432 = vunpack.c.h.b16 %v2069
    %v2433 = vunpack.c.l.b16 %v2070
    %v2434 = vunpack.c.h.b16 %v2070
    %v2435 = vunpack.c.l.b16 %v2071
    %v2436 = vunpack.c.l.b16 %v2072
    %v2437 = vunpack.c.h.b16 %v2072
    %v2438 = vunpack.c.l.b16 %v2073
    %v2439 = vunpack.c.h.b16 %v2073
    %v2440 = vunpack.c.l.b16 %v2074
    %v2441 = vunpack.c.h.b16 %v2074
    %v2442 = vunpack.c.l.b16 %v2075
    %v2443 = vunpack.c.h.b16 %v2075
    %v2444 = vunpack.c.l.b16 %v2076
    %v2445 = vpack.c.b16 %v2310, %v2301
    %v2446 = vpack.c.b16 %v2311, %v2302
    %v2447 = vpack.c.b16 %v2312, %v2303
    %v2448 = vpack.c.b16 %v2313, %v2304
    %v2449 = vpack.c.b16 %v2314, %v2305
    %v2450 = vpack.c.b16 %v2315, %v2306
    %v2451 = vpack.c.b16 %v2316, %v2307
    %v2452 = vpack.c.b16 %v2317, %v2308
    %v2453 = vpack.c.b16 %v2318, %v2309
    %v2454 = vpack.c.b16 %v2328, %v2319
    %v2455 = vpack.c.b16 %v2329, %v2320
    %v2456 = vpack.c.b16 %v2330, %v2321
    %v2457 = vpack.c.b16 %v2331, %v2322
    %v2458 = vpack.c.b16 %v2332, %v2323
    %v2459 = vpack.c.b16 %v2333, %v2324
    %v2460 = vpack.c.b16 %v2334, %v2325
    %v2461 = vpack.c.b16 %v2335, %v2326
    %v2462 = vpack.c.b16 %v2336, %v2327
    %v2463 = vpack.c.b16 %v2346, %v2337
    %v2464 = vpack.c.b16 %v2347, %v2338
    %v2465 = vpack.c.b16 %v2348, %v2339
    %v2466 = vpack.c.b16 %v2349, %v2340
    %v2467 = vpack.c.b16 %v2350, %v2341
    %v2468 = vpack.c.b16 %v2351, %v2342
    %v2469 = vpack.c.b16 %v2352, %v2343
    %v2470 = vpack.c.b16 %v2353, %v2344
    %v2471 = vpack.c.b16 %v2354, %v2345
    %v2472 = vpack.c.b16 %v2364, %v2355
    %v2473 = vpack.c.b16 %v2365, %v2356
    %v2474 = vpack.c.b16 %v2366, %v2357
    %v2475 = vpack.c.b16 %v2367, %v2358
    %v2476 = vpack.c.b16 %v2368, %v2359
    %v2477 = vpack.c.b16 %v2369, %v2360
    %v2478 = vpack.c.b16 %v2370, %v2361
    %v2479 = vpack.c.b16 %v2371, %v2362
    %v2480 = vpack.c.b16 %v2372, %v2363
    %v2481 = vpack.c.b16 %v2382, %v2373
    %v2482 = vpack.c.b16 %v2383, %v2374
    %v2483 = vpack.c.b16 %v2384, %v2375
    %v2484 = vpack.c.b16 %v2385, %v2376
    %v2485 = vpack.c.b16 %v2386, %v2377
    %v2486 = vpack.c.b16 %v2387, %v2378
    %v2487 = vpack.c.b16 %v2388, %v2379
    %v2488 = vpack.c.b16 %v2389, %v2380
    %v2489 = vpack.c.b16 %v2390, %v2381
    %v2490 = vpack.c.b16 %v2400, %v2391
    %v2491 = vpack.c.b16 %v2401, %v2392
    %v2492 = vpack.c.b16 %v2402, %v2393
    %v2493 = vpack.c.b16 %v2403, %v2394
    %v2494 = vpack.c.b16 %v2404, %v2395
    %v2495 = vpack.c.b16 %v2405, %v2396
    %v2496 = vpack.c.b16 %v2406, %v2397
    %v2497 = vpack.c.b16 %v2407, %v2398
    %v2498 = vpack.c.b16 %v2408, %v2399
    %v2499 = vpack.c.b16 %v2418, %v2409
    %v2500 = vpack.c.b16 %v2419, %v2410
    %v2501 = vpack.c.b16 %v2420, %v2411
    %v2502 = vpack.c.b16 %v2421, %v2412
    %v2503 = vpack.c.b16 %v2422, %v2413
    %v2504 = vpack.c.b16 %v2423, %v2414
    %v2505 = vpack.c.b16 %v2424, %v2415
    %v2506 = vpack.c.b16 %v2425, %v2416
    %v2507 = vpack.c.b16 %v2426, %v2417
    %v2508 = vpack.c.b16 %v2436, %v2427
    %v2509 = vpack.c.b16 %v2437, %v2428
    %v2510 = vpack.c.b16 %v2438, %v2429
    %v2511 = vpack.c.b16 %v2439, %v2430
    %v2512 = vpack.c.b16 %v2440, %v2431
    %v2513 = vpack.c.b16 %v2441, %v2432
    %v2514 = vpack.c.b16 %v2442, %v2433
    %v2515 = vpack.c.b16 %v2443, %v2434
    %v2516 = vpack.c.b16 %v2444, %v2435
    %v2733 = vunpack.c.l.b16 %v2077
    %v2734 = vunpack.c.l.b16 %v2078
    %v2735 = vunpack.c.l.b16 %v2079
    %v2736 = vunpack.c.l.b16 %v2080
    %v2737 = vunpack.c.l.b16 %v2081
    %v2738 = vunpack.c.l.b16 %v2082
    %v2739 = vunpack.c.l.b16 %v2083
    %v2740 = vunpack.c.l.b16 %v2084
    %v2741 = vunpack.c.l.b16 %v2085
    %v2742 = vunpack.c.l.b16 %v2086
    %v2743 = vunpack.c.l.b16 %v2087
    %v2744 = vunpack.c.l.b16 %v2088
    %v2745 = vunpack.c.l.b16 %v2089
    %v2746 = vunpack.c.l.b16 %v2090
    %v2747 = vunpack.c.l.b16 %v2091
    %v2748 = vunpack.c.l.b16 %v2092
    %v2749 = vunpack.c.l.b16 %v2093
    %v2750 = vunpack.c.l.b16 %v2094
    %v2751 = vunpack.c.l.b16 %v2095
    %v2752 = vunpack.c.l.b16 %v2096
    %v2753 = vunpack.c.l.b16 %v2097
    %v2754 = vunpack.c.l.b16 %v2098
    %v2755 = vunpack.c.l.b16 %v2099
    %v2756 = vunpack.c.l.b16 %v2100
    %v2757 = vunpack.c.l.b16 %v2101
    %v2758 = vunpack.c.l.b16 %v2102
    %v2759 = vunpack.c.l.b16 %v2103
    %v2760 = vunpack.c.l.b16 %v2104
    %v2761 = vunpack.c.l.b16 %v2105
    %v2762 = vunpack.c.l.b16 %v2106
    %v2763 = vunpack.c.l.b16 %v2107
    %v2764 = vunpack.c.l.b16 %v2108
    %v2765 = vunpack.c.l.b16 %v2109
    %v2766 = vunpack.c.l.b16 %v2110
    %v2767 = vunpack.c.l.b16 %v2111
    %v2768 = vunpack.c.l.b16 %v2112
    %v2769 = vunpack.c.l.b16 %v2113
    %v2770 = vunpack.c.l.b16 %v2114
    %v2771 = vunpack.c.l.b16 %v2115
    %v2772 = vunpack.c.l.b16 %v2116
    %v2773 = vunpack.c.l.b16 %v2117
    %v2774 = vunpack.c.l.b16 %v2118
    %v2775 = vunpack.c.l.b16 %v2119
    %v2776 = vunpack.c.l.b16 %v2120
    %v2777 = vunpack.c.l.b16 %v2121
    %v2778 = vunpack.c.l.b16 %v2122
    %v2779 = vunpack.c.l.b16 %v2123
    %v2780 = vunpack.c.l.b16 %v2124
    %v2781 = vunpack.c.l.b16 %v2125
    %v2782 = vunpack.c.l.b16 %v2126
    %v2783 = vunpack.c.l.b16 %v2127
    %v2784 = vunpack.c.l.b16 %v2128
    %v2785 = vunpack.c.l.b16 %v2129
    %v2786 = vunpack.c.l.b16 %v2130
    %v2787 = vunpack.c.l.b16 %v2131
    %v2788 = vunpack.c.l.b16 %v2132
    %v2789 = vunpack.c.l.b16 %v2133
    %v2790 = vunpack.c.l.b16 %v2134
    %v2791 = vunpack.c.l.b16 %v2135
    %v2792 = vunpack.c.l.b16 %v2136
    %v2793 = vunpack.c.l.b16 %v2137
    %v2794 = vunpack.c.l.b16 %v2138
    %v2795 = vunpack.c.l.b16 %v2139
    %v2796 = vunpack.c.l.b16 %v2140
    %v2797 = vunpack.c.l.b16 %v2141
    %v2798 = vunpack.c.l.b16 %v2142
    %v2799 = vunpack.c.l.b16 %v2143
    %v2800 = vunpack.c.l.b16 %v2144
    %v2801 = vunpack.c.l.b16 %v2145
    %v2802 = vunpack.c.l.b16 %v2146
    %v2803 = vunpack.c.l.b16 %v2147
    %v2804 = vunpack.c.l.b16 %v2148
    %v2805 = vunpack.c.l.b16 %v2149
    %v2806 = vunpack.c.l.b16 %v2150
    %v2807 = vunpack.c.l.b16 %v2151
    %v2808 = vunpack.c.l.b16 %v2152
    %v2809 = vunpack.c.l.b16 %v2153
    %v2810 = vunpack.c.l.b16 %v2154
    %v2811 = vunpack.c.l.b16 %v2155
    %v2812 = vunpack.c.l.b16 %v2156
    %v2813 = vunpack.c.l.b16 %v2157
    %v2814 = vunpack.c.l.b16 %v2158
    %v2815 = vunpack.c.l.b16 %v2159
    %v2816 = vunpack.c.l.b16 %v2160
    %v2817 = vunpack.c.l.b16 %v2161
    %v2818 = vunpack.c.l.b16 %v2162
    %v2819 = vunpack.c.l.b16 %v2163
    %v2820 = vunpack.c.l.b16 %v2164
    %v2821 = vunpack.c.l.b16 %v2165
    %v2822 = vunpack.c.l.b16 %v2166
    %v2823 = vunpack.c.l.b16 %v2167
    %v2824 = vunpack.c.l.b16 %v2168
    %v2825 = vunpack.c.l.b16 %v2169
    %v2826 = vunpack.c.l.b16 %v2170
    %v2827 = vunpack.c.l.b16 %v2171
    %v2828 = vunpack.c.l.b16 %v2172
    %v2829 = vunpack.c.l.b16 %v2173
    %v2830 = vunpack.c.l.b16 %v2174
    %v2831 = vunpack.c.l.b16 %v2175
    %v2832 = vunpack.c.l.b16 %v2176
    %v2833 = vunpack.c.l.b16 %v2177
    %v2834 = vunpack.c.l.b16 %v2178
    %v2835 = vunpack.c.l.b16 %v2179
    %v2836 = vunpack.c.l.b16 %v2180
    %v2837 = vunpack.c.l.b16 %v2181
    %v2838 = vunpack.c.l.b16 %v2182
    %v2839 = vunpack.c.l.b16 %v2183
    %v2840 = vunpack.c.l.b16 %v2184
    %v2841 = vunpack.c.l.b16 %v2185
    %v2842 = vunpack.c.l.b16 %v2186
    %v2843 = vunpack.c.l.b16 %v2187
    %v2844 = vunpack.c.l.b16 %v2188
    %v2845 = vunpack.c.l.b16 %v2189
    %v2846 = vunpack.c.l.b16 %v2190
    %v2847 = vunpack.c.l.b16 %v2191
    %v2848 = vunpack.c.l.b16 %v2192
    %v2849 = vunpack.c.l.b16 %v2193
    %v2850 = vunpack.c.l.b16 %v2194
    %v2851 = vunpack.c.l.b16 %v2195
    %v2852 = vunpack.c.l.b16 %v2196
    %v2853 = vunpack.c.l.b16 %v2197
    %v2854 = vunpack.c.l.b16 %v2198
    %v2855 = vunpack.c.l.b16 %v2199
    %v2856 = vunpack.c.l.b16 %v2200
    %v2857 = vunpack.c.l.b16 %v2201
    %v2858 = vunpack.c.l.b16 %v2202
    %v2859 = vunpack.c.l.b16 %v2203
    %v2860 = vunpack.c.l.b16 %v2204
    %v2861 = vunpack.c.l.b16 %v2205
    %v2862 = vunpack.c.l.b16 %v2206
    %v2863 = vunpack.c.l.b16 %v2207
    %v2864 = vunpack.c.l.b16 %v2208
    %v2865 = vunpack.c.l.b16 %v2209
    %v2866 = vunpack.c.l.b16 %v2210
    %v2867 = vunpack.c.l.b16 %v2211
    %v2868 = vunpack.c.l.b16 %v2212
    %v2869 = vunpack.c.l.b16 %v2213
    %v2870 = vunpack.c.l.b16 %v2214
    %v2871 = vunpack.c.l.b16 %v2215
    %v2872 = vunpack.c.l.b16 %v2216
    %v2873 = vunpack.c.l.b16 %v2217
    %v2874 = vunpack.c.l.b16 %v2218
    %v2875 = vunpack.c.l.b16 %v2219
    %v2876 = vunpack.c.l.b16 %v2220
    %v2877 = vpack.c.b16 %v2734, %v2733
    %v2878 = vpack.c.b16 %v2736, %v2735
    %v2879 = vpack.c.b16 %v2738, %v2737
    %v2880 = vpack.c.b16 %v2740, %v2739
    %v2881 = vpack.c.b16 %v2742, %v2741
    %v2882 = vpack.c.b16 %v2744, %v2743
    %v2883 = vpack.c.b16 %v2746, %v2745
    %v2884 = vpack.c.b16 %v2748, %v2747
    %v2885 = vpack.c.b16 %v2750, %v2749
    %v2886 = vpack.c.b16 %v2752, %v2751
    %v2887 = vpack.c.b16 %v2754, %v2753
    %v2888 = vpack.c.b16 %v2756, %v2755
    %v2889 = vpack.c.b16 %v2758, %v2757
    %v2890 = vpack.c.b16 %v2760, %v2759
    %v2891 = vpack.c.b16 %v2762, %v2761
    %v2892 = vpack.c.b16 %v2764, %v2763
    %v2893 = vpack.c.b16 %v2766, %v2765
    %v2894 = vpack.c.b16 %v2768, %v2767
    %v2895 = vpack.c.b16 %v2770, %v2769
    %v2896 = vpack.c.b16 %v2772, %v2771
    %v2897 = vpack.c.b16 %v2774, %v2773
    %v2898 = vpack.c.b16 %v2776, %v2775
    %v2899 = vpack.c.b16 %v2778, %v2777
    %v2900 = vpack.c.b16 %v2780, %v2779
    %v2901 = vpack.c.b16 %v2782, %v2781
    %v2902 = vpack.c.b16 %v2784, %v2783
    %v2903 = vpack.c.b16 %v2786, %v2785
    %v2904 = vpack.c.b16 %v2788, %v2787
    %v2905 = vpack.c.b16 %v2790, %v2789
    %v2906 = vpack.c.b16 %v2792, %v2791
    %v2907 = vpack.c.b16 %v2794, %v2793
    %v2908 = vpack.c.b16 %v2796, %v2795
    %v2909 = vpack.c.b16 %v2798, %v2797
    %v2910 = vpack.c.b16 %v2800, %v2799
    %v2911 = vpack.c.b16 %v2802, %v2801
    %v2912 = vpack.c.b16 %v2804, %v2803
    %v2913 = vpack.c.b16 %v2806, %v2805
    %v2914 = vpack.c.b16 %v2808, %v2807
    %v2915 = vpack.c.b16 %v2810, %v2809
    %v2916 = vpack.c.b16 %v2812, %v2811
    %v2917 = vpack.c.b16 %v2814, %v2813
    %v2918 = vpack.c.b16 %v2816, %v2815
    %v2919 = vpack.c.b16 %v2818, %v2817
    %v2920 = vpack.c.b16 %v2820, %v2819
    %v2921 = vpack.c.b16 %v2822, %v2821
    %v2922 = vpack.c.b16 %v2824, %v2823
    %v2923 = vpack.c.b16 %v2826, %v2825
    %v2924 = vpack.c.b16 %v2828, %v2827
    %v2925 = vpack.c.b16 %v2830, %v2829
    %v2926 = vpack.c.b16 %v2832, %v2831
    %v2927 = vpack.c.b16 %v2834, %v2833
    %v2928 = vpack.c.b16 %v2836, %v2835
    %v2929 = vpack.c.b16 %v2838, %v2837
    %v2930 = vpack.c.b16 %v2840, %v2839
    %v2931 = vpack.c.b16 %v2842, %v2841
    %v2932 = vpack.c.b16 %v2844, %v2843
    %v2933 = vpack.c.b16 %v2846, %v2845
    %v2934 = vpack.c.b16 %v2848, %v2847
    %v2935 = vpack.c.b16 %v2850, %v2849
    %v2936 = vpack.c.b16 %v2852, %v2851
    %v2937 = vpack.c.b16 %v2854, %v2853
    %v2938 = vpack.c.b16 %v2856, %v2855
    %v2939 = vpack.c.b16 %v2858, %v2857
    %v2940 = vpack.c.b16 %v2860, %v2859
    %v2941 = vpack.c.b16 %v2862, %v2861
    %v2942 = vpack.c.b16 %v2864, %v2863
    %v2943 = vpack.c.b16 %v2866, %v2865
    %v2944 = vpack.c.b16 %v2868, %v2867
    %v2945 = vpack.c.b16 %v2870, %v2869
    %v2946 = vpack.c.b16 %v2872, %v2871
    %v2947 = vpack.c.b16 %v2874, %v2873
    %v2948 = vpack.c.b16 %v2876, %v2875
    %3021 = vmatpush.bf16.msra.mxu0 %v2884
    %3022 = vmatpush.bf16.msra.mxu0 %v2883
    %3023 = vmatpush.bf16.msra.mxu0 %v2882
    %3024 = vmatpush.bf16.msra.mxu0 %v2881
    %3025 = vmatpush.bf16.msra.mxu0 %v2880
    %3026 = vmatpush.bf16.msra.mxu0 %v2879
    %3027 = vmatpush.bf16.msra.mxu0 %v2878
    %3028 = vmatpush.bf16.msra.mxu0 %v2877
    %3029 = vmatmul.bf16.gmra.mxu0 %v2445
    %v3030 = vpop.f32.mrf.mxu0
    %v3031 = vadd.f32 0.0, %v3030
    %v3032 = vpop.f32.mrf.mxu0
    %v3033 = vadd.f32 0.0, %v3032
    %3034 = vmatmul.bf16.gmra.mxu0 %v2454
    %v3035 = vpop.f32.mrf.mxu0
    %v3036 = vadd.f32 0.0, %v3035
    %v3037 = vpop.f32.mrf.mxu0
    %v3038 = vadd.f32 0.0, %v3037
    %3039 = vmatmul.bf16.gmra.mxu0 %v2463
    %v3040 = vpop.f32.mrf.mxu0
    %v3041 = vadd.f32 0.0, %v3040
    %v3042 = vpop.f32.mrf.mxu0
    %v3043 = vadd.f32 0.0, %v3042
    %3044 = vmatmul.bf16.gmra.mxu0 %v2472
    %v3045 = vpop.f32.mrf.mxu0
    %v3046 = vadd.f32 0.0, %v3045
    %v3047 = vpop.f32.mrf.mxu0
    %v3048 = vadd.f32 0.0, %v3047
    %3049 = vmatmul.bf16.gmra.mxu0 %v2481
    %v3050 = vpop.f32.mrf.mxu0
    %v3051 = vadd.f32 0.0, %v3050
    %v3052 = vpop.f32.mrf.mxu0
    %v3053 = vadd.f32 0.0, %v3052
    %3054 = vmatmul.bf16.gmra.mxu0 %v2490
    %v3055 = vpop.f32.mrf.mxu0
    %v3056 = vadd.f32 0.0, %v3055
    %v3057 = vpop.f32.mrf.mxu0
    %v3058 = vadd.f32 0.0, %v3057
    %3059 = vmatmul.bf16.gmra.mxu0 %v2499
    %v3060 = vpop.f32.mrf.mxu0
    %v3061 = vadd.f32 0.0, %v3060
    %v3062 = vpop.f32.mrf.mxu0
    %v3063 = vadd.f32 0.0, %v3062
    %3064 = vmatmul.bf16.gmra.mxu0 %v2508
    %v3065 = vpop.f32.mrf.mxu0
    %v3066 = vadd.f32 0.0, %v3065
    %v3067 = vpop.f32.mrf.mxu0
    %v3068 = vadd.f32 0.0, %v3067
    %3069 = vdwg.mxu0
    %3070 = vmatpush.bf16.msra.mxu0 %v2892
    %3071 = vmatpush.bf16.msra.mxu0 %v2891
    %3072 = vmatpush.bf16.msra.mxu0 %v2890
    %3073 = vmatpush.bf16.msra.mxu0 %v2889
    %3074 = vmatpush.bf16.msra.mxu0 %v2888
    %3075 = vmatpush.bf16.msra.mxu0 %v2887
    %3076 = vmatpush.bf16.msra.mxu0 %v2886
    %3077 = vmatpush.bf16.msra.mxu0 %v2885
    %3078 = vmatmul.bf16.gmra.mxu0 %v2446
    %v3079 = vpop.f32.mrf.mxu0
    %v3080 = vadd.f32 %v3031, %v3079
    %v3081 = vpop.f32.mrf.mxu0
    %v3082 = vadd.f32 %v3033, %v3081
    %3083 = vmatmul.bf16.gmra.mxu0 %v2455
    %v3084 = vpop.f32.mrf.mxu0
    %v3085 = vadd.f32 %v3036, %v3084
    %v3086 = vpop.f32.mrf.mxu0
    %v3087 = vadd.f32 %v3038, %v3086
    %3088 = vmatmul.bf16.gmra.mxu0 %v2464
    %v3089 = vpop.f32.mrf.mxu0
    %v3090 = vadd.f32 %v3041, %v3089
    %v3091 = vpop.f32.mrf.mxu0
    %v3092 = vadd.f32 %v3043, %v3091
    %3093 = vmatmul.bf16.gmra.mxu0 %v2473
    %v3094 = vpop.f32.mrf.mxu0
    %v3095 = vadd.f32 %v3046, %v3094
    %v3096 = vpop.f32.mrf.mxu0
    %v3097 = vadd.f32 %v3048, %v3096
    %3098 = vmatmul.bf16.gmra.mxu0 %v2482
    %v3099 = vpop.f32.mrf.mxu0
    %v3100 = vadd.f32 %v3051, %v3099
    %v3101 = vpop.f32.mrf.mxu0
    %v3102 = vadd.f32 %v3053, %v3101
    %3103 = vmatmul.bf16.gmra.mxu0 %v2491
    %v3104 = vpop.f32.mrf.mxu0
    %v3105 = vadd.f32 %v3056, %v3104
    %v3106 = vpop.f32.mrf.mxu0
    %v3107 = vadd.f32 %v3058, %v3106
    %3108 = vmatmul.bf16.gmra.mxu0 %v2500
    %v3109 = vpop.f32.mrf.mxu0
    %v3110 = vadd.f32 %v3061, %v3109
    %v3111 = vpop.f32.mrf.mxu0
    %v3112 = vadd.f32 %v3063, %v3111
    %3113 = vmatmul.bf16.gmra.mxu0 %v2509
    %v3114 = vpop.f32.mrf.mxu0
    %v3115 = vadd.f32 %v3066, %v3114
    %v3116 = vpop.f32.mrf.mxu0
    %v3117 = vadd.f32 %v3068, %v3116
    %3118 = vdwg.mxu0
    %3119 = vmatpush.bf16.msra.mxu0 %v2900
    %3120 = vmatpush.bf16.msra.mxu0 %v2899
    %3121 = vmatpush.bf16.msra.mxu0 %v2898
    %3122 = vmatpush.bf16.msra.mxu0 %v2897
    %3123 = vmatpush.bf16.msra.mxu0 %v2896
    %3124 = vmatpush.bf16.msra.mxu0 %v2895
    %3125 = vmatpush.bf16.msra.mxu0 %v2894
    %3126 = vmatpush.bf16.msra.mxu0 %v2893
    %3127 = vmatmul.bf16.gmra.mxu0 %v2447
    %v3128 = vpop.f32.mrf.mxu0
    %v3129 = vadd.f32 %v3080, %v3128
    %v3130 = vpop.f32.mrf.mxu0
    %v3131 = vadd.f32 %v3082, %v3130
    %3132 = vmatmul.bf16.gmra.mxu0 %v2456
    %v3133 = vpop.f32.mrf.mxu0
    %v3134 = vadd.f32 %v3085, %v3133
    %v3135 = vpop.f32.mrf.mxu0
    %v3136 = vadd.f32 %v3087, %v3135
    %3137 = vmatmul.bf16.gmra.mxu0 %v2465
    %v3138 = vpop.f32.mrf.mxu0
    %v3139 = vadd.f32 %v3090, %v3138
    %v3140 = vpop.f32.mrf.mxu0
    %v3141 = vadd.f32 %v3092, %v3140
    %3142 = vmatmul.bf16.gmra.mxu0 %v2474
    %v3143 = vpop.f32.mrf.mxu0
    %v3144 = vadd.f32 %v3095, %v3143
    %v3145 = vpop.f32.mrf.mxu0
    %v3146 = vadd.f32 %v3097, %v3145
    %3147 = vmatmul.bf16.gmra.mxu0 %v2483
    %v3148 = vpop.f32.mrf.mxu0
    %v3149 = vadd.f32 %v3100, %v3148
    %v3150 = vpop.f32.mrf.mxu0
    %v3151 = vadd.f32 %v3102, %v3150
    %3152 = vmatmul.bf16.gmra.mxu0 %v2492
    %v3153 = vpop.f32.mrf.mxu0
    %v3154 = vadd.f32 %v3105, %v3153
    %v3155 = vpop.f32.mrf.mxu0
    %v3156 = vadd.f32 %v3107, %v3155
    %3157 = vmatmul.bf16.gmra.mxu0 %v2501
    %v3158 = vpop.f32.mrf.mxu0
    %v3159 = vadd.f32 %v3110, %v3158
    %v3160 = vpop.f32.mrf.mxu0
    %v3161 = vadd.f32 %v3112, %v3160
    %3162 = vmatmul.bf16.gmra.mxu0 %v2510
    %v3163 = vpop.f32.mrf.mxu0
    %v3164 = vadd.f32 %v3115, %v3163
    %v3165 = vpop.f32.mrf.mxu0
    %v3166 = vadd.f32 %v3117, %v3165
    %3167 = vdwg.mxu0
    %3168 = vmatpush.bf16.msra.mxu0 %v2908
    %3169 = vmatpush.bf16.msra.mxu0 %v2907
    %3170 = vmatpush.bf16.msra.mxu0 %v2906
    %3171 = vmatpush.bf16.msra.mxu0 %v2905
    %3172 = vmatpush.bf16.msra.mxu0 %v2904
    %3173 = vmatpush.bf16.msra.mxu0 %v2903
    %3174 = vmatpush.bf16.msra.mxu0 %v2902
    %3175 = vmatpush.bf16.msra.mxu0 %v2901
    %3176 = vmatmul.bf16.gmra.mxu0 %v2448
    %v3177 = vpop.f32.mrf.mxu0
    %v3178 = vadd.f32 %v3129, %v3177
    %v3179 = vpop.f32.mrf.mxu0
    %v3180 = vadd.f32 %v3131, %v3179
    %3181 = vmatmul.bf16.gmra.mxu0 %v2457
    %v3182 = vpop.f32.mrf.mxu0
    %v3183 = vadd.f32 %v3134, %v3182
    %v3184 = vpop.f32.mrf.mxu0
    %v3185 = vadd.f32 %v3136, %v3184
    %3186 = vmatmul.bf16.gmra.mxu0 %v2466
    %v3187 = vpop.f32.mrf.mxu0
    %v3188 = vadd.f32 %v3139, %v3187
    %v3189 = vpop.f32.mrf.mxu0
    %v3190 = vadd.f32 %v3141, %v3189
    %3191 = vmatmul.bf16.gmra.mxu0 %v2475
    %v3192 = vpop.f32.mrf.mxu0
    %v3193 = vadd.f32 %v3144, %v3192
    %v3194 = vpop.f32.mrf.mxu0
    %v3195 = vadd.f32 %v3146, %v3194
    %3196 = vmatmul.bf16.gmra.mxu0 %v2484
    %v3197 = vpop.f32.mrf.mxu0
    %v3198 = vadd.f32 %v3149, %v3197
    %v3199 = vpop.f32.mrf.mxu0
    %v3200 = vadd.f32 %v3151, %v3199
    %3201 = vmatmul.bf16.gmra.mxu0 %v2493
    %v3202 = vpop.f32.mrf.mxu0
    %v3203 = vadd.f32 %v3154, %v3202
    %v3204 = vpop.f32.mrf.mxu0
    %v3205 = vadd.f32 %v3156, %v3204
    %3206 = vmatmul.bf16.gmra.mxu0 %v2502
    %v3207 = vpop.f32.mrf.mxu0
    %v3208 = vadd.f32 %v3159, %v3207
    %v3209 = vpop.f32.mrf.mxu0
    %v3210 = vadd.f32 %v3161, %v3209
    %3211 = vmatmul.bf16.gmra.mxu0 %v2511
    %v3212 = vpop.f32.mrf.mxu0
    %v3213 = vadd.f32 %v3164, %v3212
    %v3214 = vpop.f32.mrf.mxu0
    %v3215 = vadd.f32 %v3166, %v3214
    %3216 = vdwg.mxu0
    %3217 = vmatpush.bf16.msra.mxu0 %v2916
    %3218 = vmatpush.bf16.msra.mxu0 %v2915
    %3219 = vmatpush.bf16.msra.mxu0 %v2914
    %3220 = vmatpush.bf16.msra.mxu0 %v2913
    %3221 = vmatpush.bf16.msra.mxu0 %v2912
    %3222 = vmatpush.bf16.msra.mxu0 %v2911
    %3223 = vmatpush.bf16.msra.mxu0 %v2910
    %3224 = vmatpush.bf16.msra.mxu0 %v2909
    %3225 = vmatmul.bf16.gmra.mxu0 %v2449
    %v3226 = vpop.f32.mrf.mxu0
    %v3227 = vadd.f32 %v3178, %v3226
    %v3228 = vpop.f32.mrf.mxu0
    %v3229 = vadd.f32 %v3180, %v3228
    %3230 = vmatmul.bf16.gmra.mxu0 %v2458
    %v3231 = vpop.f32.mrf.mxu0
    %v3232 = vadd.f32 %v3183, %v3231
    %v3233 = vpop.f32.mrf.mxu0
    %v3234 = vadd.f32 %v3185, %v3233
    %3235 = vmatmul.bf16.gmra.mxu0 %v2467
    %v3236 = vpop.f32.mrf.mxu0
    %v3237 = vadd.f32 %v3188, %v3236
    %v3238 = vpop.f32.mrf.mxu0
    %v3239 = vadd.f32 %v3190, %v3238
    %3240 = vmatmul.bf16.gmra.mxu0 %v2476
    %v3241 = vpop.f32.mrf.mxu0
    %v3242 = vadd.f32 %v3193, %v3241
    %v3243 = vpop.f32.mrf.mxu0
    %v3244 = vadd.f32 %v3195, %v3243
    %3245 = vmatmul.bf16.gmra.mxu0 %v2485
    %v3246 = vpop.f32.mrf.mxu0
    %v3247 = vadd.f32 %v3198, %v3246
    %v3248 = vpop.f32.mrf.mxu0
    %v3249 = vadd.f32 %v3200, %v3248
    %3250 = vmatmul.bf16.gmra.mxu0 %v2494
    %v3251 = vpop.f32.mrf.mxu0
    %v3252 = vadd.f32 %v3203, %v3251
    %v3253 = vpop.f32.mrf.mxu0
    %v3254 = vadd.f32 %v3205, %v3253
    %3255 = vmatmul.bf16.gmra.mxu0 %v2503
    %v3256 = vpop.f32.mrf.mxu0
    %v3257 = vadd.f32 %v3208, %v3256
    %v3258 = vpop.f32.mrf.mxu0
    %v3259 = vadd.f32 %v3210, %v3258
    %3260 = vmatmul.bf16.gmra.mxu0 %v2512
    %v3261 = vpop.f32.mrf.mxu0
    %v3262 = vadd.f32 %v3213, %v3261
    %v3263 = vpop.f32.mrf.mxu0
    %v3264 = vadd.f32 %v3215, %v3263
    %3265 = vdwg.mxu0
    %3266 = vmatpush.bf16.msra.mxu0 %v2924
    %3267 = vmatpush.bf16.msra.mxu0 %v2923
    %3268 = vmatpush.bf16.msra.mxu0 %v2922
    %3269 = vmatpush.bf16.msra.mxu0 %v2921
    %3270 = vmatpush.bf16.msra.mxu0 %v2920
    %3271 = vmatpush.bf16.msra.mxu0 %v2919
    %3272 = vmatpush.bf16.msra.mxu0 %v2918
    %3273 = vmatpush.bf16.msra.mxu0 %v2917
    %3274 = vmatmul.bf16.gmra.mxu0 %v2450
    %v3275 = vpop.f32.mrf.mxu0
    %v3276 = vadd.f32 %v3227, %v3275
    %v3277 = vpop.f32.mrf.mxu0
    %v3278 = vadd.f32 %v3229, %v3277
    %3279 = vmatmul.bf16.gmra.mxu0 %v2459
    %v3280 = vpop.f32.mrf.mxu0
    %v3281 = vadd.f32 %v3232, %v3280
    %v3282 = vpop.f32.mrf.mxu0
    %v3283 = vadd.f32 %v3234, %v3282
    %3284 = vmatmul.bf16.gmra.mxu0 %v2468
    %v3285 = vpop.f32.mrf.mxu0
    %v3286 = vadd.f32 %v3237, %v3285
    %v3287 = vpop.f32.mrf.mxu0
    %v3288 = vadd.f32 %v3239, %v3287
    %3289 = vmatmul.bf16.gmra.mxu0 %v2477
    %v3290 = vpop.f32.mrf.mxu0
    %v3291 = vadd.f32 %v3242, %v3290
    %v3292 = vpop.f32.mrf.mxu0
    %v3293 = vadd.f32 %v3244, %v3292
    %3294 = vmatmul.bf16.gmra.mxu0 %v2486
    %v3295 = vpop.f32.mrf.mxu0
    %v3296 = vadd.f32 %v3247, %v3295
    %v3297 = vpop.f32.mrf.mxu0
    %v3298 = vadd.f32 %v3249, %v3297
    %3299 = vmatmul.bf16.gmra.mxu0 %v2495
    %v3300 = vpop.f32.mrf.mxu0
    %v3301 = vadd.f32 %v3252, %v3300
    %v3302 = vpop.f32.mrf.mxu0
    %v3303 = vadd.f32 %v3254, %v3302
    %3304 = vmatmul.bf16.gmra.mxu0 %v2504
    %v3305 = vpop.f32.mrf.mxu0
    %v3306 = vadd.f32 %v3257, %v3305
    %v3307 = vpop.f32.mrf.mxu0
    %v3308 = vadd.f32 %v3259, %v3307
    %3309 = vmatmul.bf16.gmra.mxu0 %v2513
    %v3310 = vpop.f32.mrf.mxu0
    %v3311 = vadd.f32 %v3262, %v3310
    %v3312 = vpop.f32.mrf.mxu0
    %v3313 = vadd.f32 %v3264, %v3312
    %3314 = vdwg.mxu0
    %3315 = vmatpush.bf16.msra.mxu0 %v2932
    %3316 = vmatpush.bf16.msra.mxu0 %v2931
    %3317 = vmatpush.bf16.msra.mxu0 %v2930
    %3318 = vmatpush.bf16.msra.mxu0 %v2929
    %3319 = vmatpush.bf16.msra.mxu0 %v2928
    %3320 = vmatpush.bf16.msra.mxu0 %v2927
    %3321 = vmatpush.bf16.msra.mxu0 %v2926
    %3322 = vmatpush.bf16.msra.mxu0 %v2925
    %3323 = vmatmul.bf16.gmra.mxu0 %v2451
    %v3324 = vpop.f32.mrf.mxu0
    %v3325 = vadd.f32 %v3276, %v3324
    %v3326 = vpop.f32.mrf.mxu0
    %v3327 = vadd.f32 %v3278, %v3326
    %3328 = vmatmul.bf16.gmra.mxu0 %v2460
    %v3329 = vpop.f32.mrf.mxu0
    %v3330 = vadd.f32 %v3281, %v3329
    %v3331 = vpop.f32.mrf.mxu0
    %v3332 = vadd.f32 %v3283, %v3331
    %3333 = vmatmul.bf16.gmra.mxu0 %v2469
    %v3334 = vpop.f32.mrf.mxu0
    %v3335 = vadd.f32 %v3286, %v3334
    %v3336 = vpop.f32.mrf.mxu0
    %v3337 = vadd.f32 %v3288, %v3336
    %3338 = vmatmul.bf16.gmra.mxu0 %v2478
    %v3339 = vpop.f32.mrf.mxu0
    %v3340 = vadd.f32 %v3291, %v3339
    %v3341 = vpop.f32.mrf.mxu0
    %v3342 = vadd.f32 %v3293, %v3341
    %3343 = vmatmul.bf16.gmra.mxu0 %v2487
    %v3344 = vpop.f32.mrf.mxu0
    %v3345 = vadd.f32 %v3296, %v3344
    %v3346 = vpop.f32.mrf.mxu0
    %v3347 = vadd.f32 %v3298, %v3346
    %3348 = vmatmul.bf16.gmra.mxu0 %v2496
    %v3349 = vpop.f32.mrf.mxu0
    %v3350 = vadd.f32 %v3301, %v3349
    %v3351 = vpop.f32.mrf.mxu0
    %v3352 = vadd.f32 %v3303, %v3351
    %3353 = vmatmul.bf16.gmra.mxu0 %v2505
    %v3354 = vpop.f32.mrf.mxu0
    %v3355 = vadd.f32 %v3306, %v3354
    %v3356 = vpop.f32.mrf.mxu0
    %v3357 = vadd.f32 %v3308, %v3356
    %3358 = vmatmul.bf16.gmra.mxu0 %v2514
    %v3359 = vpop.f32.mrf.mxu0
    %v3360 = vadd.f32 %v3311, %v3359
    %v3361 = vpop.f32.mrf.mxu0
    %v3362 = vadd.f32 %v3313, %v3361
    %3363 = vdwg.mxu0
    %3364 = vmatpush.bf16.msra.mxu0 %v2940
    %3365 = vmatpush.bf16.msra.mxu0 %v2939
    %3366 = vmatpush.bf16.msra.mxu0 %v2938
    %3367 = vmatpush.bf16.msra.mxu0 %v2937
    %3368 = vmatpush.bf16.msra.mxu0 %v2936
    %3369 = vmatpush.bf16.msra.mxu0 %v2935
    %3370 = vmatpush.bf16.msra.mxu0 %v2934
    %3371 = vmatpush.bf16.msra.mxu0 %v2933
    %3372 = vmatmul.bf16.gmra.mxu0 %v2452
    %v3373 = vpop.f32.mrf.mxu0
    %v3374 = vadd.f32 %v3325, %v3373
    %v3375 = vpop.f32.mrf.mxu0
    %v3376 = vadd.f32 %v3327, %v3375
    %3377 = vmatmul.bf16.gmra.mxu0 %v2461
    %v3378 = vpop.f32.mrf.mxu0
    %v3379 = vadd.f32 %v3330, %v3378
    %v3380 = vpop.f32.mrf.mxu0
    %v3381 = vadd.f32 %v3332, %v3380
    %3382 = vmatmul.bf16.gmra.mxu0 %v2470
    %v3383 = vpop.f32.mrf.mxu0
    %v3384 = vadd.f32 %v3335, %v3383
    %v3385 = vpop.f32.mrf.mxu0
    %v3386 = vadd.f32 %v3337, %v3385
    %3387 = vmatmul.bf16.gmra.mxu0 %v2479
    %v3388 = vpop.f32.mrf.mxu0
    %v3389 = vadd.f32 %v3340, %v3388
    %v3390 = vpop.f32.mrf.mxu0
    %v3391 = vadd.f32 %v3342, %v3390
    %3392 = vmatmul.bf16.gmra.mxu0 %v2488
    %v3393 = vpop.f32.mrf.mxu0
    %v3394 = vadd.f32 %v3345, %v3393
    %v3395 = vpop.f32.mrf.mxu0
    %v3396 = vadd.f32 %v3347, %v3395
    %3397 = vmatmul.bf16.gmra.mxu0 %v2497
    %v3398 = vpop.f32.mrf.mxu0
    %v3399 = vadd.f32 %v3350, %v3398
    %v3400 = vpop.f32.mrf.mxu0
    %v3401 = vadd.f32 %v3352, %v3400
    %3402 = vmatmul.bf16.gmra.mxu0 %v2506
    %v3403 = vpop.f32.mrf.mxu0
    %v3404 = vadd.f32 %v3355, %v3403
    %v3405 = vpop.f32.mrf.mxu0
    %v3406 = vadd.f32 %v3357, %v3405
    %3407 = vmatmul.bf16.gmra.mxu0 %v2515
    %v3408 = vpop.f32.mrf.mxu0
    %v3409 = vadd.f32 %v3360, %v3408
    %v3410 = vpop.f32.mrf.mxu0
    %v3411 = vadd.f32 %v3362, %v3410
    %3412 = vdwg.mxu0
    %3413 = vmatpush.bf16.msra.mxu0 %v2948
    %3414 = vmatpush.bf16.msra.mxu0 %v2947
    %3415 = vmatpush.bf16.msra.mxu0 %v2946
    %3416 = vmatpush.bf16.msra.mxu0 %v2945
    %3417 = vmatpush.bf16.msra.mxu0 %v2944
    %3418 = vmatpush.bf16.msra.mxu0 %v2943
    %3419 = vmatpush.bf16.msra.mxu0 %v2942
    %3420 = vmatpush.bf16.msra.mxu0 %v2941
    %3421 = vmatmul.bf16.gmra.mxu0 %v2453
    %v3422 = vpop.f32.mrf.mxu0
    %v3423 = vadd.f32 %v3374, %v3422
    %v3424 = vpop.f32.mrf.mxu0
    %v3425 = vadd.f32 %v3376, %v3424
    %3426 = vmatmul.bf16.gmra.mxu0 %v2462
    %v3427 = vpop.f32.mrf.mxu0
    %v3428 = vadd.f32 %v3379, %v3427
    %v3429 = vpop.f32.mrf.mxu0
    %v3430 = vadd.f32 %v3381, %v3429
    %3431 = vmatmul.bf16.gmra.mxu0 %v2471
    %v3432 = vpop.f32.mrf.mxu0
    %v3433 = vadd.f32 %v3384, %v3432
    %v3434 = vpop.f32.mrf.mxu0
    %v3435 = vadd.f32 %v3386, %v3434
    %3436 = vmatmul.bf16.gmra.mxu0 %v2480
    %v3437 = vpop.f32.mrf.mxu0
    %v3438 = vadd.f32 %v3389, %v3437
    %v3439 = vpop.f32.mrf.mxu0
    %v3440 = vadd.f32 %v3391, %v3439
    %3441 = vmatmul.bf16.gmra.mxu0 %v2489
    %v3442 = vpop.f32.mrf.mxu0
    %v3443 = vadd.f32 %v3394, %v3442
    %v3444 = vpop.f32.mrf.mxu0
    %v3445 = vadd.f32 %v3396, %v3444
    %3446 = vmatmul.bf16.gmra.mxu0 %v2498
    %v3447 = vpop.f32.mrf.mxu0
    %v3448 = vadd.f32 %v3399, %v3447
    %v3449 = vpop.f32.mrf.mxu0
    %v3450 = vadd.f32 %v3401, %v3449
    %3451 = vmatmul.bf16.gmra.mxu0 %v2507
    %v3452 = vpop.f32.mrf.mxu0
    %v3453 = vadd.f32 %v3404, %v3452
    %v3454 = vpop.f32.mrf.mxu0
    %v3455 = vadd.f32 %v3406, %v3454
    %3456 = vmatmul.bf16.gmra.mxu0 %v2516
    %v3457 = vpop.f32.mrf.mxu0
    %v3458 = vadd.f32 %v3409, %v3457
    %v3459 = vpop.f32.mrf.mxu0
    %v3460 = vadd.f32 %v3411, %v3459
    %3461 = vdwg.mxu0
    %v3462 = vadd.f32 %v3423, %v3425
    %v3463 = vadd.f32 %v3462, %v3428
    %v3464 = vadd.f32 %v3463, %v3430
    %v3465 = vadd.f32 %v3464, %v3433
    %v3466 = vadd.f32 %v3465, %v3435
    %v3467 = vadd.f32 %v3466, %v3438
    %v3468 = vadd.f32 %v3467, %v3440
    %v3469 = vadd.f32 %v3468, %v3443
    %v3470 = vadd.f32 %v3469, %v3445
    %v3471 = vadd.f32 %v3470, %v3448
    %v3472 = vadd.f32 %v3471, %v3450
    %v3473 = vadd.f32 %v3472, %v3453
    %v3474 = vadd.f32 %v3473, %v3455
    %v3475 = vadd.f32 %v3474, %v3458
    %v3476 = vadd.f32 %v3475, %v3460
    %v3477 = vrot.slane %v3476, 4
    %v3478 = vadd.f32 %v3476, %v3477
    %v3479 = vrot.slane %v3478, 2
    %v3480 = vadd.f32 %v3478, %v3479
    %v3481 = vrot.slane %v3480, 1
    %v3482 = vadd.f32 %v3480, %v3481
    %v3483 = vmul.f32 %v3482, 0.0078125
    %v3484 = vmul.f32 %v3423, %v3423
    %v3485 = vmul.f32 %v3425, %v3425
    %v3486 = vmul.f32 %v3428, %v3428
    %v3487 = vmul.f32 %v3430, %v3430
    %v3488 = vmul.f32 %v3433, %v3433
    %v3489 = vmul.f32 %v3435, %v3435
    %v3490 = vmul.f32 %v3438, %v3438
    %v3491 = vmul.f32 %v3440, %v3440
    %v3492 = vmul.f32 %v3443, %v3443
    %v3493 = vmul.f32 %v3445, %v3445
    %v3494 = vmul.f32 %v3448, %v3448
    %v3495 = vmul.f32 %v3450, %v3450
    %v3496 = vmul.f32 %v3453, %v3453
    %v3497 = vmul.f32 %v3455, %v3455
    %v3498 = vmul.f32 %v3458, %v3458
    %v3499 = vmul.f32 %v3460, %v3460
    %v3500 = vadd.f32 %v3484, %v3485
    %v3501 = vadd.f32 %v3500, %v3486
    %v3502 = vadd.f32 %v3501, %v3487
    %v3503 = vadd.f32 %v3502, %v3488
    %v3504 = vadd.f32 %v3503, %v3489
    %v3505 = vadd.f32 %v3504, %v3490
    %v3506 = vadd.f32 %v3505, %v3491
    %v3507 = vadd.f32 %v3506, %v3492
    %v3508 = vadd.f32 %v3507, %v3493
    %v3509 = vadd.f32 %v3508, %v3494
    %v3510 = vadd.f32 %v3509, %v3495
    %v3511 = vadd.f32 %v3510, %v3496
    %v3512 = vadd.f32 %v3511, %v3497
    %v3513 = vadd.f32 %v3512, %v3498
    %v3514 = vadd.f32 %v3513, %v3499
    %v3515 = vrot.slane %v3514, 4
    %v3516 = vadd.f32 %v3514, %v3515
    %v3517 = vrot.slane %v3516, 2
    %v3518 = vadd.f32 %v3516, %v3517
    %v3519 = vrot.slane %v3518, 1
    %v3520 = vadd.f32 %v3518, %v3519
    %v3521 = vmul.f32 %v3520, 0.0078125
    %v3522 = vmul.f32 %v3483, %v3483
    %v3523 = vsub.f32 %v3521, %v3522
    %v3524 = vmax.f32 %v3523, 0.0
    %v3525 = vld [vmem:[%s2] sm:$0x1]
    %v3526 = vadd.f32 %v3524, 1e-05
    %v3527 = vrsqrt.pop %v3526
    %v3528 = vmul.f32 %v3527, %v3526
    %v3529 = vmul.f32 %v3528, %v3527
    %v3530 = vmul.f32 0.5, %v3529
    %v3531 = vsub.f32 1.5, %v3530
    %v3532 = vmul.f32 %v3527, %v3531
    %vm3533 = vweird.f32 %v3526
    %vm3534 = vweird.f32 %v3527
    %vm3535 = vmor %vm3533, %vm3534
    %v3536 = vsel %vm3535, %v3527, %v3532
    %v3537 = vmul.f32 %v3525, %v3536
    %v3538 = vld [vmem:[%s3] sm:$0x1]
    %v3539 = vmul.f32 %v3483, %v3537
    %v3540 = vsub.f32 %v3538, %v3539
    %v3542 = vperm.slane %v3537, 0
    %v3544 = vmul.f32 %v3423, %v3542
    %v3545 = vmul.f32 %v3425, %v3542
    %v3546 = vmul.f32 %v3428, %v3542
    %v3547 = vmul.f32 %v3430, %v3542
    %v3548 = vmul.f32 %v3433, %v3542
    %v3549 = vmul.f32 %v3435, %v3542
    %v3550 = vmul.f32 %v3438, %v3542
    %v3551 = vmul.f32 %v3440, %v3542
    %v3552 = vmul.f32 %v3443, %v3542
    %v3553 = vmul.f32 %v3445, %v3542
    %v3554 = vmul.f32 %v3448, %v3542
    %v3555 = vmul.f32 %v3450, %v3542
    %v3556 = vmul.f32 %v3453, %v3542
    %v3557 = vmul.f32 %v3455, %v3542
    %v3558 = vmul.f32 %v3458, %v3542
    %v3559 = vmul.f32 %v3460, %v3542
    %v3561 = vperm.slane %v3540, 0
    %v3563 = vadd.f32 %v3544, %v3561
    %v3564 = vadd.f32 %v3545, %v3561
    %v3565 = vadd.f32 %v3546, %v3561
    %v3566 = vadd.f32 %v3547, %v3561
    %v3567 = vadd.f32 %v3548, %v3561
    %v3568 = vadd.f32 %v3549, %v3561
    %v3569 = vadd.f32 %v3550, %v3561
    %v3570 = vadd.f32 %v3551, %v3561
    %v3571 = vadd.f32 %v3552, %v3561
    %v3572 = vadd.f32 %v3553, %v3561
    %v3573 = vadd.f32 %v3554, %v3561
    %v3574 = vadd.f32 %v3555, %v3561
    %v3575 = vadd.f32 %v3556, %v3561
    %v3576 = vadd.f32 %v3557, %v3561
    %v3577 = vadd.f32 %v3558, %v3561
    %v3578 = vadd.f32 %v3559, %v3561
    %v3579 = vmax.f32 %v3563, 0.0
    %v3580 = vmax.f32 %v3564, 0.0
    %v3581 = vmax.f32 %v3565, 0.0
    %v3582 = vmax.f32 %v3566, 0.0
    %v3583 = vmax.f32 %v3567, 0.0
    %v3584 = vmax.f32 %v3568, 0.0
    %v3585 = vmax.f32 %v3569, 0.0
    %v3586 = vmax.f32 %v3570, 0.0
    %v3587 = vmax.f32 %v3571, 0.0
    %v3588 = vmax.f32 %v3572, 0.0
    %v3589 = vmax.f32 %v3573, 0.0
    %v3590 = vmax.f32 %v3574, 0.0
    %v3591 = vmax.f32 %v3575, 0.0
    %v3592 = vmax.f32 %v3576, 0.0
    %v3593 = vmax.f32 %v3577, 0.0
    %v3594 = vmax.f32 %v3578, 0.0
    %v3595 = vpack.c.bf16 %v3579, %v3579
    %v3596 = vpack.c.bf16 %v3580, %v3580
    %v3597 = vpack.c.bf16 %v3581, %v3581
    %v3598 = vpack.c.bf16 %v3582, %v3582
    %v3599 = vpack.c.bf16 %v3583, %v3583
    %v3600 = vpack.c.bf16 %v3584, %v3584
    %v3601 = vpack.c.bf16 %v3585, %v3585
    %v3602 = vpack.c.bf16 %v3586, %v3586
    %v3603 = vpack.c.bf16 %v3587, %v3587
    %v3604 = vpack.c.bf16 %v3588, %v3588
    %v3605 = vpack.c.bf16 %v3589, %v3589
    %v3606 = vpack.c.bf16 %v3590, %v3590
    %v3607 = vpack.c.bf16 %v3591, %v3591
    %v3608 = vpack.c.bf16 %v3592, %v3592
    %v3609 = vpack.c.bf16 %v3593, %v3593
    %v3610 = vpack.c.bf16 %v3594, %v3594
    %s3611 = scalar_lea.vmem [#allocation3], 12
    %3612 = vst [vmem:[%s3611 + $0x4] sm:$0xf] %v3595
    %3613 = vst [vmem:[%s3611 + $0x10] sm:$0xf] %v3596
    %3614 = vst [vmem:[%s3611 + $0x1c] sm:$0xf] %v3597
    %3615 = vst [vmem:[%s3611 + $0x28] sm:$0xf] %v3598
    %3616 = vst [vmem:[%s3611 + $0x34] sm:$0xf] %v3599
    %3617 = vst [vmem:[%s3611 + $0x40] sm:$0xf] %v3600
    %3618 = vst [vmem:[%s3611 + $0x4c] sm:$0xf] %v3601
    %3619 = vst [vmem:[%s3611 + $0x58] sm:$0xf] %v3602
    %3620 = vst [vmem:[%s3611 + $0x7c] sm:$0xf] %v3603
    %3621 = vst [vmem:[%s3611 + $0x88] sm:$0xf] %v3604
    %3622 = vst [vmem:[%s3611 + $0x94] sm:$0xf] %v3605
    %3623 = vst [vmem:[%s3611 + $0xa0] sm:$0xf] %v3606
    %3624 = vst [vmem:[%s3611 + $0xac] sm:$0xf] %v3607
    %3625 = vst [vmem:[%s3611 + $0xb8] sm:$0xf] %v3608
    %3626 = vst [vmem:[%s3611 + $0xc4] sm:$0xf] %v3609
    %3627 = vst [vmem:[%s3611 + $0xd0] sm:$0xf] %v3610
    %v3628 = vld [vmem:[#allocation3] sm:$0x8]
    %v3629 = vld [vmem:[#allocation3 + $0x4] sm:$0xf]
    %v3630 = vld [vmem:[#allocation3 + $0xc] sm:$0x8]
    %v3631 = vld [vmem:[#allocation3 + $0x10] sm:$0xf]
    %v3632 = vld [vmem:[#allocation3 + $0x18] sm:$0x8]
    %v3633 = vld [vmem:[#allocation3 + $0x1c] sm:$0xf]
    %v3634 = vld [vmem:[#allocation3 + $0x24] sm:$0x8]
    %v3635 = vld [vmem:[#allocation3 + $0x28] sm:$0xf]
    %v3636 = vld [vmem:[#allocation3 + $0x30] sm:$0x8]
    %v3637 = vld [vmem:[#allocation3 + $0x34] sm:$0xf]
    %v3638 = vld [vmem:[#allocation3 + $0x3c] sm:$0x8]
    %v3639 = vld [vmem:[#allocation3 + $0x40] sm:$0xf]
    %v3640 = vld [vmem:[#allocation3 + $0x48] sm:$0x8]
    %v3641 = vld [vmem:[#allocation3 + $0x4c] sm:$0xf]
    %v3642 = vld [vmem:[#allocation3 + $0x54] sm:$0x8]
    %v3643 = vld [vmem:[#allocation3 + $0x58] sm:$0xf]
    %v3644 = vld [vmem:[#allocation3 + $0x78] sm:$0x8]
    %v3645 = vld [vmem:[#allocation3 + $0x7c] sm:$0xf]
    %v3646 = vld [vmem:[#allocation3 + $0x84] sm:$0x8]
    %v3647 = vld [vmem:[#allocation3 + $0x88] sm:$0xf]
    %v3648 = vld [vmem:[#allocation3 + $0x90] sm:$0x8]
    %v3649 = vld [vmem:[#allocation3 + $0x94] sm:$0xf]
    %v3650 = vld [vmem:[#allocation3 + $0x9c] sm:$0x8]
    %v3651 = vld [vmem:[#allocation3 + $0xa0] sm:$0xf]
    %v3652 = vld [vmem:[#allocation3 + $0xa8] sm:$0x8]
    %v3653 = vld [vmem:[#allocation3 + $0xac] sm:$0xf]
    %v3654 = vld [vmem:[#allocation3 + $0xb4] sm:$0x8]
    %v3655 = vld [vmem:[#allocation3 + $0xb8] sm:$0xf]
    %v3656 = vld [vmem:[#allocation3 + $0xc0] sm:$0x8]
    %v3657 = vld [vmem:[#allocation3 + $0xc4] sm:$0xf]
    %v3658 = vld [vmem:[#allocation3 + $0xcc] sm:$0x8]
    %v3659 = vld [vmem:[#allocation3 + $0xd0] sm:$0xf]
    %v3661 = vshrl.u32 %v3628, 16
    %v3663 = vrot.slane %v3661, 7
    %v3664 = vrot.slane %v3663, 4
    %v3666 = vshrl.u32 %v3629, 16
    %v3668 = vrot.slane %v3666, 7
    %v3669 = vshll.u32 %v3629, 16
    %v3671 = vor.u32 %v3668, %v3669
    %v3672 = vsel %vm248, %v3664, %v3671
    %v3674 = vshrl.u32 %v3630, 16
    %v3676 = vrot.slane %v3674, 7
    %v3677 = vrot.slane %v3676, 4
    %v3679 = vshrl.u32 %v3631, 16
    %v3681 = vrot.slane %v3679, 7
    %v3682 = vshll.u32 %v3631, 16
    %v3684 = vor.u32 %v3681, %v3682
    %v3685 = vsel %vm248, %v3677, %v3684
    %v3687 = vshrl.u32 %v3632, 16
    %v3689 = vrot.slane %v3687, 7
    %v3690 = vrot.slane %v3689, 4
    %v3692 = vshrl.u32 %v3633, 16
    %v3694 = vrot.slane %v3692, 7
    %v3695 = vshll.u32 %v3633, 16
    %v3697 = vor.u32 %v3694, %v3695
    %v3698 = vsel %vm248, %v3690, %v3697
    %v3700 = vshrl.u32 %v3634, 16
    %v3702 = vrot.slane %v3700, 7
    %v3703 = vrot.slane %v3702, 4
    %v3705 = vshrl.u32 %v3635, 16
    %v3707 = vrot.slane %v3705, 7
    %v3708 = vshll.u32 %v3635, 16
    %v3710 = vor.u32 %v3707, %v3708
    %v3711 = vsel %vm248, %v3703, %v3710
    %v3713 = vshrl.u32 %v3636, 16
    %v3715 = vrot.slane %v3713, 7
    %v3716 = vrot.slane %v3715, 4
    %v3718 = vshrl.u32 %v3637, 16
    %v3720 = vrot.slane %v3718, 7
    %v3721 = vshll.u32 %v3637, 16
    %v3723 = vor.u32 %v3720, %v3721
    %v3724 = vsel %vm248, %v3716, %v3723
    %v3726 = vshrl.u32 %v3638, 16
    %v3728 = vrot.slane %v3726, 7
    %v3729 = vrot.slane %v3728, 4
    %v3731 = vshrl.u32 %v3639, 16
    %v3733 = vrot.slane %v3731, 7
    %v3734 = vshll.u32 %v3639, 16
    %v3736 = vor.u32 %v3733, %v3734
    %v3737 = vsel %vm248, %v3729, %v3736
    %v3739 = vshrl.u32 %v3640, 16
    %v3741 = vrot.slane %v3739, 7
    %v3742 = vrot.slane %v3741, 4
    %v3744 = vshrl.u32 %v3641, 16
    %v3746 = vrot.slane %v3744, 7
    %v3747 = vshll.u32 %v3641, 16
    %v3749 = vor.u32 %v3746, %v3747
    %v3750 = vsel %vm248, %v3742, %v3749
    %v3752 = vshrl.u32 %v3642, 16
    %v3754 = vrot.slane %v3752, 7
    %v3755 = vrot.slane %v3754, 4
    %v3757 = vshrl.u32 %v3643, 16
    %v3759 = vrot.slane %v3757, 7
    %v3760 = vshll.u32 %v3643, 16
    %v3762 = vor.u32 %v3759, %v3760
    %v3763 = vsel %vm248, %v3755, %v3762
    %v3765 = vshrl.u32 %v3644, 16
    %v3767 = vrot.slane %v3765, 7
    %v3768 = vrot.slane %v3767, 4
    %v3770 = vshrl.u32 %v3645, 16
    %v3772 = vrot.slane %v3770, 7
    %v3773 = vshll.u32 %v3645, 16
    %v3775 = vor.u32 %v3772, %v3773
    %v3776 = vsel %vm248, %v3768, %v3775
    %v3778 = vshrl.u32 %v3646, 16
    %v3780 = vrot.slane %v3778, 7
    %v3781 = vrot.slane %v3780, 4
    %v3783 = vshrl.u32 %v3647, 16
    %v3785 = vrot.slane %v3783, 7
    %v3786 = vshll.u32 %v3647, 16
    %v3788 = vor.u32 %v3785, %v3786
    %v3789 = vsel %vm248, %v3781, %v3788
    %v3791 = vshrl.u32 %v3648, 16
    %v3793 = vrot.slane %v3791, 7
    %v3794 = vrot.slane %v3793, 4
    %v3796 = vshrl.u32 %v3649, 16
    %v3798 = vrot.slane %v3796, 7
    %v3799 = vshll.u32 %v3649, 16
    %v3801 = vor.u32 %v3798, %v3799
    %v3802 = vsel %vm248, %v3794, %v3801
    %v3804 = vshrl.u32 %v3650, 16
    %v3806 = vrot.slane %v3804, 7
    %v3807 = vrot.slane %v3806, 4
    %v3809 = vshrl.u32 %v3651, 16
    %v3811 = vrot.slane %v3809, 7
    %v3812 = vshll.u32 %v3651, 16
    %v3814 = vor.u32 %v3811, %v3812
    %v3815 = vsel %vm248, %v3807, %v3814
    %v3817 = vshrl.u32 %v3652, 16
    %v3819 = vrot.slane %v3817, 7
    %v3820 = vrot.slane %v3819, 4
    %v3822 = vshrl.u32 %v3653, 16
    %v3824 = vrot.slane %v3822, 7
    %v3825 = vshll.u32 %v3653, 16
    %v3827 = vor.u32 %v3824, %v3825
    %v3828 = vsel %vm248, %v3820, %v3827
    %v3830 = vshrl.u32 %v3654, 16
    %v3832 = vrot.slane %v3830, 7
    %v3833 = vrot.slane %v3832, 4
    %v3835 = vshrl.u32 %v3655, 16
    %v3837 = vrot.slane %v3835, 7
    %v3838 = vshll.u32 %v3655, 16
    %v3840 = vor.u32 %v3837, %v3838
    %v3841 = vsel %vm248, %v3833, %v3840
    %v3843 = vshrl.u32 %v3656, 16
    %v3845 = vrot.slane %v3843, 7
    %v3846 = vrot.slane %v3845, 4
    %v3848 = vshrl.u32 %v3657, 16
    %v3850 = vrot.slane %v3848, 7
    %v3851 = vshll.u32 %v3657, 16
    %v3853 = vor.u32 %v3850, %v3851
    %v3854 = vsel %vm248, %v3846, %v3853
    %v3856 = vshrl.u32 %v3658, 16
    %v3858 = vrot.slane %v3856, 7
    %v3859 = vrot.slane %v3858, 4
    %v3861 = vshrl.u32 %v3659, 16
    %v3863 = vrot.slane %v3861, 7
    %v3864 = vshll.u32 %v3659, 16
    %v3866 = vor.u32 %v3863, %v3864
    %v3867 = vsel %vm248, %v3859, %v3866
    %3884 = vst [vmem:[#allocation4] sm:$0xf] %v3672
    %3885 = vst [vmem:[#allocation4 + $0x24] sm:$0xf] %v3685
    %3886 = vst [vmem:[#allocation4 + $0x48] sm:$0xf] %v3698
    %3887 = vst [vmem:[#allocation4 + $0x6c] sm:$0xf] %v3711
    %3888 = vst [vmem:[#allocation4 + $0x90] sm:$0xf] %v3724
    %3889 = vst [vmem:[#allocation4 + $0xb4] sm:$0xf] %v3737
    %3890 = vst [vmem:[#allocation4 + $0xd8] sm:$0xf] %v3750
    %3891 = vst [vmem:[#allocation4 + $0xfc] sm:$0xf] %v3763
    %3892 = vst [vmem:[#allocation4 + $0x120] sm:$0xf] %v3776
    %3893 = vst [vmem:[#allocation4 + $0x144] sm:$0xf] %v3789
    %3894 = vst [vmem:[#allocation4 + $0x168] sm:$0xf] %v3802
    %3895 = vst [vmem:[#allocation4 + $0x18c] sm:$0xf] %v3815
    %3896 = vst [vmem:[#allocation4 + $0x1b0] sm:$0xf] %v3828
    %3897 = vst [vmem:[#allocation4 + $0x1d4] sm:$0xf] %v3841
    %3898 = vst [vmem:[#allocation4 + $0x1f8] sm:$0xf] %v3854
    %3899 = vst [vmem:[#allocation4 + $0x21c] sm:$0xf] %v3867
    %v3900 = vld [vmem:[#allocation3 + $0x4] sm:$0xf]
    %v3901 = vld [vmem:[#allocation3 + $0x10] sm:$0xf]
    %v3902 = vld [vmem:[#allocation3 + $0x1c] sm:$0xf]
    %v3903 = vld [vmem:[#allocation3 + $0x28] sm:$0xf]
    %v3904 = vld [vmem:[#allocation3 + $0x34] sm:$0xf]
    %v3905 = vld [vmem:[#allocation3 + $0x40] sm:$0xf]
    %v3906 = vld [vmem:[#allocation3 + $0x4c] sm:$0xf]
    %v3907 = vld [vmem:[#allocation3 + $0x58] sm:$0xf]
    %v3908 = vld [vmem:[#allocation3 + $0x7c] sm:$0xf]
    %v3909 = vld [vmem:[#allocation3 + $0x88] sm:$0xf]
    %v3910 = vld [vmem:[#allocation3 + $0x94] sm:$0xf]
    %v3911 = vld [vmem:[#allocation3 + $0xa0] sm:$0xf]
    %v3912 = vld [vmem:[#allocation3 + $0xac] sm:$0xf]
    %v3913 = vld [vmem:[#allocation3 + $0xb8] sm:$0xf]
    %v3914 = vld [vmem:[#allocation3 + $0xc4] sm:$0xf]
    %v3915 = vld [vmem:[#allocation3 + $0xd0] sm:$0xf]
    %3916 = vst [vmem:[#allocation4 + $0x4] sm:$0xf] %v3900
    %3917 = vst [vmem:[#allocation4 + $0x28] sm:$0xf] %v3901
    %3918 = vst [vmem:[#allocation4 + $0x4c] sm:$0xf] %v3902
    %3919 = vst [vmem:[#allocation4 + $0x70] sm:$0xf] %v3903
    %3920 = vst [vmem:[#allocation4 + $0x94] sm:$0xf] %v3904
    %3921 = vst [vmem:[#allocation4 + $0xb8] sm:$0xf] %v3905
    %3922 = vst [vmem:[#allocation4 + $0xdc] sm:$0xf] %v3906
    %3923 = vst [vmem:[#allocation4 + $0x100] sm:$0xf] %v3907
    %3924 = vst [vmem:[#allocation4 + $0x124] sm:$0xf] %v3908
    %3925 = vst [vmem:[#allocation4 + $0x148] sm:$0xf] %v3909
    %3926 = vst [vmem:[#allocation4 + $0x16c] sm:$0xf] %v3910
    %3927 = vst [vmem:[#allocation4 + $0x190] sm:$0xf] %v3911
    %3928 = vst [vmem:[#allocation4 + $0x1b4] sm:$0xf] %v3912
    %3929 = vst [vmem:[#allocation4 + $0x1d8] sm:$0xf] %v3913
    %3930 = vst [vmem:[#allocation4 + $0x1fc] sm:$0xf] %v3914
    %3931 = vst [vmem:[#allocation4 + $0x220] sm:$0xf] %v3915
    %v3932 = vld [vmem:[#allocation3 + $0x4] sm:$0xf]
    %v3933 = vld [vmem:[#allocation3 + $0x8] sm:$0x1]
    %v3934 = vld [vmem:[#allocation3 + $0x10] sm:$0xf]
    %v3935 = vld [vmem:[#allocation3 + $0x14] sm:$0x1]
    %v3936 = vld [vmem:[#allocation3 + $0x1c] sm:$0xf]
    %v3937 = vld [vmem:[#allocation3 + $0x20] sm:$0x1]
    %v3938 = vld [vmem:[#allocation3 + $0x28] sm:$0xf]
    %v3939 = vld [vmem:[#allocation3 + $0x2c] sm:$0x1]
    %v3940 = vld [vmem:[#allocation3 + $0x34] sm:$0xf]
    %v3941 = vld [vmem:[#allocation3 + $0x38] sm:$0x1]
    %v3942 = vld [vmem:[#allocation3 + $0x40] sm:$0xf]
    %v3943 = vld [vmem:[#allocation3 + $0x44] sm:$0x1]
    %v3944 = vld [vmem:[#allocation3 + $0x4c] sm:$0xf]
    %v3945 = vld [vmem:[#allocation3 + $0x50] sm:$0x1]
    %v3946 = vld [vmem:[#allocation3 + $0x58] sm:$0xf]
    %v3947 = vld [vmem:[#allocation3 + $0x5c] sm:$0x1]
    %v3948 = vld [vmem:[#allocation3 + $0x7c] sm:$0xf]
    %v3949 = vld [vmem:[#allocation3 + $0x80] sm:$0x1]
    %v3950 = vld [vmem:[#allocation3 + $0x88] sm:$0xf]
    %v3951 = vld [vmem:[#allocation3 + $0x8c] sm:$0x1]
    %v3952 = vld [vmem:[#allocation3 + $0x94] sm:$0xf]
    %v3953 = vld [vmem:[#allocation3 + $0x98] sm:$0x1]
    %v3954 = vld [vmem:[#allocation3 + $0xa0] sm:$0xf]
    %v3955 = vld [vmem:[#allocation3 + $0xa4] sm:$0x1]
    %v3956 = vld [vmem:[#allocation3 + $0xac] sm:$0xf]
    %v3957 = vld [vmem:[#allocation3 + $0xb0] sm:$0x1]
    %v3958 = vld [vmem:[#allocation3 + $0xb8] sm:$0xf]
    %v3959 = vld [vmem:[#allocation3 + $0xbc] sm:$0x1]
    %v3960 = vld [vmem:[#allocation3 + $0xc4] sm:$0xf]
    %v3961 = vld [vmem:[#allocation3 + $0xc8] sm:$0x1]
    %v3962 = vld [vmem:[#allocation3 + $0xd0] sm:$0xf]
    %v3963 = vld [vmem:[#allocation3 + $0xd4] sm:$0x1]
    %v3965 = vshrl.u32 %v3932, 16
    %v3967 = vrot.slane %v3965, 4
    %v3968 = vshll.u32 %v3932, 16
    %v3970 = vrot.slane %v3968, 5
    %v3971 = vor.u32 %v3967, %v3970
    %v3972 = vrot.slane %v3971, 4
    %v3974 = vshll.u32 %v3933, 16
    %v3976 = vrot.slane %v3974, 5
    %v3977 = vsel %vm555, %v3972, %v3976
    %v3979 = vshrl.u32 %v3934, 16
    %v3981 = vrot.slane %v3979, 4
    %v3982 = vshll.u32 %v3934, 16
    %v3984 = vrot.slane %v3982, 5
    %v3985 = vor.u32 %v3981, %v3984
    %v3986 = vrot.slane %v3985, 4
    %v3988 = vshll.u32 %v3935, 16
    %v3990 = vrot.slane %v3988, 5
    %v3991 = vsel %vm555, %v3986, %v3990
    %v3993 = vshrl.u32 %v3936, 16
    %v3995 = vrot.slane %v3993, 4
    %v3996 = vshll.u32 %v3936, 16
    %v3998 = vrot.slane %v3996, 5
    %v3999 = vor.u32 %v3995, %v3998
    %v4000 = vrot.slane %v3999, 4
    %v4002 = vshll.u32 %v3937, 16
    %v4004 = vrot.slane %v4002, 5
    %v4005 = vsel %vm555, %v4000, %v4004
    %v4007 = vshrl.u32 %v3938, 16
    %v4009 = vrot.slane %v4007, 4
    %v4010 = vshll.u32 %v3938, 16
    %v4012 = vrot.slane %v4010, 5
    %v4013 = vor.u32 %v4009, %v4012
    %v4014 = vrot.slane %v4013, 4
    %v4016 = vshll.u32 %v3939, 16
    %v4018 = vrot.slane %v4016, 5
    %v4019 = vsel %vm555, %v4014, %v4018
    %v4021 = vshrl.u32 %v3940, 16
    %v4023 = vrot.slane %v4021, 4
    %v4024 = vshll.u32 %v3940, 16
    %v4026 = vrot.slane %v4024, 5
    %v4027 = vor.u32 %v4023, %v4026
    %v4028 = vrot.slane %v4027, 4
    %v4030 = vshll.u32 %v3941, 16
    %v4032 = vrot.slane %v4030, 5
    %v4033 = vsel %vm555, %v4028, %v4032
    %v4035 = vshrl.u32 %v3942, 16
    %v4037 = vrot.slane %v4035, 4
    %v4038 = vshll.u32 %v3942, 16
    %v4040 = vrot.slane %v4038, 5
    %v4041 = vor.u32 %v4037, %v4040
    %v4042 = vrot.slane %v4041, 4
    %v4044 = vshll.u32 %v3943, 16
    %v4046 = vrot.slane %v4044, 5
    %v4047 = vsel %vm555, %v4042, %v4046
    %v4049 = vshrl.u32 %v3944, 16
    %v4051 = vrot.slane %v4049, 4
    %v4052 = vshll.u32 %v3944, 16
    %v4054 = vrot.slane %v4052, 5
    %v4055 = vor.u32 %v4051, %v4054
    %v4056 = vrot.slane %v4055, 4
    %v4058 = vshll.u32 %v3945, 16
    %v4060 = vrot.slane %v4058, 5
    %v4061 = vsel %vm555, %v4056, %v4060
    %v4063 = vshrl.u32 %v3946, 16
    %v4065 = vrot.slane %v4063, 4
    %v4066 = vshll.u32 %v3946, 16
    %v4068 = vrot.slane %v4066, 5
    %v4069 = vor.u32 %v4065, %v4068
    %v4070 = vrot.slane %v4069, 4
    %v4072 = vshll.u32 %v3947, 16
    %v4074 = vrot.slane %v4072, 5
    %v4075 = vsel %vm555, %v4070, %v4074
    %v4077 = vshrl.u32 %v3948, 16
    %v4079 = vrot.slane %v4077, 4
    %v4080 = vshll.u32 %v3948, 16
    %v4082 = vrot.slane %v4080, 5
    %v4083 = vor.u32 %v4079, %v4082
    %v4084 = vrot.slane %v4083, 4
    %v4086 = vshll.u32 %v3949, 16
    %v4088 = vrot.slane %v4086, 5
    %v4089 = vsel %vm555, %v4084, %v4088
    %v4091 = vshrl.u32 %v3950, 16
    %v4093 = vrot.slane %v4091, 4
    %v4094 = vshll.u32 %v3950, 16
    %v4096 = vrot.slane %v4094, 5
    %v4097 = vor.u32 %v4093, %v4096
    %v4098 = vrot.slane %v4097, 4
    %v4100 = vshll.u32 %v3951, 16
    %v4102 = vrot.slane %v4100, 5
    %v4103 = vsel %vm555, %v4098, %v4102
    %v4105 = vshrl.u32 %v3952, 16
    %v4107 = vrot.slane %v4105, 4
    %v4108 = vshll.u32 %v3952, 16
    %v4110 = vrot.slane %v4108, 5
    %v4111 = vor.u32 %v4107, %v4110
    %v4112 = vrot.slane %v4111, 4
    %v4114 = vshll.u32 %v3953, 16
    %v4116 = vrot.slane %v4114, 5
    %v4117 = vsel %vm555, %v4112, %v4116
    %v4119 = vshrl.u32 %v3954, 16
    %v4121 = vrot.slane %v4119, 4
    %v4122 = vshll.u32 %v3954, 16
    %v4124 = vrot.slane %v4122, 5
    %v4125 = vor.u32 %v4121, %v4124
    %v4126 = vrot.slane %v4125, 4
    %v4128 = vshll.u32 %v3955, 16
    %v4130 = vrot.slane %v4128, 5
    %v4131 = vsel %vm555, %v4126, %v4130
    %v4133 = vshrl.u32 %v3956, 16
    %v4135 = vrot.slane %v4133, 4
    %v4136 = vshll.u32 %v3956, 16
    %v4138 = vrot.slane %v4136, 5
    %v4139 = vor.u32 %v4135, %v4138
    %v4140 = vrot.slane %v4139, 4
    %v4142 = vshll.u32 %v3957, 16
    %v4144 = vrot.slane %v4142, 5
    %v4145 = vsel %vm555, %v4140, %v4144
    %v4147 = vshrl.u32 %v3958, 16
    %v4149 = vrot.slane %v4147, 4
    %v4150 = vshll.u32 %v3958, 16
    %v4152 = vrot.slane %v4150, 5
    %v4153 = vor.u32 %v4149, %v4152
    %v4154 = vrot.slane %v4153, 4
    %v4156 = vshll.u32 %v3959, 16
    %v4158 = vrot.slane %v4156, 5
    %v4159 = vsel %vm555, %v4154, %v4158
    %v4161 = vshrl.u32 %v3960, 16
    %v4163 = vrot.slane %v4161, 4
    %v4164 = vshll.u32 %v3960, 16
    %v4166 = vrot.slane %v4164, 5
    %v4167 = vor.u32 %v4163, %v4166
    %v4168 = vrot.slane %v4167, 4
    %v4170 = vshll.u32 %v3961, 16
    %v4172 = vrot.slane %v4170, 5
    %v4173 = vsel %vm555, %v4168, %v4172
    %v4175 = vshrl.u32 %v3962, 16
    %v4177 = vrot.slane %v4175, 4
    %v4178 = vshll.u32 %v3962, 16
    %v4180 = vrot.slane %v4178, 5
    %v4181 = vor.u32 %v4177, %v4180
    %v4182 = vrot.slane %v4181, 4
    %v4184 = vshll.u32 %v3963, 16
    %v4186 = vrot.slane %v4184, 5
    %v4187 = vsel %vm555, %v4182, %v4186
    %4204 = vst [vmem:[#allocation4 + $0x8] sm:$0xf] %v3977
    %4205 = vst [vmem:[#allocation4 + $0x2c] sm:$0xf] %v3991
    %4206 = vst [vmem:[#allocation4 + $0x50] sm:$0xf] %v4005
    %4207 = vst [vmem:[#allocation4 + $0x74] sm:$0xf] %v4019
    %4208 = vst [vmem:[#allocation4 + $0x98] sm:$0xf] %v4033
    %4209 = vst [vmem:[#allocation4 + $0xbc] sm:$0xf] %v4047
    %4210 = vst [vmem:[#allocation4 + $0xe0] sm:$0xf] %v4061
    %4211 = vst [vmem:[#allocation4 + $0x104] sm:$0xf] %v4075
    %4212 = vst [vmem:[#allocation4 + $0x128] sm:$0xf] %v4089
    %4213 = vst [vmem:[#allocation4 + $0x14c] sm:$0xf] %v4103
    %4214 = vst [vmem:[#allocation4 + $0x170] sm:$0xf] %v4117
    %4215 = vst [vmem:[#allocation4 + $0x194] sm:$0xf] %v4131
    %4216 = vst [vmem:[#allocation4 + $0x1b8] sm:$0xf] %v4145
    %4217 = vst [vmem:[#allocation4 + $0x1dc] sm:$0xf] %v4159
    %4218 = vst [vmem:[#allocation4 + $0x200] sm:$0xf] %v4173
    %4219 = vst [vmem:[#allocation4 + $0x224] sm:$0xf] %v4187
    %v4220 = vld [vmem:[%s3611] sm:$0x8]
    %v4221 = vld [vmem:[%s3611 + $0x4] sm:$0xf]
    %v4222 = vld [vmem:[%s3611 + $0xc] sm:$0x8]
    %v4223 = vld [vmem:[%s3611 + $0x10] sm:$0xf]
    %v4224 = vld [vmem:[%s3611 + $0x18] sm:$0x8]
    %v4225 = vld [vmem:[%s3611 + $0x1c] sm:$0xf]
    %v4226 = vld [vmem:[%s3611 + $0x24] sm:$0x8]
    %v4227 = vld [vmem:[%s3611 + $0x28] sm:$0xf]
    %v4228 = vld [vmem:[%s3611 + $0x30] sm:$0x8]
    %v4229 = vld [vmem:[%s3611 + $0x34] sm:$0xf]
    %v4230 = vld [vmem:[%s3611 + $0x3c] sm:$0x8]
    %v4231 = vld [vmem:[%s3611 + $0x40] sm:$0xf]
    %v4232 = vld [vmem:[%s3611 + $0x48] sm:$0x8]
    %v4233 = vld [vmem:[%s3611 + $0x4c] sm:$0xf]
    %v4234 = vld [vmem:[%s3611 + $0x54] sm:$0x8]
    %v4235 = vld [vmem:[%s3611 + $0x58] sm:$0xf]
    %v4236 = vld [vmem:[%s3611 + $0x78] sm:$0x8]
    %v4237 = vld [vmem:[%s3611 + $0x7c] sm:$0xf]
    %v4238 = vld [vmem:[%s3611 + $0x84] sm:$0x8]
    %v4239 = vld [vmem:[%s3611 + $0x88] sm:$0xf]
    %v4240 = vld [vmem:[%s3611 + $0x90] sm:$0x8]
    %v4241 = vld [vmem:[%s3611 + $0x94] sm:$0xf]
    %v4242 = vld [vmem:[%s3611 + $0x9c] sm:$0x8]
    %v4243 = vld [vmem:[%s3611 + $0xa0] sm:$0xf]
    %v4244 = vld [vmem:[%s3611 + $0xa8] sm:$0x8]
    %v4245 = vld [vmem:[%s3611 + $0xac] sm:$0xf]
    %v4246 = vld [vmem:[%s3611 + $0xb4] sm:$0x8]
    %v4247 = vld [vmem:[%s3611 + $0xb8] sm:$0xf]
    %v4248 = vld [vmem:[%s3611 + $0xc0] sm:$0x8]
    %v4249 = vld [vmem:[%s3611 + $0xc4] sm:$0xf]
    %v4250 = vld [vmem:[%s3611 + $0xcc] sm:$0x8]
    %v4251 = vld [vmem:[%s3611 + $0xd0] sm:$0xf]
    %v4253 = vshrl.u32 %v4220, 16
    %v4255 = vrot.slane %v4253, 7
    %v4256 = vrot.slane %v4255, 4
    %v4258 = vshrl.u32 %v4221, 16
    %v4260 = vrot.slane %v4258, 7
    %v4261 = vshll.u32 %v4221, 16
    %v4263 = vor.u32 %v4260, %v4261
    %v4264 = vsel %vm248, %v4256, %v4263
    %v4266 = vshrl.u32 %v4222, 16
    %v4268 = vrot.slane %v4266, 7
    %v4269 = vrot.slane %v4268, 4
    %v4271 = vshrl.u32 %v4223, 16
    %v4273 = vrot.slane %v4271, 7
    %v4274 = vshll.u32 %v4223, 16
    %v4276 = vor.u32 %v4273, %v4274
    %v4277 = vsel %vm248, %v4269, %v4276
    %v4279 = vshrl.u32 %v4224, 16
    %v4281 = vrot.slane %v4279, 7
    %v4282 = vrot.slane %v4281, 4
    %v4284 = vshrl.u32 %v4225, 16
    %v4286 = vrot.slane %v4284, 7
    %v4287 = vshll.u32 %v4225, 16
    %v4289 = vor.u32 %v4286, %v4287
    %v4290 = vsel %vm248, %v4282, %v4289
    %v4292 = vshrl.u32 %v4226, 16
    %v4294 = vrot.slane %v4292, 7
    %v4295 = vrot.slane %v4294, 4
    %v4297 = vshrl.u32 %v4227, 16
    %v4299 = vrot.slane %v4297, 7
    %v4300 = vshll.u32 %v4227, 16
    %v4302 = vor.u32 %v4299, %v4300
    %v4303 = vsel %vm248, %v4295, %v4302
    %v4305 = vshrl.u32 %v4228, 16
    %v4307 = vrot.slane %v4305, 7
    %v4308 = vrot.slane %v4307, 4
    %v4310 = vshrl.u32 %v4229, 16
    %v4312 = vrot.slane %v4310, 7
    %v4313 = vshll.u32 %v4229, 16
    %v4315 = vor.u32 %v4312, %v4313
    %v4316 = vsel %vm248, %v4308, %v4315
    %v4318 = vshrl.u32 %v4230, 16
    %v4320 = vrot.slane %v4318, 7
    %v4321 = vrot.slane %v4320, 4
    %v4323 = vshrl.u32 %v4231, 16
    %v4325 = vrot.slane %v4323, 7
    %v4326 = vshll.u32 %v4231, 16
    %v4328 = vor.u32 %v4325, %v4326
    %v4329 = vsel %vm248, %v4321, %v4328
    %v4331 = vshrl.u32 %v4232, 16
    %v4333 = vrot.slane %v4331, 7
    %v4334 = vrot.slane %v4333, 4
    %v4336 = vshrl.u32 %v4233, 16
    %v4338 = vrot.slane %v4336, 7
    %v4339 = vshll.u32 %v4233, 16
    %v4341 = vor.u32 %v4338, %v4339
    %v4342 = vsel %vm248, %v4334, %v4341
    %v4344 = vshrl.u32 %v4234, 16
    %v4346 = vrot.slane %v4344, 7
    %v4347 = vrot.slane %v4346, 4
    %v4349 = vshrl.u32 %v4235, 16
    %v4351 = vrot.slane %v4349, 7
    %v4352 = vshll.u32 %v4235, 16
    %v4354 = vor.u32 %v4351, %v4352
    %v4355 = vsel %vm248, %v4347, %v4354
    %v4357 = vshrl.u32 %v4236, 16
    %v4359 = vrot.slane %v4357, 7
    %v4360 = vrot.slane %v4359, 4
    %v4362 = vshrl.u32 %v4237, 16
    %v4364 = vrot.slane %v4362, 7
    %v4365 = vshll.u32 %v4237, 16
    %v4367 = vor.u32 %v4364, %v4365
    %v4368 = vsel %vm248, %v4360, %v4367
    %v4370 = vshrl.u32 %v4238, 16
    %v4372 = vrot.slane %v4370, 7
    %v4373 = vrot.slane %v4372, 4
    %v4375 = vshrl.u32 %v4239, 16
    %v4377 = vrot.slane %v4375, 7
    %v4378 = vshll.u32 %v4239, 16
    %v4380 = vor.u32 %v4377, %v4378
    %v4381 = vsel %vm248, %v4373, %v4380
    %v4383 = vshrl.u32 %v4240, 16
    %v4385 = vrot.slane %v4383, 7
    %v4386 = vrot.slane %v4385, 4
    %v4388 = vshrl.u32 %v4241, 16
    %v4390 = vrot.slane %v4388, 7
    %v4391 = vshll.u32 %v4241, 16
    %v4393 = vor.u32 %v4390, %v4391
    %v4394 = vsel %vm248, %v4386, %v4393
    %v4396 = vshrl.u32 %v4242, 16
    %v4398 = vrot.slane %v4396, 7
    %v4399 = vrot.slane %v4398, 4
    %v4401 = vshrl.u32 %v4243, 16
    %v4403 = vrot.slane %v4401, 7
    %v4404 = vshll.u32 %v4243, 16
    %v4406 = vor.u32 %v4403, %v4404
    %v4407 = vsel %vm248, %v4399, %v4406
    %v4409 = vshrl.u32 %v4244, 16
    %v4411 = vrot.slane %v4409, 7
    %v4412 = vrot.slane %v4411, 4
    %v4414 = vshrl.u32 %v4245, 16
    %v4416 = vrot.slane %v4414, 7
    %v4417 = vshll.u32 %v4245, 16
    %v4419 = vor.u32 %v4416, %v4417
    %v4420 = vsel %vm248, %v4412, %v4419
    %v4422 = vshrl.u32 %v4246, 16
    %v4424 = vrot.slane %v4422, 7
    %v4425 = vrot.slane %v4424, 4
    %v4427 = vshrl.u32 %v4247, 16
    %v4429 = vrot.slane %v4427, 7
    %v4430 = vshll.u32 %v4247, 16
    %v4432 = vor.u32 %v4429, %v4430
    %v4433 = vsel %vm248, %v4425, %v4432
    %v4435 = vshrl.u32 %v4248, 16
    %v4437 = vrot.slane %v4435, 7
    %v4438 = vrot.slane %v4437, 4
    %v4440 = vshrl.u32 %v4249, 16
    %v4442 = vrot.slane %v4440, 7
    %v4443 = vshll.u32 %v4249, 16
    %v4445 = vor.u32 %v4442, %v4443
    %v4446 = vsel %vm248, %v4438, %v4445
    %v4448 = vshrl.u32 %v4250, 16
    %v4450 = vrot.slane %v4448, 7
    %v4451 = vrot.slane %v4450, 4
    %v4453 = vshrl.u32 %v4251, 16
    %v4455 = vrot.slane %v4453, 7
    %v4456 = vshll.u32 %v4251, 16
    %v4458 = vor.u32 %v4455, %v4456
    %v4459 = vsel %vm248, %v4451, %v4458
    %4476 = vst [vmem:[#allocation4 + $0xc] sm:$0xf] %v4264
    %4477 = vst [vmem:[#allocation4 + $0x30] sm:$0xf] %v4277
    %4478 = vst [vmem:[#allocation4 + $0x54] sm:$0xf] %v4290
    %4479 = vst [vmem:[#allocation4 + $0x78] sm:$0xf] %v4303
    %4480 = vst [vmem:[#allocation4 + $0x9c] sm:$0xf] %v4316
    %4481 = vst [vmem:[#allocation4 + $0xc0] sm:$0xf] %v4329
    %4482 = vst [vmem:[#allocation4 + $0xe4] sm:$0xf] %v4342
    %4483 = vst [vmem:[#allocation4 + $0x108] sm:$0xf] %v4355
    %4484 = vst [vmem:[#allocation4 + $0x12c] sm:$0xf] %v4368
    %4485 = vst [vmem:[#allocation4 + $0x150] sm:$0xf] %v4381
    %4486 = vst [vmem:[#allocation4 + $0x174] sm:$0xf] %v4394
    %4487 = vst [vmem:[#allocation4 + $0x198] sm:$0xf] %v4407
    %4488 = vst [vmem:[#allocation4 + $0x1bc] sm:$0xf] %v4420
    %4489 = vst [vmem:[#allocation4 + $0x1e0] sm:$0xf] %v4433
    %4490 = vst [vmem:[#allocation4 + $0x204] sm:$0xf] %v4446
    %4491 = vst [vmem:[#allocation4 + $0x228] sm:$0xf] %v4459
    %v4492 = vld [vmem:[%s3611 + $0x4] sm:$0xf]
    %v4493 = vld [vmem:[%s3611 + $0x10] sm:$0xf]
    %v4494 = vld [vmem:[%s3611 + $0x1c] sm:$0xf]
    %v4495 = vld [vmem:[%s3611 + $0x28] sm:$0xf]
    %v4496 = vld [vmem:[%s3611 + $0x34] sm:$0xf]
    %v4497 = vld [vmem:[%s3611 + $0x40] sm:$0xf]
    %v4498 = vld [vmem:[%s3611 + $0x4c] sm:$0xf]
    %v4499 = vld [vmem:[%s3611 + $0x58] sm:$0xf]
    %v4500 = vld [vmem:[%s3611 + $0x7c] sm:$0xf]
    %v4501 = vld [vmem:[%s3611 + $0x88] sm:$0xf]
    %v4502 = vld [vmem:[%s3611 + $0x94] sm:$0xf]
    %v4503 = vld [vmem:[%s3611 + $0xa0] sm:$0xf]
    %v4504 = vld [vmem:[%s3611 + $0xac] sm:$0xf]
    %v4505 = vld [vmem:[%s3611 + $0xb8] sm:$0xf]
    %v4506 = vld [vmem:[%s3611 + $0xc4] sm:$0xf]
    %v4507 = vld [vmem:[%s3611 + $0xd0] sm:$0xf]
    %4508 = vst [vmem:[#allocation4 + $0x10] sm:$0xf] %v4492
    %4509 = vst [vmem:[#allocation4 + $0x34] sm:$0xf] %v4493
    %4510 = vst [vmem:[#allocation4 + $0x58] sm:$0xf] %v4494
    %4511 = vst [vmem:[#allocation4 + $0x7c] sm:$0xf] %v4495
    %4512 = vst [vmem:[#allocation4 + $0xa0] sm:$0xf] %v4496
    %4513 = vst [vmem:[#allocation4 + $0xc4] sm:$0xf] %v4497
    %4514 = vst [vmem:[#allocation4 + $0xe8] sm:$0xf] %v4498
    %4515 = vst [vmem:[#allocation4 + $0x10c] sm:$0xf] %v4499
    %4516 = vst [vmem:[#allocation4 + $0x130] sm:$0xf] %v4500
    %4517 = vst [vmem:[#allocation4 + $0x154] sm:$0xf] %v4501
    %4518 = vst [vmem:[#allocation4 + $0x178] sm:$0xf] %v4502
    %4519 = vst [vmem:[#allocation4 + $0x19c] sm:$0xf] %v4503
    %4520 = vst [vmem:[#allocation4 + $0x1c0] sm:$0xf] %v4504
    %4521 = vst [vmem:[#allocation4 + $0x1e4] sm:$0xf] %v4505
    %4522 = vst [vmem:[#allocation4 + $0x208] sm:$0xf] %v4506
    %4523 = vst [vmem:[#allocation4 + $0x22c] sm:$0xf] %v4507
    %v4524 = vld [vmem:[%s3611 + $0x4] sm:$0xf]
    %v4525 = vld [vmem:[%s3611 + $0x8] sm:$0x1]
    %v4526 = vld [vmem:[%s3611 + $0x10] sm:$0xf]
    %v4527 = vld [vmem:[%s3611 + $0x14] sm:$0x1]
    %v4528 = vld [vmem:[%s3611 + $0x1c] sm:$0xf]
    %v4529 = vld [vmem:[%s3611 + $0x20] sm:$0x1]
    %v4530 = vld [vmem:[%s3611 + $0x28] sm:$0xf]
    %v4531 = vld [vmem:[%s3611 + $0x2c] sm:$0x1]
    %v4532 = vld [vmem:[%s3611 + $0x34] sm:$0xf]
    %v4533 = vld [vmem:[%s3611 + $0x38] sm:$0x1]
    %v4534 = vld [vmem:[%s3611 + $0x40] sm:$0xf]
    %v4535 = vld [vmem:[%s3611 + $0x44] sm:$0x1]
    %v4536 = vld [vmem:[%s3611 + $0x4c] sm:$0xf]
    %v4537 = vld [vmem:[%s3611 + $0x50] sm:$0x1]
    %v4538 = vld [vmem:[%s3611 + $0x58] sm:$0xf]
    %v4539 = vld [vmem:[%s3611 + $0x5c] sm:$0x1]
    %v4540 = vld [vmem:[%s3611 + $0x7c] sm:$0xf]
    %v4541 = vld [vmem:[%s3611 + $0x80] sm:$0x1]
    %v4542 = vld [vmem:[%s3611 + $0x88] sm:$0xf]
    %v4543 = vld [vmem:[%s3611 + $0x8c] sm:$0x1]
    %v4544 = vld [vmem:[%s3611 + $0x94] sm:$0xf]
    %v4545 = vld [vmem:[%s3611 + $0x98] sm:$0x1]
    %v4546 = vld [vmem:[%s3611 + $0xa0] sm:$0xf]
    %v4547 = vld [vmem:[%s3611 + $0xa4] sm:$0x1]
    %v4548 = vld [vmem:[%s3611 + $0xac] sm:$0xf]
    %v4549 = vld [vmem:[%s3611 + $0xb0] sm:$0x1]
    %v4550 = vld [vmem:[%s3611 + $0xb8] sm:$0xf]
    %v4551 = vld [vmem:[%s3611 + $0xbc] sm:$0x1]
    %v4552 = vld [vmem:[%s3611 + $0xc4] sm:$0xf]
    %v4553 = vld [vmem:[%s3611 + $0xc8] sm:$0x1]
    %v4554 = vld [vmem:[%s3611 + $0xd0] sm:$0xf]
    %v4555 = vld [vmem:[%s3611 + $0xd4] sm:$0x1]
    %v4557 = vshrl.u32 %v4524, 16
    %v4559 = vrot.slane %v4557, 4
    %v4560 = vshll.u32 %v4524, 16
    %v4562 = vrot.slane %v4560, 5
    %v4563 = vor.u32 %v4559, %v4562
    %v4564 = vrot.slane %v4563, 4
    %v4566 = vshll.u32 %v4525, 16
    %v4568 = vrot.slane %v4566, 5
    %v4569 = vsel %vm555, %v4564, %v4568
    %v4571 = vshrl.u32 %v4526, 16
    %v4573 = vrot.slane %v4571, 4
    %v4574 = vshll.u32 %v4526, 16
    %v4576 = vrot.slane %v4574, 5
    %v4577 = vor.u32 %v4573, %v4576
    %v4578 = vrot.slane %v4577, 4
    %v4580 = vshll.u32 %v4527, 16
    %v4582 = vrot.slane %v4580, 5
    %v4583 = vsel %vm555, %v4578, %v4582
    %v4585 = vshrl.u32 %v4528, 16
    %v4587 = vrot.slane %v4585, 4
    %v4588 = vshll.u32 %v4528, 16
    %v4590 = vrot.slane %v4588, 5
    %v4591 = vor.u32 %v4587, %v4590
    %v4592 = vrot.slane %v4591, 4
    %v4594 = vshll.u32 %v4529, 16
    %v4596 = vrot.slane %v4594, 5
    %v4597 = vsel %vm555, %v4592, %v4596
    %v4599 = vshrl.u32 %v4530, 16
    %v4601 = vrot.slane %v4599, 4
    %v4602 = vshll.u32 %v4530, 16
    %v4604 = vrot.slane %v4602, 5
    %v4605 = vor.u32 %v4601, %v4604
    %v4606 = vrot.slane %v4605, 4
    %v4608 = vshll.u32 %v4531, 16
    %v4610 = vrot.slane %v4608, 5
    %v4611 = vsel %vm555, %v4606, %v4610
    %v4613 = vshrl.u32 %v4532, 16
    %v4615 = vrot.slane %v4613, 4
    %v4616 = vshll.u32 %v4532, 16
    %v4618 = vrot.slane %v4616, 5
    %v4619 = vor.u32 %v4615, %v4618
    %v4620 = vrot.slane %v4619, 4
    %v4622 = vshll.u32 %v4533, 16
    %v4624 = vrot.slane %v4622, 5
    %v4625 = vsel %vm555, %v4620, %v4624
    %v4627 = vshrl.u32 %v4534, 16
    %v4629 = vrot.slane %v4627, 4
    %v4630 = vshll.u32 %v4534, 16
    %v4632 = vrot.slane %v4630, 5
    %v4633 = vor.u32 %v4629, %v4632
    %v4634 = vrot.slane %v4633, 4
    %v4636 = vshll.u32 %v4535, 16
    %v4638 = vrot.slane %v4636, 5
    %v4639 = vsel %vm555, %v4634, %v4638
    %v4641 = vshrl.u32 %v4536, 16
    %v4643 = vrot.slane %v4641, 4
    %v4644 = vshll.u32 %v4536, 16
    %v4646 = vrot.slane %v4644, 5
    %v4647 = vor.u32 %v4643, %v4646
    %v4648 = vrot.slane %v4647, 4
    %v4650 = vshll.u32 %v4537, 16
    %v4652 = vrot.slane %v4650, 5
    %v4653 = vsel %vm555, %v4648, %v4652
    %v4655 = vshrl.u32 %v4538, 16
    %v4657 = vrot.slane %v4655, 4
    %v4658 = vshll.u32 %v4538, 16
    %v4660 = vrot.slane %v4658, 5
    %v4661 = vor.u32 %v4657, %v4660
    %v4662 = vrot.slane %v4661, 4
    %v4664 = vshll.u32 %v4539, 16
    %v4666 = vrot.slane %v4664, 5
    %v4667 = vsel %vm555, %v4662, %v4666
    %v4669 = vshrl.u32 %v4540, 16
    %v4671 = vrot.slane %v4669, 4
    %v4672 = vshll.u32 %v4540, 16
    %v4674 = vrot.slane %v4672, 5
    %v4675 = vor.u32 %v4671, %v4674
    %v4676 = vrot.slane %v4675, 4
    %v4678 = vshll.u32 %v4541, 16
    %v4680 = vrot.slane %v4678, 5
    %v4681 = vsel %vm555, %v4676, %v4680
    %v4683 = vshrl.u32 %v4542, 16
    %v4685 = vrot.slane %v4683, 4
    %v4686 = vshll.u32 %v4542, 16
    %v4688 = vrot.slane %v4686, 5
    %v4689 = vor.u32 %v4685, %v4688
    %v4690 = vrot.slane %v4689, 4
    %v4692 = vshll.u32 %v4543, 16
    %v4694 = vrot.slane %v4692, 5
    %v4695 = vsel %vm555, %v4690, %v4694
    %v4697 = vshrl.u32 %v4544, 16
    %v4699 = vrot.slane %v4697, 4
    %v4700 = vshll.u32 %v4544, 16
    %v4702 = vrot.slane %v4700, 5
    %v4703 = vor.u32 %v4699, %v4702
    %v4704 = vrot.slane %v4703, 4
    %v4706 = vshll.u32 %v4545, 16
    %v4708 = vrot.slane %v4706, 5
    %v4709 = vsel %vm555, %v4704, %v4708
    %v4711 = vshrl.u32 %v4546, 16
    %v4713 = vrot.slane %v4711, 4
    %v4714 = vshll.u32 %v4546, 16
    %v4716 = vrot.slane %v4714, 5
    %v4717 = vor.u32 %v4713, %v4716
    %v4718 = vrot.slane %v4717, 4
    %v4720 = vshll.u32 %v4547, 16
    %v4722 = vrot.slane %v4720, 5
    %v4723 = vsel %vm555, %v4718, %v4722
    %v4725 = vshrl.u32 %v4548, 16
    %v4727 = vrot.slane %v4725, 4
    %v4728 = vshll.u32 %v4548, 16
    %v4730 = vrot.slane %v4728, 5
    %v4731 = vor.u32 %v4727, %v4730
    %v4732 = vrot.slane %v4731, 4
    %v4734 = vshll.u32 %v4549, 16
    %v4736 = vrot.slane %v4734, 5
    %v4737 = vsel %vm555, %v4732, %v4736
    %v4739 = vshrl.u32 %v4550, 16
    %v4741 = vrot.slane %v4739, 4
    %v4742 = vshll.u32 %v4550, 16
    %v4744 = vrot.slane %v4742, 5
    %v4745 = vor.u32 %v4741, %v4744
    %v4746 = vrot.slane %v4745, 4
    %v4748 = vshll.u32 %v4551, 16
    %v4750 = vrot.slane %v4748, 5
    %v4751 = vsel %vm555, %v4746, %v4750
    %v4753 = vshrl.u32 %v4552, 16
    %v4755 = vrot.slane %v4753, 4
    %v4756 = vshll.u32 %v4552, 16
    %v4758 = vrot.slane %v4756, 5
    %v4759 = vor.u32 %v4755, %v4758
    %v4760 = vrot.slane %v4759, 4
    %v4762 = vshll.u32 %v4553, 16
    %v4764 = vrot.slane %v4762, 5
    %v4765 = vsel %vm555, %v4760, %v4764
    %v4767 = vshrl.u32 %v4554, 16
    %v4769 = vrot.slane %v4767, 4
    %v4770 = vshll.u32 %v4554, 16
    %v4772 = vrot.slane %v4770, 5
    %v4773 = vor.u32 %v4769, %v4772
    %v4774 = vrot.slane %v4773, 4
    %v4776 = vshll.u32 %v4555, 16
    %v4778 = vrot.slane %v4776, 5
    %v4779 = vsel %vm555, %v4774, %v4778
    %4796 = vst [vmem:[#allocation4 + $0x14] sm:$0xf] %v4569
    %4797 = vst [vmem:[#allocation4 + $0x38] sm:$0xf] %v4583
    %4798 = vst [vmem:[#allocation4 + $0x5c] sm:$0xf] %v4597
    %4799 = vst [vmem:[#allocation4 + $0x80] sm:$0xf] %v4611
    %4800 = vst [vmem:[#allocation4 + $0xa4] sm:$0xf] %v4625
    %4801 = vst [vmem:[#allocation4 + $0xc8] sm:$0xf] %v4639
    %4802 = vst [vmem:[#allocation4 + $0xec] sm:$0xf] %v4653
    %4803 = vst [vmem:[#allocation4 + $0x110] sm:$0xf] %v4667
    %4804 = vst [vmem:[#allocation4 + $0x134] sm:$0xf] %v4681
    %4805 = vst [vmem:[#allocation4 + $0x158] sm:$0xf] %v4695
    %4806 = vst [vmem:[#allocation4 + $0x17c] sm:$0xf] %v4709
    %4807 = vst [vmem:[#allocation4 + $0x1a0] sm:$0xf] %v4723
    %4808 = vst [vmem:[#allocation4 + $0x1c4] sm:$0xf] %v4737
    %4809 = vst [vmem:[#allocation4 + $0x1e8] sm:$0xf] %v4751
    %4810 = vst [vmem:[#allocation4 + $0x20c] sm:$0xf] %v4765
    %4811 = vst [vmem:[#allocation4 + $0x230] sm:$0xf] %v4779
    %s4812 = scalar_lea.vmem [#allocation3], 24
    %v4813 = vld [vmem:[%s4812] sm:$0x8]
    %v4814 = vld [vmem:[%s4812 + $0x4] sm:$0xf]
    %v4815 = vld [vmem:[%s4812 + $0xc] sm:$0x8]
    %v4816 = vld [vmem:[%s4812 + $0x10] sm:$0xf]
    %v4817 = vld [vmem:[%s4812 + $0x18] sm:$0x8]
    %v4818 = vld [vmem:[%s4812 + $0x1c] sm:$0xf]
    %v4819 = vld [vmem:[%s4812 + $0x24] sm:$0x8]
    %v4820 = vld [vmem:[%s4812 + $0x28] sm:$0xf]
    %v4821 = vld [vmem:[%s4812 + $0x30] sm:$0x8]
    %v4822 = vld [vmem:[%s4812 + $0x34] sm:$0xf]
    %v4823 = vld [vmem:[%s4812 + $0x3c] sm:$0x8]
    %v4824 = vld [vmem:[%s4812 + $0x40] sm:$0xf]
    %v4825 = vld [vmem:[%s4812 + $0x48] sm:$0x8]
    %v4826 = vld [vmem:[%s4812 + $0x4c] sm:$0xf]
    %v4827 = vld [vmem:[%s4812 + $0x54] sm:$0x8]
    %v4828 = vld [vmem:[%s4812 + $0x58] sm:$0xf]
    %v4829 = vld [vmem:[%s4812 + $0x78] sm:$0x8]
    %v4830 = vld [vmem:[%s4812 + $0x7c] sm:$0xf]
    %v4831 = vld [vmem:[%s4812 + $0x84] sm:$0x8]
    %v4832 = vld [vmem:[%s4812 + $0x88] sm:$0xf]
    %v4833 = vld [vmem:[%s4812 + $0x90] sm:$0x8]
    %v4834 = vld [vmem:[%s4812 + $0x94] sm:$0xf]
    %v4835 = vld [vmem:[%s4812 + $0x9c] sm:$0x8]
    %v4836 = vld [vmem:[%s4812 + $0xa0] sm:$0xf]
    %v4837 = vld [vmem:[%s4812 + $0xa8] sm:$0x8]
    %v4838 = vld [vmem:[%s4812 + $0xac] sm:$0xf]
    %v4839 = vld [vmem:[%s4812 + $0xb4] sm:$0x8]
    %v4840 = vld [vmem:[%s4812 + $0xb8] sm:$0xf]
    %v4841 = vld [vmem:[%s4812 + $0xc0] sm:$0x8]
    %v4842 = vld [vmem:[%s4812 + $0xc4] sm:$0xf]
    %v4843 = vld [vmem:[%s4812 + $0xcc] sm:$0x8]
    %v4844 = vld [vmem:[%s4812 + $0xd0] sm:$0xf]
    %v4846 = vshrl.u32 %v4813, 16
    %v4848 = vrot.slane %v4846, 7
    %v4849 = vrot.slane %v4848, 4
    %v4851 = vshrl.u32 %v4814, 16
    %v4853 = vrot.slane %v4851, 7
    %v4854 = vshll.u32 %v4814, 16
    %v4856 = vor.u32 %v4853, %v4854
    %v4857 = vsel %vm248, %v4849, %v4856
    %v4859 = vshrl.u32 %v4815, 16
    %v4861 = vrot.slane %v4859, 7
    %v4862 = vrot.slane %v4861, 4
    %v4864 = vshrl.u32 %v4816, 16
    %v4866 = vrot.slane %v4864, 7
    %v4867 = vshll.u32 %v4816, 16
    %v4869 = vor.u32 %v4866, %v4867
    %v4870 = vsel %vm248, %v4862, %v4869
    %v4872 = vshrl.u32 %v4817, 16
    %v4874 = vrot.slane %v4872, 7
    %v4875 = vrot.slane %v4874, 4
    %v4877 = vshrl.u32 %v4818, 16
    %v4879 = vrot.slane %v4877, 7
    %v4880 = vshll.u32 %v4818, 16
    %v4882 = vor.u32 %v4879, %v4880
    %v4883 = vsel %vm248, %v4875, %v4882
    %v4885 = vshrl.u32 %v4819, 16
    %v4887 = vrot.slane %v4885, 7
    %v4888 = vrot.slane %v4887, 4
    %v4890 = vshrl.u32 %v4820, 16
    %v4892 = vrot.slane %v4890, 7
    %v4893 = vshll.u32 %v4820, 16
    %v4895 = vor.u32 %v4892, %v4893
    %v4896 = vsel %vm248, %v4888, %v4895
    %v4898 = vshrl.u32 %v4821, 16
    %v4900 = vrot.slane %v4898, 7
    %v4901 = vrot.slane %v4900, 4
    %v4903 = vshrl.u32 %v4822, 16
    %v4905 = vrot.slane %v4903, 7
    %v4906 = vshll.u32 %v4822, 16
    %v4908 = vor.u32 %v4905, %v4906
    %v4909 = vsel %vm248, %v4901, %v4908
    %v4911 = vshrl.u32 %v4823, 16
    %v4913 = vrot.slane %v4911, 7
    %v4914 = vrot.slane %v4913, 4
    %v4916 = vshrl.u32 %v4824, 16
    %v4918 = vrot.slane %v4916, 7
    %v4919 = vshll.u32 %v4824, 16
    %v4921 = vor.u32 %v4918, %v4919
    %v4922 = vsel %vm248, %v4914, %v4921
    %v4924 = vshrl.u32 %v4825, 16
    %v4926 = vrot.slane %v4924, 7
    %v4927 = vrot.slane %v4926, 4
    %v4929 = vshrl.u32 %v4826, 16
    %v4931 = vrot.slane %v4929, 7
    %v4932 = vshll.u32 %v4826, 16
    %v4934 = vor.u32 %v4931, %v4932
    %v4935 = vsel %vm248, %v4927, %v4934
    %v4937 = vshrl.u32 %v4827, 16
    %v4939 = vrot.slane %v4937, 7
    %v4940 = vrot.slane %v4939, 4
    %v4942 = vshrl.u32 %v4828, 16
    %v4944 = vrot.slane %v4942, 7
    %v4945 = vshll.u32 %v4828, 16
    %v4947 = vor.u32 %v4944, %v4945
    %v4948 = vsel %vm248, %v4940, %v4947
    %v4950 = vshrl.u32 %v4829, 16
    %v4952 = vrot.slane %v4950, 7
    %v4953 = vrot.slane %v4952, 4
    %v4955 = vshrl.u32 %v4830, 16
    %v4957 = vrot.slane %v4955, 7
    %v4958 = vshll.u32 %v4830, 16
    %v4960 = vor.u32 %v4957, %v4958
    %v4961 = vsel %vm248, %v4953, %v4960
    %v4963 = vshrl.u32 %v4831, 16
    %v4965 = vrot.slane %v4963, 7
    %v4966 = vrot.slane %v4965, 4
    %v4968 = vshrl.u32 %v4832, 16
    %v4970 = vrot.slane %v4968, 7
    %v4971 = vshll.u32 %v4832, 16
    %v4973 = vor.u32 %v4970, %v4971
    %v4974 = vsel %vm248, %v4966, %v4973
    %v4976 = vshrl.u32 %v4833, 16
    %v4978 = vrot.slane %v4976, 7
    %v4979 = vrot.slane %v4978, 4
    %v4981 = vshrl.u32 %v4834, 16
    %v4983 = vrot.slane %v4981, 7
    %v4984 = vshll.u32 %v4834, 16
    %v4986 = vor.u32 %v4983, %v4984
    %v4987 = vsel %vm248, %v4979, %v4986
    %v4989 = vshrl.u32 %v4835, 16
    %v4991 = vrot.slane %v4989, 7
    %v4992 = vrot.slane %v4991, 4
    %v4994 = vshrl.u32 %v4836, 16
    %v4996 = vrot.slane %v4994, 7
    %v4997 = vshll.u32 %v4836, 16
    %v4999 = vor.u32 %v4996, %v4997
    %v5000 = vsel %vm248, %v4992, %v4999
    %v5002 = vshrl.u32 %v4837, 16
    %v5004 = vrot.slane %v5002, 7
    %v5005 = vrot.slane %v5004, 4
    %v5007 = vshrl.u32 %v4838, 16
    %v5009 = vrot.slane %v5007, 7
    %v5010 = vshll.u32 %v4838, 16
    %v5012 = vor.u32 %v5009, %v5010
    %v5013 = vsel %vm248, %v5005, %v5012
    %v5015 = vshrl.u32 %v4839, 16
    %v5017 = vrot.slane %v5015, 7
    %v5018 = vrot.slane %v5017, 4
    %v5020 = vshrl.u32 %v4840, 16
    %v5022 = vrot.slane %v5020, 7
    %v5023 = vshll.u32 %v4840, 16
    %v5025 = vor.u32 %v5022, %v5023
    %v5026 = vsel %vm248, %v5018, %v5025
    %v5028 = vshrl.u32 %v4841, 16
    %v5030 = vrot.slane %v5028, 7
    %v5031 = vrot.slane %v5030, 4
    %v5033 = vshrl.u32 %v4842, 16
    %v5035 = vrot.slane %v5033, 7
    %v5036 = vshll.u32 %v4842, 16
    %v5038 = vor.u32 %v5035, %v5036
    %v5039 = vsel %vm248, %v5031, %v5038
    %v5041 = vshrl.u32 %v4843, 16
    %v5043 = vrot.slane %v5041, 7
    %v5044 = vrot.slane %v5043, 4
    %v5046 = vshrl.u32 %v4844, 16
    %v5048 = vrot.slane %v5046, 7
    %v5049 = vshll.u32 %v4844, 16
    %v5051 = vor.u32 %v5048, %v5049
    %v5052 = vsel %vm248, %v5044, %v5051
    %5069 = vst [vmem:[#allocation4 + $0x18] sm:$0xf] %v4857
    %5070 = vst [vmem:[#allocation4 + $0x3c] sm:$0xf] %v4870
    %5071 = vst [vmem:[#allocation4 + $0x60] sm:$0xf] %v4883
    %5072 = vst [vmem:[#allocation4 + $0x84] sm:$0xf] %v4896
    %5073 = vst [vmem:[#allocation4 + $0xa8] sm:$0xf] %v4909
    %5074 = vst [vmem:[#allocation4 + $0xcc] sm:$0xf] %v4922
    %5075 = vst [vmem:[#allocation4 + $0xf0] sm:$0xf] %v4935
    %5076 = vst [vmem:[#allocation4 + $0x114] sm:$0xf] %v4948
    %5077 = vst [vmem:[#allocation4 + $0x138] sm:$0xf] %v4961
    %5078 = vst [vmem:[#allocation4 + $0x15c] sm:$0xf] %v4974
    %5079 = vst [vmem:[#allocation4 + $0x180] sm:$0xf] %v4987
    %5080 = vst [vmem:[#allocation4 + $0x1a4] sm:$0xf] %v5000
    %5081 = vst [vmem:[#allocation4 + $0x1c8] sm:$0xf] %v5013
    %5082 = vst [vmem:[#allocation4 + $0x1ec] sm:$0xf] %v5026
    %5083 = vst [vmem:[#allocation4 + $0x210] sm:$0xf] %v5039
    %5084 = vst [vmem:[#allocation4 + $0x234] sm:$0xf] %v5052
    %v5085 = vld [vmem:[%s4812 + $0x4] sm:$0xf]
    %v5086 = vld [vmem:[%s4812 + $0x10] sm:$0xf]
    %v5087 = vld [vmem:[%s4812 + $0x1c] sm:$0xf]
    %v5088 = vld [vmem:[%s4812 + $0x28] sm:$0xf]
    %v5089 = vld [vmem:[%s4812 + $0x34] sm:$0xf]
    %v5090 = vld [vmem:[%s4812 + $0x40] sm:$0xf]
    %v5091 = vld [vmem:[%s4812 + $0x4c] sm:$0xf]
    %v5092 = vld [vmem:[%s4812 + $0x58] sm:$0xf]
    %v5093 = vld [vmem:[%s4812 + $0x7c] sm:$0xf]
    %v5094 = vld [vmem:[%s4812 + $0x88] sm:$0xf]
    %v5095 = vld [vmem:[%s4812 + $0x94] sm:$0xf]
    %v5096 = vld [vmem:[%s4812 + $0xa0] sm:$0xf]
    %v5097 = vld [vmem:[%s4812 + $0xac] sm:$0xf]
    %v5098 = vld [vmem:[%s4812 + $0xb8] sm:$0xf]
    %v5099 = vld [vmem:[%s4812 + $0xc4] sm:$0xf]
    %v5100 = vld [vmem:[%s4812 + $0xd0] sm:$0xf]
    %5101 = vst [vmem:[#allocation4 + $0x1c] sm:$0xf] %v5085
    %5102 = vst [vmem:[#allocation4 + $0x40] sm:$0xf] %v5086
    %5103 = vst [vmem:[#allocation4 + $0x64] sm:$0xf] %v5087
    %5104 = vst [vmem:[#allocation4 + $0x88] sm:$0xf] %v5088
    %5105 = vst [vmem:[#allocation4 + $0xac] sm:$0xf] %v5089
    %5106 = vst [vmem:[#allocation4 + $0xd0] sm:$0xf] %v5090
    %5107 = vst [vmem:[#allocation4 + $0xf4] sm:$0xf] %v5091
    %5108 = vst [vmem:[#allocation4 + $0x118] sm:$0xf] %v5092
    %5109 = vst [vmem:[#allocation4 + $0x13c] sm:$0xf] %v5093
    %5110 = vst [vmem:[#allocation4 + $0x160] sm:$0xf] %v5094
    %5111 = vst [vmem:[#allocation4 + $0x184] sm:$0xf] %v5095
    %5112 = vst [vmem:[#allocation4 + $0x1a8] sm:$0xf] %v5096
    %5113 = vst [vmem:[#allocation4 + $0x1cc] sm:$0xf] %v5097
    %5114 = vst [vmem:[#allocation4 + $0x1f0] sm:$0xf] %v5098
    %5115 = vst [vmem:[#allocation4 + $0x214] sm:$0xf] %v5099
    %5116 = vst [vmem:[#allocation4 + $0x238] sm:$0xf] %v5100
    %v5117 = vld [vmem:[%s4812 + $0x4] sm:$0xf]
    %v5118 = vld [vmem:[%s4812 + $0x8] sm:$0x1]
    %v5119 = vld [vmem:[%s4812 + $0x10] sm:$0xf]
    %v5120 = vld [vmem:[%s4812 + $0x14] sm:$0x1]
    %v5121 = vld [vmem:[%s4812 + $0x1c] sm:$0xf]
    %v5122 = vld [vmem:[%s4812 + $0x20] sm:$0x1]
    %v5123 = vld [vmem:[%s4812 + $0x28] sm:$0xf]
    %v5124 = vld [vmem:[%s4812 + $0x2c] sm:$0x1]
    %v5125 = vld [vmem:[%s4812 + $0x34] sm:$0xf]
    %v5126 = vld [vmem:[%s4812 + $0x38] sm:$0x1]
    %v5127 = vld [vmem:[%s4812 + $0x40] sm:$0xf]
    %v5128 = vld [vmem:[%s4812 + $0x44] sm:$0x1]
    %v5129 = vld [vmem:[%s4812 + $0x4c] sm:$0xf]
    %v5130 = vld [vmem:[%s4812 + $0x50] sm:$0x1]
    %v5131 = vld [vmem:[%s4812 + $0x58] sm:$0xf]
    %v5132 = vld [vmem:[%s4812 + $0x5c] sm:$0x1]
    %v5133 = vld [vmem:[%s4812 + $0x7c] sm:$0xf]
    %v5134 = vld [vmem:[%s4812 + $0x80] sm:$0x1]
    %v5135 = vld [vmem:[%s4812 + $0x88] sm:$0xf]
    %v5136 = vld [vmem:[%s4812 + $0x8c] sm:$0x1]
    %v5137 = vld [vmem:[%s4812 + $0x94] sm:$0xf]
    %v5138 = vld [vmem:[%s4812 + $0x98] sm:$0x1]
    %v5139 = vld [vmem:[%s4812 + $0xa0] sm:$0xf]
    %v5140 = vld [vmem:[%s4812 + $0xa4] sm:$0x1]
    %v5141 = vld [vmem:[%s4812 + $0xac] sm:$0xf]
    %v5142 = vld [vmem:[%s4812 + $0xb0] sm:$0x1]
    %v5143 = vld [vmem:[%s4812 + $0xb8] sm:$0xf]
    %v5144 = vld [vmem:[%s4812 + $0xbc] sm:$0x1]
    %v5145 = vld [vmem:[%s4812 + $0xc4] sm:$0xf]
    %v5146 = vld [vmem:[%s4812 + $0xc8] sm:$0x1]
    %v5147 = vld [vmem:[%s4812 + $0xd0] sm:$0xf]
    %v5148 = vld [vmem:[%s4812 + $0xd4] sm:$0x1]
    %v5150 = vshrl.u32 %v5117, 16
    %v5152 = vrot.slane %v5150, 4
    %v5153 = vshll.u32 %v5117, 16
    %v5155 = vrot.slane %v5153, 5
    %v5156 = vor.u32 %v5152, %v5155
    %v5157 = vrot.slane %v5156, 4
    %v5159 = vshll.u32 %v5118, 16
    %v5161 = vrot.slane %v5159, 5
    %v5162 = vsel %vm555, %v5157, %v5161
    %v5164 = vshrl.u32 %v5119, 16
    %v5166 = vrot.slane %v5164, 4
    %v5167 = vshll.u32 %v5119, 16
    %v5169 = vrot.slane %v5167, 5
    %v5170 = vor.u32 %v5166, %v5169
    %v5171 = vrot.slane %v5170, 4
    %v5173 = vshll.u32 %v5120, 16
    %v5175 = vrot.slane %v5173, 5
    %v5176 = vsel %vm555, %v5171, %v5175
    %v5178 = vshrl.u32 %v5121, 16
    %v5180 = vrot.slane %v5178, 4
    %v5181 = vshll.u32 %v5121, 16
    %v5183 = vrot.slane %v5181, 5
    %v5184 = vor.u32 %v5180, %v5183
    %v5185 = vrot.slane %v5184, 4
    %v5187 = vshll.u32 %v5122, 16
    %v5189 = vrot.slane %v5187, 5
    %v5190 = vsel %vm555, %v5185, %v5189
    %v5192 = vshrl.u32 %v5123, 16
    %v5194 = vrot.slane %v5192, 4
    %v5195 = vshll.u32 %v5123, 16
    %v5197 = vrot.slane %v5195, 5
    %v5198 = vor.u32 %v5194, %v5197
    %v5199 = vrot.slane %v5198, 4
    %v5201 = vshll.u32 %v5124, 16
    %v5203 = vrot.slane %v5201, 5
    %v5204 = vsel %vm555, %v5199, %v5203
    %v5206 = vshrl.u32 %v5125, 16
    %v5208 = vrot.slane %v5206, 4
    %v5209 = vshll.u32 %v5125, 16
    %v5211 = vrot.slane %v5209, 5
    %v5212 = vor.u32 %v5208, %v5211
    %v5213 = vrot.slane %v5212, 4
    %v5215 = vshll.u32 %v5126, 16
    %v5217 = vrot.slane %v5215, 5
    %v5218 = vsel %vm555, %v5213, %v5217
    %v5220 = vshrl.u32 %v5127, 16
    %v5222 = vrot.slane %v5220, 4
    %v5223 = vshll.u32 %v5127, 16
    %v5225 = vrot.slane %v5223, 5
    %v5226 = vor.u32 %v5222, %v5225
    %v5227 = vrot.slane %v5226, 4
    %v5229 = vshll.u32 %v5128, 16
    %v5231 = vrot.slane %v5229, 5
    %v5232 = vsel %vm555, %v5227, %v5231
    %v5234 = vshrl.u32 %v5129, 16
    %v5236 = vrot.slane %v5234, 4
    %v5237 = vshll.u32 %v5129, 16
    %v5239 = vrot.slane %v5237, 5
    %v5240 = vor.u32 %v5236, %v5239
    %v5241 = vrot.slane %v5240, 4
    %v5243 = vshll.u32 %v5130, 16
    %v5245 = vrot.slane %v5243, 5
    %v5246 = vsel %vm555, %v5241, %v5245
    %v5248 = vshrl.u32 %v5131, 16
    %v5250 = vrot.slane %v5248, 4
    %v5251 = vshll.u32 %v5131, 16
    %v5253 = vrot.slane %v5251, 5
    %v5254 = vor.u32 %v5250, %v5253
    %v5255 = vrot.slane %v5254, 4
    %v5257 = vshll.u32 %v5132, 16
    %v5259 = vrot.slane %v5257, 5
    %v5260 = vsel %vm555, %v5255, %v5259
    %v5262 = vshrl.u32 %v5133, 16
    %v5264 = vrot.slane %v5262, 4
    %v5265 = vshll.u32 %v5133, 16
    %v5267 = vrot.slane %v5265, 5
    %v5268 = vor.u32 %v5264, %v5267
    %v5269 = vrot.slane %v5268, 4
    %v5271 = vshll.u32 %v5134, 16
    %v5273 = vrot.slane %v5271, 5
    %v5274 = vsel %vm555, %v5269, %v5273
    %v5276 = vshrl.u32 %v5135, 16
    %v5278 = vrot.slane %v5276, 4
    %v5279 = vshll.u32 %v5135, 16
    %v5281 = vrot.slane %v5279, 5
    %v5282 = vor.u32 %v5278, %v5281
    %v5283 = vrot.slane %v5282, 4
    %v5285 = vshll.u32 %v5136, 16
    %v5287 = vrot.slane %v5285, 5
    %v5288 = vsel %vm555, %v5283, %v5287
    %v5290 = vshrl.u32 %v5137, 16
    %v5292 = vrot.slane %v5290, 4
    %v5293 = vshll.u32 %v5137, 16
    %v5295 = vrot.slane %v5293, 5
    %v5296 = vor.u32 %v5292, %v5295
    %v5297 = vrot.slane %v5296, 4
    %v5299 = vshll.u32 %v5138, 16
    %v5301 = vrot.slane %v5299, 5
    %v5302 = vsel %vm555, %v5297, %v5301
    %v5304 = vshrl.u32 %v5139, 16
    %v5306 = vrot.slane %v5304, 4
    %v5307 = vshll.u32 %v5139, 16
    %v5309 = vrot.slane %v5307, 5
    %v5310 = vor.u32 %v5306, %v5309
    %v5311 = vrot.slane %v5310, 4
    %v5313 = vshll.u32 %v5140, 16
    %v5315 = vrot.slane %v5313, 5
    %v5316 = vsel %vm555, %v5311, %v5315
    %v5318 = vshrl.u32 %v5141, 16
    %v5320 = vrot.slane %v5318, 4
    %v5321 = vshll.u32 %v5141, 16
    %v5323 = vrot.slane %v5321, 5
    %v5324 = vor.u32 %v5320, %v5323
    %v5325 = vrot.slane %v5324, 4
    %v5327 = vshll.u32 %v5142, 16
    %v5329 = vrot.slane %v5327, 5
    %v5330 = vsel %vm555, %v5325, %v5329
    %v5332 = vshrl.u32 %v5143, 16
    %v5334 = vrot.slane %v5332, 4
    %v5335 = vshll.u32 %v5143, 16
    %v5337 = vrot.slane %v5335, 5
    %v5338 = vor.u32 %v5334, %v5337
    %v5339 = vrot.slane %v5338, 4
    %v5341 = vshll.u32 %v5144, 16
    %v5343 = vrot.slane %v5341, 5
    %v5344 = vsel %vm555, %v5339, %v5343
    %v5346 = vshrl.u32 %v5145, 16
    %v5348 = vrot.slane %v5346, 4
    %v5349 = vshll.u32 %v5145, 16
    %v5351 = vrot.slane %v5349, 5
    %v5352 = vor.u32 %v5348, %v5351
    %v5353 = vrot.slane %v5352, 4
    %v5355 = vshll.u32 %v5146, 16
    %v5357 = vrot.slane %v5355, 5
    %v5358 = vsel %vm555, %v5353, %v5357
    %v5360 = vshrl.u32 %v5147, 16
    %v5362 = vrot.slane %v5360, 4
    %v5363 = vshll.u32 %v5147, 16
    %v5365 = vrot.slane %v5363, 5
    %v5366 = vor.u32 %v5362, %v5365
    %v5367 = vrot.slane %v5366, 4
    %v5369 = vshll.u32 %v5148, 16
    %v5371 = vrot.slane %v5369, 5
    %v5372 = vsel %vm555, %v5367, %v5371
    %5389 = vst [vmem:[#allocation4 + $0x20] sm:$0xf] %v5162
    %5390 = vst [vmem:[#allocation4 + $0x44] sm:$0xf] %v5176
    %5391 = vst [vmem:[#allocation4 + $0x68] sm:$0xf] %v5190
    %5392 = vst [vmem:[#allocation4 + $0x8c] sm:$0xf] %v5204
    %5393 = vst [vmem:[#allocation4 + $0xb0] sm:$0xf] %v5218
    %5394 = vst [vmem:[#allocation4 + $0xd4] sm:$0xf] %v5232
    %5395 = vst [vmem:[#allocation4 + $0xf8] sm:$0xf] %v5246
    %5396 = vst [vmem:[#allocation4 + $0x11c] sm:$0xf] %v5260
    %5397 = vst [vmem:[#allocation4 + $0x140] sm:$0xf] %v5274
    %5398 = vst [vmem:[#allocation4 + $0x164] sm:$0xf] %v5288
    %5399 = vst [vmem:[#allocation4 + $0x188] sm:$0xf] %v5302
    %5400 = vst [vmem:[#allocation4 + $0x1ac] sm:$0xf] %v5316
    %5401 = vst [vmem:[#allocation4 + $0x1d0] sm:$0xf] %v5330
    %5402 = vst [vmem:[#allocation4 + $0x1f4] sm:$0xf] %v5344
    %5403 = vst [vmem:[#allocation4 + $0x218] sm:$0xf] %v5358
    %5404 = vst [vmem:[#allocation4 + $0x23c] sm:$0xf] %v5372
    %v5405 = vld [vmem:[#allocation4] sm:$0xff]
    %v5406 = vld [vmem:[#allocation4 + $0x8] sm:$0xff]
    %v5407 = vld [vmem:[#allocation4 + $0x10] sm:$0xff]
    %v5408 = vld [vmem:[#allocation4 + $0x18] sm:$0xff]
    %v5409 = vld [vmem:[#allocation4 + $0x20] sm:$0xf]
    %v5410 = vld [vmem:[#allocation4 + $0x24] sm:$0xff]
    %v5411 = vld [vmem:[#allocation4 + $0x2c] sm:$0xff]
    %v5412 = vld [vmem:[#allocation4 + $0x34] sm:$0xff]
    %v5413 = vld [vmem:[#allocation4 + $0x3c] sm:$0xff]
    %v5414 = vld [vmem:[#allocation4 + $0x44] sm:$0xf]
    %v5415 = vld [vmem:[#allocation4 + $0x48] sm:$0xff]
    %v5416 = vld [vmem:[#allocation4 + $0x50] sm:$0xff]
    %v5417 = vld [vmem:[#allocation4 + $0x58] sm:$0xff]
    %v5418 = vld [vmem:[#allocation4 + $0x60] sm:$0xff]
    %v5419 = vld [vmem:[#allocation4 + $0x68] sm:$0xf]
    %v5420 = vld [vmem:[#allocation4 + $0x6c] sm:$0xff]
    %v5421 = vld [vmem:[#allocation4 + $0x74] sm:$0xff]
    %v5422 = vld [vmem:[#allocation4 + $0x7c] sm:$0xff]
    %v5423 = vld [vmem:[#allocation4 + $0x84] sm:$0xff]
    %v5424 = vld [vmem:[#allocation4 + $0x8c] sm:$0xf]
    %v5425 = vld [vmem:[#allocation4 + $0x90] sm:$0xff]
    %v5426 = vld [vmem:[#allocation4 + $0x98] sm:$0xff]
    %v5427 = vld [vmem:[#allocation4 + $0xa0] sm:$0xff]
    %v5428 = vld [vmem:[#allocation4 + $0xa8] sm:$0xff]
    %v5429 = vld [vmem:[#allocation4 + $0xb0] sm:$0xf]
    %v5430 = vld [vmem:[#allocation4 + $0xb4] sm:$0xff]
    %v5431 = vld [vmem:[#allocation4 + $0xbc] sm:$0xff]
    %v5432 = vld [vmem:[#allocation4 + $0xc4] sm:$0xff]
    %v5433 = vld [vmem:[#allocation4 + $0xcc] sm:$0xff]
    %v5434 = vld [vmem:[#allocation4 + $0xd4] sm:$0xf]
    %v5435 = vld [vmem:[#allocation4 + $0xd8] sm:$0xff]
    %v5436 = vld [vmem:[#allocation4 + $0xe0] sm:$0xff]
    %v5437 = vld [vmem:[#allocation4 + $0xe8] sm:$0xff]
    %v5438 = vld [vmem:[#allocation4 + $0xf0] sm:$0xff]
    %v5439 = vld [vmem:[#allocation4 + $0xf8] sm:$0xf]
    %v5440 = vld [vmem:[#allocation4 + $0xfc] sm:$0xff]
    %v5441 = vld [vmem:[#allocation4 + $0x104] sm:$0xff]
    %v5442 = vld [vmem:[#allocation4 + $0x10c] sm:$0xff]
    %v5443 = vld [vmem:[#allocation4 + $0x114] sm:$0xff]
    %v5444 = vld [vmem:[#allocation4 + $0x11c] sm:$0xf]
    %v5445 = vld [vmem:[#allocation4 + $0x120] sm:$0xff]
    %v5446 = vld [vmem:[#allocation4 + $0x128] sm:$0xff]
    %v5447 = vld [vmem:[#allocation4 + $0x130] sm:$0xff]
    %v5448 = vld [vmem:[#allocation4 + $0x138] sm:$0xff]
    %v5449 = vld [vmem:[#allocation4 + $0x140] sm:$0xf]
    %v5450 = vld [vmem:[#allocation4 + $0x144] sm:$0xff]
    %v5451 = vld [vmem:[#allocation4 + $0x14c] sm:$0xff]
    %v5452 = vld [vmem:[#allocation4 + $0x154] sm:$0xff]
    %v5453 = vld [vmem:[#allocation4 + $0x15c] sm:$0xff]
    %v5454 = vld [vmem:[#allocation4 + $0x164] sm:$0xf]
    %v5455 = vld [vmem:[#allocation4 + $0x168] sm:$0xff]
    %v5456 = vld [vmem:[#allocation4 + $0x170] sm:$0xff]
    %v5457 = vld [vmem:[#allocation4 + $0x178] sm:$0xff]
    %v5458 = vld [vmem:[#allocation4 + $0x180] sm:$0xff]
    %v5459 = vld [vmem:[#allocation4 + $0x188] sm:$0xf]
    %v5460 = vld [vmem:[#allocation4 + $0x18c] sm:$0xff]
    %v5461 = vld [vmem:[#allocation4 + $0x194] sm:$0xff]
    %v5462 = vld [vmem:[#allocation4 + $0x19c] sm:$0xff]
    %v5463 = vld [vmem:[#allocation4 + $0x1a4] sm:$0xff]
    %v5464 = vld [vmem:[#allocation4 + $0x1ac] sm:$0xf]
    %v5465 = vld [vmem:[#allocation4 + $0x1b0] sm:$0xff]
    %v5466 = vld [vmem:[#allocation4 + $0x1b8] sm:$0xff]
    %v5467 = vld [vmem:[#allocation4 + $0x1c0] sm:$0xff]
    %v5468 = vld [vmem:[#allocation4 + $0x1c8] sm:$0xff]
    %v5469 = vld [vmem:[#allocation4 + $0x1d0] sm:$0xf]
    %v5470 = vld [vmem:[#allocation4 + $0x1d4] sm:$0xff]
    %v5471 = vld [vmem:[#allocation4 + $0x1dc] sm:$0xff]
    %v5472 = vld [vmem:[#allocation4 + $0x1e4] sm:$0xff]
    %v5473 = vld [vmem:[#allocation4 + $0x1ec] sm:$0xff]
    %v5474 = vld [vmem:[#allocation4 + $0x1f4] sm:$0xf]
    %v5475 = vld [vmem:[#allocation4 + $0x1f8] sm:$0xff]
    %v5476 = vld [vmem:[#allocation4 + $0x200] sm:$0xff]
    %v5477 = vld [vmem:[#allocation4 + $0x208] sm:$0xff]
    %v5478 = vld [vmem:[#allocation4 + $0x210] sm:$0xff]
    %v5479 = vld [vmem:[#allocation4 + $0x218] sm:$0xf]
    %v5480 = vld [vmem:[#allocation4 + $0x21c] sm:$0xff]
    %v5481 = vld [vmem:[#allocation4 + $0x224] sm:$0xff]
    %v5482 = vld [vmem:[#allocation4 + $0x22c] sm:$0xff]
    %v5483 = vld [vmem:[#allocation4 + $0x234] sm:$0xff]
    %v5484 = vld [vmem:[#allocation4 + $0x23c] sm:$0xf]
    %v5485 = vld [vmem:[#allocation10] sm:$0xf]
    %v5486 = vld [vmem:[#allocation10 + $0x4] sm:$0xf]
    %v5487 = vld [vmem:[#allocation10 + $0x8] sm:$0xf]
    %v5488 = vld [vmem:[#allocation10 + $0xc] sm:$0xf]
    %v5489 = vld [vmem:[#allocation10 + $0x10] sm:$0xf]
    %v5490 = vld [vmem:[#allocation10 + $0x14] sm:$0xf]
    %v5491 = vld [vmem:[#allocation10 + $0x18] sm:$0xf]
    %v5492 = vld [vmem:[#allocation10 + $0x1c] sm:$0xf]
    %v5493 = vld [vmem:[#allocation10 + $0x20] sm:$0xf]
    %v5494 = vld [vmem:[#allocation10 + $0x24] sm:$0xf]
    %v5495 = vld [vmem:[#allocation10 + $0x28] sm:$0xf]
    %v5496 = vld [vmem:[#allocation10 + $0x2c] sm:$0xf]
    %v5497 = vld [vmem:[#allocation10 + $0x30] sm:$0xf]
    %v5498 = vld [vmem:[#allocation10 + $0x34] sm:$0xf]
    %v5499 = vld [vmem:[#allocation10 + $0x38] sm:$0xf]
    %v5500 = vld [vmem:[#allocation10 + $0x3c] sm:$0xf]
    %v5501 = vld [vmem:[#allocation10 + $0x40] sm:$0xf]
    %v5502 = vld [vmem:[#allocation10 + $0x44] sm:$0xf]
    %v5503 = vld [vmem:[#allocation10 + $0x48] sm:$0xf]
    %v5504 = vld [vmem:[#allocation10 + $0x4c] sm:$0xf]
    %v5505 = vld [vmem:[#allocation10 + $0x50] sm:$0xf]
    %v5506 = vld [vmem:[#allocation10 + $0x54] sm:$0xf]
    %v5507 = vld [vmem:[#allocation10 + $0x58] sm:$0xf]
    %v5508 = vld [vmem:[#allocation10 + $0x5c] sm:$0xf]
    %v5509 = vld [vmem:[#allocation10 + $0x60] sm:$0xf]
    %v5510 = vld [vmem:[#allocation10 + $0x64] sm:$0xf]
    %v5511 = vld [vmem:[#allocation10 + $0x68] sm:$0xf]
    %v5512 = vld [vmem:[#allocation10 + $0x6c] sm:$0xf]
    %v5513 = vld [vmem:[#allocation10 + $0x70] sm:$0xf]
    %v5514 = vld [vmem:[#allocation10 + $0x74] sm:$0xf]
    %v5515 = vld [vmem:[#allocation10 + $0x78] sm:$0xf]
    %v5516 = vld [vmem:[#allocation10 + $0x7c] sm:$0xf]
    %v5517 = vld [vmem:[#allocation10 + $0x80] sm:$0xf]
    %v5518 = vld [vmem:[#allocation10 + $0x84] sm:$0xf]
    %v5519 = vld [vmem:[#allocation10 + $0x88] sm:$0xf]
    %v5520 = vld [vmem:[#allocation10 + $0x8c] sm:$0xf]
    %v5521 = vld [vmem:[#allocation10 + $0x90] sm:$0xf]
    %v5522 = vld [vmem:[#allocation10 + $0x94] sm:$0xf]
    %v5523 = vld [vmem:[#allocation10 + $0x98] sm:$0xf]
    %v5524 = vld [vmem:[#allocation10 + $0x9c] sm:$0xf]
    %v5525 = vld [vmem:[#allocation10 + $0xa0] sm:$0xf]
    %v5526 = vld [vmem:[#allocation10 + $0xa4] sm:$0xf]
    %v5527 = vld [vmem:[#allocation10 + $0xa8] sm:$0xf]
    %v5528 = vld [vmem:[#allocation10 + $0xac] sm:$0xf]
    %v5529 = vld [vmem:[#allocation10 + $0xb0] sm:$0xf]
    %v5530 = vld [vmem:[#allocation10 + $0xb4] sm:$0xf]
    %v5531 = vld [vmem:[#allocation10 + $0xb8] sm:$0xf]
    %v5532 = vld [vmem:[#allocation10 + $0xbc] sm:$0xf]
    %v5533 = vld [vmem:[#allocation10 + $0xc0] sm:$0xf]
    %v5534 = vld [vmem:[#allocation10 + $0xc4] sm:$0xf]
    %v5535 = vld [vmem:[#allocation10 + $0xc8] sm:$0xf]
    %v5536 = vld [vmem:[#allocation10 + $0xcc] sm:$0xf]
    %v5537 = vld [vmem:[#allocation10 + $0xd0] sm:$0xf]
    %v5538 = vld [vmem:[#allocation10 + $0xd4] sm:$0xf]
    %v5539 = vld [vmem:[#allocation10 + $0xd8] sm:$0xf]
    %v5540 = vld [vmem:[#allocation10 + $0xdc] sm:$0xf]
    %v5541 = vld [vmem:[#allocation10 + $0xe0] sm:$0xf]
    %v5542 = vld [vmem:[#allocation10 + $0xe4] sm:$0xf]
    %v5543 = vld [vmem:[#allocation10 + $0xe8] sm:$0xf]
    %v5544 = vld [vmem:[#allocation10 + $0xec] sm:$0xf]
    %v5545 = vld [vmem:[#allocation10 + $0xf0] sm:$0xf]
    %v5546 = vld [vmem:[#allocation10 + $0xf4] sm:$0xf]
    %v5547 = vld [vmem:[#allocation10 + $0xf8] sm:$0xf]
    %v5548 = vld [vmem:[#allocation10 + $0xfc] sm:$0xf]
    %v5549 = vld [vmem:[#allocation10 + $0x100] sm:$0xf]
    %v5550 = vld [vmem:[#allocation10 + $0x104] sm:$0xf]
    %v5551 = vld [vmem:[#allocation10 + $0x108] sm:$0xf]
    %v5552 = vld [vmem:[#allocation10 + $0x10c] sm:$0xf]
    %v5553 = vld [vmem:[#allocation10 + $0x110] sm:$0xf]
    %v5554 = vld [vmem:[#allocation10 + $0x114] sm:$0xf]
    %v5555 = vld [vmem:[#allocation10 + $0x118] sm:$0xf]
    %v5556 = vld [vmem:[#allocation10 + $0x11c] sm:$0xf]
    %v5557 = vld [vmem:[#allocation10 + $0x120] sm:$0xf]
    %v5558 = vld [vmem:[#allocation10 + $0x124] sm:$0xf]
    %v5559 = vld [vmem:[#allocation10 + $0x128] sm:$0xf]
    %v5560 = vld [vmem:[#allocation10 + $0x12c] sm:$0xf]
    %v5561 = vld [vmem:[#allocation10 + $0x130] sm:$0xf]
    %v5562 = vld [vmem:[#allocation10 + $0x134] sm:$0xf]
    %v5563 = vld [vmem:[#allocation10 + $0x138] sm:$0xf]
    %v5564 = vld [vmem:[#allocation10 + $0x13c] sm:$0xf]
    %v5565 = vld [vmem:[#allocation10 + $0x140] sm:$0xf]
    %v5566 = vld [vmem:[#allocation10 + $0x144] sm:$0xf]
    %v5567 = vld [vmem:[#allocation10 + $0x148] sm:$0xf]
    %v5568 = vld [vmem:[#allocation10 + $0x14c] sm:$0xf]
    %v5569 = vld [vmem:[#allocation10 + $0x150] sm:$0xf]
    %v5570 = vld [vmem:[#allocation10 + $0x154] sm:$0xf]
    %v5571 = vld [vmem:[#allocation10 + $0x158] sm:$0xf]
    %v5572 = vld [vmem:[#allocation10 + $0x15c] sm:$0xf]
    %v5573 = vld [vmem:[#allocation10 + $0x160] sm:$0xf]
    %v5574 = vld [vmem:[#allocation10 + $0x164] sm:$0xf]
    %v5575 = vld [vmem:[#allocation10 + $0x168] sm:$0xf]
    %v5576 = vld [vmem:[#allocation10 + $0x16c] sm:$0xf]
    %v5577 = vld [vmem:[#allocation10 + $0x170] sm:$0xf]
    %v5578 = vld [vmem:[#allocation10 + $0x174] sm:$0xf]
    %v5579 = vld [vmem:[#allocation10 + $0x178] sm:$0xf]
    %v5580 = vld [vmem:[#allocation10 + $0x17c] sm:$0xf]
    %v5581 = vld [vmem:[#allocation10 + $0x180] sm:$0xf]
    %v5582 = vld [vmem:[#allocation10 + $0x184] sm:$0xf]
    %v5583 = vld [vmem:[#allocation10 + $0x188] sm:$0xf]
    %v5584 = vld [vmem:[#allocation10 + $0x18c] sm:$0xf]
    %v5585 = vld [vmem:[#allocation10 + $0x190] sm:$0xf]
    %v5586 = vld [vmem:[#allocation10 + $0x194] sm:$0xf]
    %v5587 = vld [vmem:[#allocation10 + $0x198] sm:$0xf]
    %v5588 = vld [vmem:[#allocation10 + $0x19c] sm:$0xf]
    %v5589 = vld [vmem:[#allocation10 + $0x1a0] sm:$0xf]
    %v5590 = vld [vmem:[#allocation10 + $0x1a4] sm:$0xf]
    %v5591 = vld [vmem:[#allocation10 + $0x1a8] sm:$0xf]
    %v5592 = vld [vmem:[#allocation10 + $0x1ac] sm:$0xf]
    %v5593 = vld [vmem:[#allocation10 + $0x1b0] sm:$0xf]
    %v5594 = vld [vmem:[#allocation10 + $0x1b4] sm:$0xf]
    %v5595 = vld [vmem:[#allocation10 + $0x1b8] sm:$0xf]
    %v5596 = vld [vmem:[#allocation10 + $0x1bc] sm:$0xf]
    %v5597 = vld [vmem:[#allocation10 + $0x1c0] sm:$0xf]
    %v5598 = vld [vmem:[#allocation10 + $0x1c4] sm:$0xf]
    %v5599 = vld [vmem:[#allocation10 + $0x1c8] sm:$0xf]
    %v5600 = vld [vmem:[#allocation10 + $0x1cc] sm:$0xf]
    %v5601 = vld [vmem:[#allocation10 + $0x1d0] sm:$0xf]
    %v5602 = vld [vmem:[#allocation10 + $0x1d4] sm:$0xf]
    %v5603 = vld [vmem:[#allocation10 + $0x1d8] sm:$0xf]
    %v5604 = vld [vmem:[#allocation10 + $0x1dc] sm:$0xf]
    %v5605 = vld [vmem:[#allocation10 + $0x1e0] sm:$0xf]
    %v5606 = vld [vmem:[#allocation10 + $0x1e4] sm:$0xf]
    %v5607 = vld [vmem:[#allocation10 + $0x1e8] sm:$0xf]
    %v5608 = vld [vmem:[#allocation10 + $0x1ec] sm:$0xf]
    %v5609 = vld [vmem:[#allocation10 + $0x1f0] sm:$0xf]
    %v5610 = vld [vmem:[#allocation10 + $0x1f4] sm:$0xf]
    %v5611 = vld [vmem:[#allocation10 + $0x1f8] sm:$0xf]
    %v5612 = vld [vmem:[#allocation10 + $0x1fc] sm:$0xf]
    %v5613 = vld [vmem:[#allocation10 + $0x200] sm:$0xf]
    %v5614 = vld [vmem:[#allocation10 + $0x204] sm:$0xf]
    %v5615 = vld [vmem:[#allocation10 + $0x208] sm:$0xf]
    %v5616 = vld [vmem:[#allocation10 + $0x20c] sm:$0xf]
    %v5617 = vld [vmem:[#allocation10 + $0x210] sm:$0xf]
    %v5618 = vld [vmem:[#allocation10 + $0x214] sm:$0xf]
    %v5619 = vld [vmem:[#allocation10 + $0x218] sm:$0xf]
    %v5620 = vld [vmem:[#allocation10 + $0x21c] sm:$0xf]
    %v5621 = vld [vmem:[#allocation10 + $0x220] sm:$0xf]
    %v5622 = vld [vmem:[#allocation10 + $0x224] sm:$0xf]
    %v5623 = vld [vmem:[#allocation10 + $0x228] sm:$0xf]
    %v5624 = vld [vmem:[#allocation10 + $0x22c] sm:$0xf]
    %v5625 = vld [vmem:[#allocation10 + $0x230] sm:$0xf]
    %v5626 = vld [vmem:[#allocation10 + $0x234] sm:$0xf]
    %v5627 = vld [vmem:[#allocation10 + $0x238] sm:$0xf]
    %v5628 = vld [vmem:[#allocation10 + $0x23c] sm:$0xf]
    %v5709 = vunpack.c.l.b16 %v5405
    %v5710 = vunpack.c.h.b16 %v5405
    %v5711 = vunpack.c.l.b16 %v5406
    %v5712 = vunpack.c.h.b16 %v5406
    %v5713 = vunpack.c.l.b16 %v5407
    %v5714 = vunpack.c.h.b16 %v5407
    %v5715 = vunpack.c.l.b16 %v5408
    %v5716 = vunpack.c.h.b16 %v5408
    %v5717 = vunpack.c.l.b16 %v5409
    %v5718 = vunpack.c.l.b16 %v5410
    %v5719 = vunpack.c.h.b16 %v5410
    %v5720 = vunpack.c.l.b16 %v5411
    %v5721 = vunpack.c.h.b16 %v5411
    %v5722 = vunpack.c.l.b16 %v5412
    %v5723 = vunpack.c.h.b16 %v5412
    %v5724 = vunpack.c.l.b16 %v5413
    %v5725 = vunpack.c.h.b16 %v5413
    %v5726 = vunpack.c.l.b16 %v5414
    %v5727 = vunpack.c.l.b16 %v5415
    %v5728 = vunpack.c.h.b16 %v5415
    %v5729 = vunpack.c.l.b16 %v5416
    %v5730 = vunpack.c.h.b16 %v5416
    %v5731 = vunpack.c.l.b16 %v5417
    %v5732 = vunpack.c.h.b16 %v5417
    %v5733 = vunpack.c.l.b16 %v5418
    %v5734 = vunpack.c.h.b16 %v5418
    %v5735 = vunpack.c.l.b16 %v5419
    %v5736 = vunpack.c.l.b16 %v5420
    %v5737 = vunpack.c.h.b16 %v5420
    %v5738 = vunpack.c.l.b16 %v5421
    %v5739 = vunpack.c.h.b16 %v5421
    %v5740 = vunpack.c.l.b16 %v5422
    %v5741 = vunpack.c.h.b16 %v5422
    %v5742 = vunpack.c.l.b16 %v5423
    %v5743 = vunpack.c.h.b16 %v5423
    %v5744 = vunpack.c.l.b16 %v5424
    %v5745 = vunpack.c.l.b16 %v5425
    %v5746 = vunpack.c.h.b16 %v5425
    %v5747 = vunpack.c.l.b16 %v5426
    %v5748 = vunpack.c.h.b16 %v5426
    %v5749 = vunpack.c.l.b16 %v5427
    %v5750 = vunpack.c.h.b16 %v5427
    %v5751 = vunpack.c.l.b16 %v5428
    %v5752 = vunpack.c.h.b16 %v5428
    %v5753 = vunpack.c.l.b16 %v5429
    %v5754 = vunpack.c.l.b16 %v5430
    %v5755 = vunpack.c.h.b16 %v5430
    %v5756 = vunpack.c.l.b16 %v5431
    %v5757 = vunpack.c.h.b16 %v5431
    %v5758 = vunpack.c.l.b16 %v5432
    %v5759 = vunpack.c.h.b16 %v5432
    %v5760 = vunpack.c.l.b16 %v5433
    %v5761 = vunpack.c.h.b16 %v5433
    %v5762 = vunpack.c.l.b16 %v5434
    %v5763 = vunpack.c.l.b16 %v5435
    %v5764 = vunpack.c.h.b16 %v5435
    %v5765 = vunpack.c.l.b16 %v5436
    %v5766 = vunpack.c.h.b16 %v5436
    %v5767 = vunpack.c.l.b16 %v5437
    %v5768 = vunpack.c.h.b16 %v5437
    %v5769 = vunpack.c.l.b16 %v5438
    %v5770 = vunpack.c.h.b16 %v5438
    %v5771 = vunpack.c.l.b16 %v5439
    %v5772 = vunpack.c.l.b16 %v5440
    %v5773 = vunpack.c.h.b16 %v5440
    %v5774 = vunpack.c.l.b16 %v5441
    %v5775 = vunpack.c.h.b16 %v5441
    %v5776 = vunpack.c.l.b16 %v5442
    %v5777 = vunpack.c.h.b16 %v5442
    %v5778 = vunpack.c.l.b16 %v5443
    %v5779 = vunpack.c.h.b16 %v5443
    %v5780 = vunpack.c.l.b16 %v5444
    %v5781 = vunpack.c.l.b16 %v5445
    %v5782 = vunpack.c.h.b16 %v5445
    %v5783 = vunpack.c.l.b16 %v5446
    %v5784 = vunpack.c.h.b16 %v5446
    %v5785 = vunpack.c.l.b16 %v5447
    %v5786 = vunpack.c.h.b16 %v5447
    %v5787 = vunpack.c.l.b16 %v5448
    %v5788 = vunpack.c.h.b16 %v5448
    %v5789 = vunpack.c.l.b16 %v5449
    %v5790 = vunpack.c.l.b16 %v5450
    %v5791 = vunpack.c.h.b16 %v5450
    %v5792 = vunpack.c.l.b16 %v5451
    %v5793 = vunpack.c.h.b16 %v5451
    %v5794 = vunpack.c.l.b16 %v5452
    %v5795 = vunpack.c.h.b16 %v5452
    %v5796 = vunpack.c.l.b16 %v5453
    %v5797 = vunpack.c.h.b16 %v5453
    %v5798 = vunpack.c.l.b16 %v5454
    %v5799 = vunpack.c.l.b16 %v5455
    %v5800 = vunpack.c.h.b16 %v5455
    %v5801 = vunpack.c.l.b16 %v5456
    %v5802 = vunpack.c.h.b16 %v5456
    %v5803 = vunpack.c.l.b16 %v5457
    %v5804 = vunpack.c.h.b16 %v5457
    %v5805 = vunpack.c.l.b16 %v5458
    %v5806 = vunpack.c.h.b16 %v5458
    %v5807 = vunpack.c.l.b16 %v5459
    %v5808 = vunpack.c.l.b16 %v5460
    %v5809 = vunpack.c.h.b16 %v5460
    %v5810 = vunpack.c.l.b16 %v5461
    %v5811 = vunpack.c.h.b16 %v5461
    %v5812 = vunpack.c.l.b16 %v5462
    %v5813 = vunpack.c.h.b16 %v5462
    %v5814 = vunpack.c.l.b16 %v5463
    %v5815 = vunpack.c.h.b16 %v5463
    %v5816 = vunpack.c.l.b16 %v5464
    %v5817 = vunpack.c.l.b16 %v5465
    %v5818 = vunpack.c.h.b16 %v5465
    %v5819 = vunpack.c.l.b16 %v5466
    %v5820 = vunpack.c.h.b16 %v5466
    %v5821 = vunpack.c.l.b16 %v5467
    %v5822 = vunpack.c.h.b16 %v5467
    %v5823 = vunpack.c.l.b16 %v5468
    %v5824 = vunpack.c.h.b16 %v5468
    %v5825 = vunpack.c.l.b16 %v5469
    %v5826 = vunpack.c.l.b16 %v5470
    %v5827 = vunpack.c.h.b16 %v5470
    %v5828 = vunpack.c.l.b16 %v5471
    %v5829 = vunpack.c.h.b16 %v5471
    %v5830 = vunpack.c.l.b16 %v5472
    %v5831 = vunpack.c.h.b16 %v5472
    %v5832 = vunpack.c.l.b16 %v5473
    %v5833 = vunpack.c.h.b16 %v5473
    %v5834 = vunpack.c.l.b16 %v5474
    %v5835 = vunpack.c.l.b16 %v5475
    %v5836 = vunpack.c.h.b16 %v5475
    %v5837 = vunpack.c.l.b16 %v5476
    %v5838 = vunpack.c.h.b16 %v5476
    %v5839 = vunpack.c.l.b16 %v5477
    %v5840 = vunpack.c.h.b16 %v5477
    %v5841 = vunpack.c.l.b16 %v5478
    %v5842 = vunpack.c.h.b16 %v5478
    %v5843 = vunpack.c.l.b16 %v5479
    %v5844 = vunpack.c.l.b16 %v5480
    %v5845 = vunpack.c.h.b16 %v5480
    %v5846 = vunpack.c.l.b16 %v5481
    %v5847 = vunpack.c.h.b16 %v5481
    %v5848 = vunpack.c.l.b16 %v5482
    %v5849 = vunpack.c.h.b16 %v5482
    %v5850 = vunpack.c.l.b16 %v5483
    %v5851 = vunpack.c.h.b16 %v5483
    %v5852 = vunpack.c.l.b16 %v5484
    %v5853 = vpack.c.b16 %v5718, %v5709
    %v5854 = vpack.c.b16 %v5719, %v5710
    %v5855 = vpack.c.b16 %v5720, %v5711
    %v5856 = vpack.c.b16 %v5721, %v5712
    %v5857 = vpack.c.b16 %v5722, %v5713
    %v5858 = vpack.c.b16 %v5723, %v5714
    %v5859 = vpack.c.b16 %v5724, %v5715
    %v5860 = vpack.c.b16 %v5725, %v5716
    %v5861 = vpack.c.b16 %v5726, %v5717
    %v5862 = vpack.c.b16 %v5736, %v5727
    %v5863 = vpack.c.b16 %v5737, %v5728
    %v5864 = vpack.c.b16 %v5738, %v5729
    %v5865 = vpack.c.b16 %v5739, %v5730
    %v5866 = vpack.c.b16 %v5740, %v5731
    %v5867 = vpack.c.b16 %v5741, %v5732
    %v5868 = vpack.c.b16 %v5742, %v5733
    %v5869 = vpack.c.b16 %v5743, %v5734
    %v5870 = vpack.c.b16 %v5744, %v5735
    %v5871 = vpack.c.b16 %v5754, %v5745
    %v5872 = vpack.c.b16 %v5755, %v5746
    %v5873 = vpack.c.b16 %v5756, %v5747
    %v5874 = vpack.c.b16 %v5757, %v5748
    %v5875 = vpack.c.b16 %v5758, %v5749
    %v5876 = vpack.c.b16 %v5759, %v5750
    %v5877 = vpack.c.b16 %v5760, %v5751
    %v5878 = vpack.c.b16 %v5761, %v5752
    %v5879 = vpack.c.b16 %v5762, %v5753
    %v5880 = vpack.c.b16 %v5772, %v5763
    %v5881 = vpack.c.b16 %v5773, %v5764
    %v5882 = vpack.c.b16 %v5774, %v5765
    %v5883 = vpack.c.b16 %v5775, %v5766
    %v5884 = vpack.c.b16 %v5776, %v5767
    %v5885 = vpack.c.b16 %v5777, %v5768
    %v5886 = vpack.c.b16 %v5778, %v5769
    %v5887 = vpack.c.b16 %v5779, %v5770
    %v5888 = vpack.c.b16 %v5780, %v5771
    %v5889 = vpack.c.b16 %v5790, %v5781
    %v5890 = vpack.c.b16 %v5791, %v5782
    %v5891 = vpack.c.b16 %v5792, %v5783
    %v5892 = vpack.c.b16 %v5793, %v5784
    %v5893 = vpack.c.b16 %v5794, %v5785
    %v5894 = vpack.c.b16 %v5795, %v5786
    %v5895 = vpack.c.b16 %v5796, %v5787
    %v5896 = vpack.c.b16 %v5797, %v5788
    %v5897 = vpack.c.b16 %v5798, %v5789
    %v5898 = vpack.c.b16 %v5808, %v5799
    %v5899 = vpack.c.b16 %v5809, %v5800
    %v5900 = vpack.c.b16 %v5810, %v5801
    %v5901 = vpack.c.b16 %v5811, %v5802
    %v5902 = vpack.c.b16 %v5812, %v5803
    %v5903 = vpack.c.b16 %v5813, %v5804
    %v5904 = vpack.c.b16 %v5814, %v5805
    %v5905 = vpack.c.b16 %v5815, %v5806
    %v5906 = vpack.c.b16 %v5816, %v5807
    %v5907 = vpack.c.b16 %v5826, %v5817
    %v5908 = vpack.c.b16 %v5827, %v5818
    %v5909 = vpack.c.b16 %v5828, %v5819
    %v5910 = vpack.c.b16 %v5829, %v5820
    %v5911 = vpack.c.b16 %v5830, %v5821
    %v5912 = vpack.c.b16 %v5831, %v5822
    %v5913 = vpack.c.b16 %v5832, %v5823
    %v5914 = vpack.c.b16 %v5833, %v5824
    %v5915 = vpack.c.b16 %v5834, %v5825
    %v5916 = vpack.c.b16 %v5844, %v5835
    %v5917 = vpack.c.b16 %v5845, %v5836
    %v5918 = vpack.c.b16 %v5846, %v5837
    %v5919 = vpack.c.b16 %v5847, %v5838
    %v5920 = vpack.c.b16 %v5848, %v5839
    %v5921 = vpack.c.b16 %v5849, %v5840
    %v5922 = vpack.c.b16 %v5850, %v5841
    %v5923 = vpack.c.b16 %v5851, %v5842
    %v5924 = vpack.c.b16 %v5852, %v5843
    %v6141 = vunpack.c.l.b16 %v5485
    %v6142 = vunpack.c.l.b16 %v5486
    %v6143 = vunpack.c.l.b16 %v5487
    %v6144 = vunpack.c.l.b16 %v5488
    %v6145 = vunpack.c.l.b16 %v5489
    %v6146 = vunpack.c.l.b16 %v5490
    %v6147 = vunpack.c.l.b16 %v5491
    %v6148 = vunpack.c.l.b16 %v5492
    %v6149 = vunpack.c.l.b16 %v5493
    %v6150 = vunpack.c.l.b16 %v5494
    %v6151 = vunpack.c.l.b16 %v5495
    %v6152 = vunpack.c.l.b16 %v5496
    %v6153 = vunpack.c.l.b16 %v5497
    %v6154 = vunpack.c.l.b16 %v5498
    %v6155 = vunpack.c.l.b16 %v5499
    %v6156 = vunpack.c.l.b16 %v5500
    %v6157 = vunpack.c.l.b16 %v5501
    %v6158 = vunpack.c.l.b16 %v5502
    %v6159 = vunpack.c.l.b16 %v5503
    %v6160 = vunpack.c.l.b16 %v5504
    %v6161 = vunpack.c.l.b16 %v5505
    %v6162 = vunpack.c.l.b16 %v5506
    %v6163 = vunpack.c.l.b16 %v5507
    %v6164 = vunpack.c.l.b16 %v5508
    %v6165 = vunpack.c.l.b16 %v5509
    %v6166 = vunpack.c.l.b16 %v5510
    %v6167 = vunpack.c.l.b16 %v5511
    %v6168 = vunpack.c.l.b16 %v5512
    %v6169 = vunpack.c.l.b16 %v5513
    %v6170 = vunpack.c.l.b16 %v5514
    %v6171 = vunpack.c.l.b16 %v5515
    %v6172 = vunpack.c.l.b16 %v5516
    %v6173 = vunpack.c.l.b16 %v5517
    %v6174 = vunpack.c.l.b16 %v5518
    %v6175 = vunpack.c.l.b16 %v5519
    %v6176 = vunpack.c.l.b16 %v5520
    %v6177 = vunpack.c.l.b16 %v5521
    %v6178 = vunpack.c.l.b16 %v5522
    %v6179 = vunpack.c.l.b16 %v5523
    %v6180 = vunpack.c.l.b16 %v5524
    %v6181 = vunpack.c.l.b16 %v5525
    %v6182 = vunpack.c.l.b16 %v5526
    %v6183 = vunpack.c.l.b16 %v5527
    %v6184 = vunpack.c.l.b16 %v5528
    %v6185 = vunpack.c.l.b16 %v5529
    %v6186 = vunpack.c.l.b16 %v5530
    %v6187 = vunpack.c.l.b16 %v5531
    %v6188 = vunpack.c.l.b16 %v5532
    %v6189 = vunpack.c.l.b16 %v5533
    %v6190 = vunpack.c.l.b16 %v5534
    %v6191 = vunpack.c.l.b16 %v5535
    %v6192 = vunpack.c.l.b16 %v5536
    %v6193 = vunpack.c.l.b16 %v5537
    %v6194 = vunpack.c.l.b16 %v5538
    %v6195 = vunpack.c.l.b16 %v5539
    %v6196 = vunpack.c.l.b16 %v5540
    %v6197 = vunpack.c.l.b16 %v5541
    %v6198 = vunpack.c.l.b16 %v5542
    %v6199 = vunpack.c.l.b16 %v5543
    %v6200 = vunpack.c.l.b16 %v5544
    %v6201 = vunpack.c.l.b16 %v5545
    %v6202 = vunpack.c.l.b16 %v5546
    %v6203 = vunpack.c.l.b16 %v5547
    %v6204 = vunpack.c.l.b16 %v5548
    %v6205 = vunpack.c.l.b16 %v5549
    %v6206 = vunpack.c.l.b16 %v5550
    %v6207 = vunpack.c.l.b16 %v5551
    %v6208 = vunpack.c.l.b16 %v5552
    %v6209 = vunpack.c.l.b16 %v5553
    %v6210 = vunpack.c.l.b16 %v5554
    %v6211 = vunpack.c.l.b16 %v5555
    %v6212 = vunpack.c.l.b16 %v5556
    %v6213 = vunpack.c.l.b16 %v5557
    %v6214 = vunpack.c.l.b16 %v5558
    %v6215 = vunpack.c.l.b16 %v5559
    %v6216 = vunpack.c.l.b16 %v5560
    %v6217 = vunpack.c.l.b16 %v5561
    %v6218 = vunpack.c.l.b16 %v5562
    %v6219 = vunpack.c.l.b16 %v5563
    %v6220 = vunpack.c.l.b16 %v5564
    %v6221 = vunpack.c.l.b16 %v5565
    %v6222 = vunpack.c.l.b16 %v5566
    %v6223 = vunpack.c.l.b16 %v5567
    %v6224 = vunpack.c.l.b16 %v5568
    %v6225 = vunpack.c.l.b16 %v5569
    %v6226 = vunpack.c.l.b16 %v5570
    %v6227 = vunpack.c.l.b16 %v5571
    %v6228 = vunpack.c.l.b16 %v5572
    %v6229 = vunpack.c.l.b16 %v5573
    %v6230 = vunpack.c.l.b16 %v5574
    %v6231 = vunpack.c.l.b16 %v5575
    %v6232 = vunpack.c.l.b16 %v5576
    %v6233 = vunpack.c.l.b16 %v5577
    %v6234 = vunpack.c.l.b16 %v5578
    %v6235 = vunpack.c.l.b16 %v5579
    %v6236 = vunpack.c.l.b16 %v5580
    %v6237 = vunpack.c.l.b16 %v5581
    %v6238 = vunpack.c.l.b16 %v5582
    %v6239 = vunpack.c.l.b16 %v5583
    %v6240 = vunpack.c.l.b16 %v5584
    %v6241 = vunpack.c.l.b16 %v5585
    %v6242 = vunpack.c.l.b16 %v5586
    %v6243 = vunpack.c.l.b16 %v5587
    %v6244 = vunpack.c.l.b16 %v5588
    %v6245 = vunpack.c.l.b16 %v5589
    %v6246 = vunpack.c.l.b16 %v5590
    %v6247 = vunpack.c.l.b16 %v5591
    %v6248 = vunpack.c.l.b16 %v5592
    %v6249 = vunpack.c.l.b16 %v5593
    %v6250 = vunpack.c.l.b16 %v5594
    %v6251 = vunpack.c.l.b16 %v5595
    %v6252 = vunpack.c.l.b16 %v5596
    %v6253 = vunpack.c.l.b16 %v5597
    %v6254 = vunpack.c.l.b16 %v5598
    %v6255 = vunpack.c.l.b16 %v5599
    %v6256 = vunpack.c.l.b16 %v5600
    %v6257 = vunpack.c.l.b16 %v5601
    %v6258 = vunpack.c.l.b16 %v5602
    %v6259 = vunpack.c.l.b16 %v5603
    %v6260 = vunpack.c.l.b16 %v5604
    %v6261 = vunpack.c.l.b16 %v5605
    %v6262 = vunpack.c.l.b16 %v5606
    %v6263 = vunpack.c.l.b16 %v5607
    %v6264 = vunpack.c.l.b16 %v5608
    %v6265 = vunpack.c.l.b16 %v5609
    %v6266 = vunpack.c.l.b16 %v5610
    %v6267 = vunpack.c.l.b16 %v5611
    %v6268 = vunpack.c.l.b16 %v5612
    %v6269 = vunpack.c.l.b16 %v5613
    %v6270 = vunpack.c.l.b16 %v5614
    %v6271 = vunpack.c.l.b16 %v5615
    %v6272 = vunpack.c.l.b16 %v5616
    %v6273 = vunpack.c.l.b16 %v5617
    %v6274 = vunpack.c.l.b16 %v5618
    %v6275 = vunpack.c.l.b16 %v5619
    %v6276 = vunpack.c.l.b16 %v5620
    %v6277 = vunpack.c.l.b16 %v5621
    %v6278 = vunpack.c.l.b16 %v5622
    %v6279 = vunpack.c.l.b16 %v5623
    %v6280 = vunpack.c.l.b16 %v5624
    %v6281 = vunpack.c.l.b16 %v5625
    %v6282 = vunpack.c.l.b16 %v5626
    %v6283 = vunpack.c.l.b16 %v5627
    %v6284 = vunpack.c.l.b16 %v5628
    %v6285 = vpack.c.b16 %v6142, %v6141
    %v6286 = vpack.c.b16 %v6144, %v6143
    %v6287 = vpack.c.b16 %v6146, %v6145
    %v6288 = vpack.c.b16 %v6148, %v6147
    %v6289 = vpack.c.b16 %v6150, %v6149
    %v6290 = vpack.c.b16 %v6152, %v6151
    %v6291 = vpack.c.b16 %v6154, %v6153
    %v6292 = vpack.c.b16 %v6156, %v6155
    %v6293 = vpack.c.b16 %v6158, %v6157
    %v6294 = vpack.c.b16 %v6160, %v6159
    %v6295 = vpack.c.b16 %v6162, %v6161
    %v6296 = vpack.c.b16 %v6164, %v6163
    %v6297 = vpack.c.b16 %v6166, %v6165
    %v6298 = vpack.c.b16 %v6168, %v6167
    %v6299 = vpack.c.b16 %v6170, %v6169
    %v6300 = vpack.c.b16 %v6172, %v6171
    %v6301 = vpack.c.b16 %v6174, %v6173
    %v6302 = vpack.c.b16 %v6176, %v6175
    %v6303 = vpack.c.b16 %v6178, %v6177
    %v6304 = vpack.c.b16 %v6180, %v6179
    %v6305 = vpack.c.b16 %v6182, %v6181
    %v6306 = vpack.c.b16 %v6184, %v6183
    %v6307 = vpack.c.b16 %v6186, %v6185
    %v6308 = vpack.c.b16 %v6188, %v6187
    %v6309 = vpack.c.b16 %v6190, %v6189
    %v6310 = vpack.c.b16 %v6192, %v6191
    %v6311 = vpack.c.b16 %v6194, %v6193
    %v6312 = vpack.c.b16 %v6196, %v6195
    %v6313 = vpack.c.b16 %v6198, %v6197
    %v6314 = vpack.c.b16 %v6200, %v6199
    %v6315 = vpack.c.b16 %v6202, %v6201
    %v6316 = vpack.c.b16 %v6204, %v6203
    %v6317 = vpack.c.b16 %v6206, %v6205
    %v6318 = vpack.c.b16 %v6208, %v6207
    %v6319 = vpack.c.b16 %v6210, %v6209
    %v6320 = vpack.c.b16 %v6212, %v6211
    %v6321 = vpack.c.b16 %v6214, %v6213
    %v6322 = vpack.c.b16 %v6216, %v6215
    %v6323 = vpack.c.b16 %v6218, %v6217
    %v6324 = vpack.c.b16 %v6220, %v6219
    %v6325 = vpack.c.b16 %v6222, %v6221
    %v6326 = vpack.c.b16 %v6224, %v6223
    %v6327 = vpack.c.b16 %v6226, %v6225
    %v6328 = vpack.c.b16 %v6228, %v6227
    %v6329 = vpack.c.b16 %v6230, %v6229
    %v6330 = vpack.c.b16 %v6232, %v6231
    %v6331 = vpack.c.b16 %v6234, %v6233
    %v6332 = vpack.c.b16 %v6236, %v6235
    %v6333 = vpack.c.b16 %v6238, %v6237
    %v6334 = vpack.c.b16 %v6240, %v6239
    %v6335 = vpack.c.b16 %v6242, %v6241
    %v6336 = vpack.c.b16 %v6244, %v6243
    %v6337 = vpack.c.b16 %v6246, %v6245
    %v6338 = vpack.c.b16 %v6248, %v6247
    %v6339 = vpack.c.b16 %v6250, %v6249
    %v6340 = vpack.c.b16 %v6252, %v6251
    %v6341 = vpack.c.b16 %v6254, %v6253
    %v6342 = vpack.c.b16 %v6256, %v6255
    %v6343 = vpack.c.b16 %v6258, %v6257
    %v6344 = vpack.c.b16 %v6260, %v6259
    %v6345 = vpack.c.b16 %v6262, %v6261
    %v6346 = vpack.c.b16 %v6264, %v6263
    %v6347 = vpack.c.b16 %v6266, %v6265
    %v6348 = vpack.c.b16 %v6268, %v6267
    %v6349 = vpack.c.b16 %v6270, %v6269
    %v6350 = vpack.c.b16 %v6272, %v6271
    %v6351 = vpack.c.b16 %v6274, %v6273
    %v6352 = vpack.c.b16 %v6276, %v6275
    %v6353 = vpack.c.b16 %v6278, %v6277
    %v6354 = vpack.c.b16 %v6280, %v6279
    %v6355 = vpack.c.b16 %v6282, %v6281
    %v6356 = vpack.c.b16 %v6284, %v6283
    %6429 = vmatpush.bf16.msra.mxu0 %v6292
    %6430 = vmatpush.bf16.msra.mxu0 %v6291
    %6431 = vmatpush.bf16.msra.mxu0 %v6290
    %6432 = vmatpush.bf16.msra.mxu0 %v6289
    %6433 = vmatpush.bf16.msra.mxu0 %v6288
    %6434 = vmatpush.bf16.msra.mxu0 %v6287
    %6435 = vmatpush.bf16.msra.mxu0 %v6286
    %6436 = vmatpush.bf16.msra.mxu0 %v6285
    %6437 = vmatmul.bf16.gmra.mxu0 %v5853
    %v6438 = vpop.f32.mrf.mxu0
    %v6439 = vadd.f32 0.0, %v6438
    %v6440 = vpop.f32.mrf.mxu0
    %v6441 = vadd.f32 0.0, %v6440
    %6442 = vmatmul.bf16.gmra.mxu0 %v5862
    %v6443 = vpop.f32.mrf.mxu0
    %v6444 = vadd.f32 0.0, %v6443
    %v6445 = vpop.f32.mrf.mxu0
    %v6446 = vadd.f32 0.0, %v6445
    %6447 = vmatmul.bf16.gmra.mxu0 %v5871
    %v6448 = vpop.f32.mrf.mxu0
    %v6449 = vadd.f32 0.0, %v6448
    %v6450 = vpop.f32.mrf.mxu0
    %v6451 = vadd.f32 0.0, %v6450
    %6452 = vmatmul.bf16.gmra.mxu0 %v5880
    %v6453 = vpop.f32.mrf.mxu0
    %v6454 = vadd.f32 0.0, %v6453
    %v6455 = vpop.f32.mrf.mxu0
    %v6456 = vadd.f32 0.0, %v6455
    %6457 = vmatmul.bf16.gmra.mxu0 %v5889
    %v6458 = vpop.f32.mrf.mxu0
    %v6459 = vadd.f32 0.0, %v6458
    %v6460 = vpop.f32.mrf.mxu0
    %v6461 = vadd.f32 0.0, %v6460
    %6462 = vmatmul.bf16.gmra.mxu0 %v5898
    %v6463 = vpop.f32.mrf.mxu0
    %v6464 = vadd.f32 0.0, %v6463
    %v6465 = vpop.f32.mrf.mxu0
    %v6466 = vadd.f32 0.0, %v6465
    %6467 = vmatmul.bf16.gmra.mxu0 %v5907
    %v6468 = vpop.f32.mrf.mxu0
    %v6469 = vadd.f32 0.0, %v6468
    %v6470 = vpop.f32.mrf.mxu0
    %v6471 = vadd.f32 0.0, %v6470
    %6472 = vmatmul.bf16.gmra.mxu0 %v5916
    %v6473 = vpop.f32.mrf.mxu0
    %v6474 = vadd.f32 0.0, %v6473
    %v6475 = vpop.f32.mrf.mxu0
    %v6476 = vadd.f32 0.0, %v6475
    %6477 = vdwg.mxu0
    %6478 = vmatpush.bf16.msra.mxu0 %v6300
    %6479 = vmatpush.bf16.msra.mxu0 %v6299
    %6480 = vmatpush.bf16.msra.mxu0 %v6298
    %6481 = vmatpush.bf16.msra.mxu0 %v6297
    %6482 = vmatpush.bf16.msra.mxu0 %v6296
    %6483 = vmatpush.bf16.msra.mxu0 %v6295
    %6484 = vmatpush.bf16.msra.mxu0 %v6294
    %6485 = vmatpush.bf16.msra.mxu0 %v6293
    %6486 = vmatmul.bf16.gmra.mxu0 %v5854
    %v6487 = vpop.f32.mrf.mxu0
    %v6488 = vadd.f32 %v6439, %v6487
    %v6489 = vpop.f32.mrf.mxu0
    %v6490 = vadd.f32 %v6441, %v6489
    %6491 = vmatmul.bf16.gmra.mxu0 %v5863
    %v6492 = vpop.f32.mrf.mxu0
    %v6493 = vadd.f32 %v6444, %v6492
    %v6494 = vpop.f32.mrf.mxu0
    %v6495 = vadd.f32 %v6446, %v6494
    %6496 = vmatmul.bf16.gmra.mxu0 %v5872
    %v6497 = vpop.f32.mrf.mxu0
    %v6498 = vadd.f32 %v6449, %v6497
    %v6499 = vpop.f32.mrf.mxu0
    %v6500 = vadd.f32 %v6451, %v6499
    %6501 = vmatmul.bf16.gmra.mxu0 %v5881
    %v6502 = vpop.f32.mrf.mxu0
    %v6503 = vadd.f32 %v6454, %v6502
    %v6504 = vpop.f32.mrf.mxu0
    %v6505 = vadd.f32 %v6456, %v6504
    %6506 = vmatmul.bf16.gmra.mxu0 %v5890
    %v6507 = vpop.f32.mrf.mxu0
    %v6508 = vadd.f32 %v6459, %v6507
    %v6509 = vpop.f32.mrf.mxu0
    %v6510 = vadd.f32 %v6461, %v6509
    %6511 = vmatmul.bf16.gmra.mxu0 %v5899
    %v6512 = vpop.f32.mrf.mxu0
    %v6513 = vadd.f32 %v6464, %v6512
    %v6514 = vpop.f32.mrf.mxu0
    %v6515 = vadd.f32 %v6466, %v6514
    %6516 = vmatmul.bf16.gmra.mxu0 %v5908
    %v6517 = vpop.f32.mrf.mxu0
    %v6518 = vadd.f32 %v6469, %v6517
    %v6519 = vpop.f32.mrf.mxu0
    %v6520 = vadd.f32 %v6471, %v6519
    %6521 = vmatmul.bf16.gmra.mxu0 %v5917
    %v6522 = vpop.f32.mrf.mxu0
    %v6523 = vadd.f32 %v6474, %v6522
    %v6524 = vpop.f32.mrf.mxu0
    %v6525 = vadd.f32 %v6476, %v6524
    %6526 = vdwg.mxu0
    %6527 = vmatpush.bf16.msra.mxu0 %v6308
    %6528 = vmatpush.bf16.msra.mxu0 %v6307
    %6529 = vmatpush.bf16.msra.mxu0 %v6306
    %6530 = vmatpush.bf16.msra.mxu0 %v6305
    %6531 = vmatpush.bf16.msra.mxu0 %v6304
    %6532 = vmatpush.bf16.msra.mxu0 %v6303
    %6533 = vmatpush.bf16.msra.mxu0 %v6302
    %6534 = vmatpush.bf16.msra.mxu0 %v6301
    %6535 = vmatmul.bf16.gmra.mxu0 %v5855
    %v6536 = vpop.f32.mrf.mxu0
    %v6537 = vadd.f32 %v6488, %v6536
    %v6538 = vpop.f32.mrf.mxu0
    %v6539 = vadd.f32 %v6490, %v6538
    %6540 = vmatmul.bf16.gmra.mxu0 %v5864
    %v6541 = vpop.f32.mrf.mxu0
    %v6542 = vadd.f32 %v6493, %v6541
    %v6543 = vpop.f32.mrf.mxu0
    %v6544 = vadd.f32 %v6495, %v6543
    %6545 = vmatmul.bf16.gmra.mxu0 %v5873
    %v6546 = vpop.f32.mrf.mxu0
    %v6547 = vadd.f32 %v6498, %v6546
    %v6548 = vpop.f32.mrf.mxu0
    %v6549 = vadd.f32 %v6500, %v6548
    %6550 = vmatmul.bf16.gmra.mxu0 %v5882
    %v6551 = vpop.f32.mrf.mxu0
    %v6552 = vadd.f32 %v6503, %v6551
    %v6553 = vpop.f32.mrf.mxu0
    %v6554 = vadd.f32 %v6505, %v6553
    %6555 = vmatmul.bf16.gmra.mxu0 %v5891
    %v6556 = vpop.f32.mrf.mxu0
    %v6557 = vadd.f32 %v6508, %v6556
    %v6558 = vpop.f32.mrf.mxu0
    %v6559 = vadd.f32 %v6510, %v6558
    %6560 = vmatmul.bf16.gmra.mxu0 %v5900
    %v6561 = vpop.f32.mrf.mxu0
    %v6562 = vadd.f32 %v6513, %v6561
    %v6563 = vpop.f32.mrf.mxu0
    %v6564 = vadd.f32 %v6515, %v6563
    %6565 = vmatmul.bf16.gmra.mxu0 %v5909
    %v6566 = vpop.f32.mrf.mxu0
    %v6567 = vadd.f32 %v6518, %v6566
    %v6568 = vpop.f32.mrf.mxu0
    %v6569 = vadd.f32 %v6520, %v6568
    %6570 = vmatmul.bf16.gmra.mxu0 %v5918
    %v6571 = vpop.f32.mrf.mxu0
    %v6572 = vadd.f32 %v6523, %v6571
    %v6573 = vpop.f32.mrf.mxu0
    %v6574 = vadd.f32 %v6525, %v6573
    %6575 = vdwg.mxu0
    %6576 = vmatpush.bf16.msra.mxu0 %v6316
    %6577 = vmatpush.bf16.msra.mxu0 %v6315
    %6578 = vmatpush.bf16.msra.mxu0 %v6314
    %6579 = vmatpush.bf16.msra.mxu0 %v6313
    %6580 = vmatpush.bf16.msra.mxu0 %v6312
    %6581 = vmatpush.bf16.msra.mxu0 %v6311
    %6582 = vmatpush.bf16.msra.mxu0 %v6310
    %6583 = vmatpush.bf16.msra.mxu0 %v6309
    %6584 = vmatmul.bf16.gmra.mxu0 %v5856
    %v6585 = vpop.f32.mrf.mxu0
    %v6586 = vadd.f32 %v6537, %v6585
    %v6587 = vpop.f32.mrf.mxu0
    %v6588 = vadd.f32 %v6539, %v6587
    %6589 = vmatmul.bf16.gmra.mxu0 %v5865
    %v6590 = vpop.f32.mrf.mxu0
    %v6591 = vadd.f32 %v6542, %v6590
    %v6592 = vpop.f32.mrf.mxu0
    %v6593 = vadd.f32 %v6544, %v6592
    %6594 = vmatmul.bf16.gmra.mxu0 %v5874
    %v6595 = vpop.f32.mrf.mxu0
    %v6596 = vadd.f32 %v6547, %v6595
    %v6597 = vpop.f32.mrf.mxu0
    %v6598 = vadd.f32 %v6549, %v6597
    %6599 = vmatmul.bf16.gmra.mxu0 %v5883
    %v6600 = vpop.f32.mrf.mxu0
    %v6601 = vadd.f32 %v6552, %v6600
    %v6602 = vpop.f32.mrf.mxu0
    %v6603 = vadd.f32 %v6554, %v6602
    %6604 = vmatmul.bf16.gmra.mxu0 %v5892
    %v6605 = vpop.f32.mrf.mxu0
    %v6606 = vadd.f32 %v6557, %v6605
    %v6607 = vpop.f32.mrf.mxu0
    %v6608 = vadd.f32 %v6559, %v6607
    %6609 = vmatmul.bf16.gmra.mxu0 %v5901
    %v6610 = vpop.f32.mrf.mxu0
    %v6611 = vadd.f32 %v6562, %v6610
    %v6612 = vpop.f32.mrf.mxu0
    %v6613 = vadd.f32 %v6564, %v6612
    %6614 = vmatmul.bf16.gmra.mxu0 %v5910
    %v6615 = vpop.f32.mrf.mxu0
    %v6616 = vadd.f32 %v6567, %v6615
    %v6617 = vpop.f32.mrf.mxu0
    %v6618 = vadd.f32 %v6569, %v6617
    %6619 = vmatmul.bf16.gmra.mxu0 %v5919
    %v6620 = vpop.f32.mrf.mxu0
    %v6621 = vadd.f32 %v6572, %v6620
    %v6622 = vpop.f32.mrf.mxu0
    %v6623 = vadd.f32 %v6574, %v6622
    %6624 = vdwg.mxu0
    %6625 = vmatpush.bf16.msra.mxu0 %v6324
    %6626 = vmatpush.bf16.msra.mxu0 %v6323
    %6627 = vmatpush.bf16.msra.mxu0 %v6322
    %6628 = vmatpush.bf16.msra.mxu0 %v6321
    %6629 = vmatpush.bf16.msra.mxu0 %v6320
    %6630 = vmatpush.bf16.msra.mxu0 %v6319
    %6631 = vmatpush.bf16.msra.mxu0 %v6318
    %6632 = vmatpush.bf16.msra.mxu0 %v6317
    %6633 = vmatmul.bf16.gmra.mxu0 %v5857
    %v6634 = vpop.f32.mrf.mxu0
    %v6635 = vadd.f32 %v6586, %v6634
    %v6636 = vpop.f32.mrf.mxu0
    %v6637 = vadd.f32 %v6588, %v6636
    %6638 = vmatmul.bf16.gmra.mxu0 %v5866
    %v6639 = vpop.f32.mrf.mxu0
    %v6640 = vadd.f32 %v6591, %v6639
    %v6641 = vpop.f32.mrf.mxu0
    %v6642 = vadd.f32 %v6593, %v6641
    %6643 = vmatmul.bf16.gmra.mxu0 %v5875
    %v6644 = vpop.f32.mrf.mxu0
    %v6645 = vadd.f32 %v6596, %v6644
    %v6646 = vpop.f32.mrf.mxu0
    %v6647 = vadd.f32 %v6598, %v6646
    %6648 = vmatmul.bf16.gmra.mxu0 %v5884
    %v6649 = vpop.f32.mrf.mxu0
    %v6650 = vadd.f32 %v6601, %v6649
    %v6651 = vpop.f32.mrf.mxu0
    %v6652 = vadd.f32 %v6603, %v6651
    %6653 = vmatmul.bf16.gmra.mxu0 %v5893
    %v6654 = vpop.f32.mrf.mxu0
    %v6655 = vadd.f32 %v6606, %v6654
    %v6656 = vpop.f32.mrf.mxu0
    %v6657 = vadd.f32 %v6608, %v6656
    %6658 = vmatmul.bf16.gmra.mxu0 %v5902
    %v6659 = vpop.f32.mrf.mxu0
    %v6660 = vadd.f32 %v6611, %v6659
    %v6661 = vpop.f32.mrf.mxu0
    %v6662 = vadd.f32 %v6613, %v6661
    %6663 = vmatmul.bf16.gmra.mxu0 %v5911
    %v6664 = vpop.f32.mrf.mxu0
    %v6665 = vadd.f32 %v6616, %v6664
    %v6666 = vpop.f32.mrf.mxu0
    %v6667 = vadd.f32 %v6618, %v6666
    %6668 = vmatmul.bf16.gmra.mxu0 %v5920
    %v6669 = vpop.f32.mrf.mxu0
    %v6670 = vadd.f32 %v6621, %v6669
    %v6671 = vpop.f32.mrf.mxu0
    %v6672 = vadd.f32 %v6623, %v6671
    %6673 = vdwg.mxu0
    %6674 = vmatpush.bf16.msra.mxu0 %v6332
    %6675 = vmatpush.bf16.msra.mxu0 %v6331
    %6676 = vmatpush.bf16.msra.mxu0 %v6330
    %6677 = vmatpush.bf16.msra.mxu0 %v6329
    %6678 = vmatpush.bf16.msra.mxu0 %v6328
    %6679 = vmatpush.bf16.msra.mxu0 %v6327
    %6680 = vmatpush.bf16.msra.mxu0 %v6326
    %6681 = vmatpush.bf16.msra.mxu0 %v6325
    %6682 = vmatmul.bf16.gmra.mxu0 %v5858
    %v6683 = vpop.f32.mrf.mxu0
    %v6684 = vadd.f32 %v6635, %v6683
    %v6685 = vpop.f32.mrf.mxu0
    %v6686 = vadd.f32 %v6637, %v6685
    %6687 = vmatmul.bf16.gmra.mxu0 %v5867
    %v6688 = vpop.f32.mrf.mxu0
    %v6689 = vadd.f32 %v6640, %v6688
    %v6690 = vpop.f32.mrf.mxu0
    %v6691 = vadd.f32 %v6642, %v6690
    %6692 = vmatmul.bf16.gmra.mxu0 %v5876
    %v6693 = vpop.f32.mrf.mxu0
    %v6694 = vadd.f32 %v6645, %v6693
    %v6695 = vpop.f32.mrf.mxu0
    %v6696 = vadd.f32 %v6647, %v6695
    %6697 = vmatmul.bf16.gmra.mxu0 %v5885
    %v6698 = vpop.f32.mrf.mxu0
    %v6699 = vadd.f32 %v6650, %v6698
    %v6700 = vpop.f32.mrf.mxu0
    %v6701 = vadd.f32 %v6652, %v6700
    %6702 = vmatmul.bf16.gmra.mxu0 %v5894
    %v6703 = vpop.f32.mrf.mxu0
    %v6704 = vadd.f32 %v6655, %v6703
    %v6705 = vpop.f32.mrf.mxu0
    %v6706 = vadd.f32 %v6657, %v6705
    %6707 = vmatmul.bf16.gmra.mxu0 %v5903
    %v6708 = vpop.f32.mrf.mxu0
    %v6709 = vadd.f32 %v6660, %v6708
    %v6710 = vpop.f32.mrf.mxu0
    %v6711 = vadd.f32 %v6662, %v6710
    %6712 = vmatmul.bf16.gmra.mxu0 %v5912
    %v6713 = vpop.f32.mrf.mxu0
    %v6714 = vadd.f32 %v6665, %v6713
    %v6715 = vpop.f32.mrf.mxu0
    %v6716 = vadd.f32 %v6667, %v6715
    %6717 = vmatmul.bf16.gmra.mxu0 %v5921
    %v6718 = vpop.f32.mrf.mxu0
    %v6719 = vadd.f32 %v6670, %v6718
    %v6720 = vpop.f32.mrf.mxu0
    %v6721 = vadd.f32 %v6672, %v6720
    %6722 = vdwg.mxu0
    %6723 = vmatpush.bf16.msra.mxu0 %v6340
    %6724 = vmatpush.bf16.msra.mxu0 %v6339
    %6725 = vmatpush.bf16.msra.mxu0 %v6338
    %6726 = vmatpush.bf16.msra.mxu0 %v6337
    %6727 = vmatpush.bf16.msra.mxu0 %v6336
    %6728 = vmatpush.bf16.msra.mxu0 %v6335
    %6729 = vmatpush.bf16.msra.mxu0 %v6334
    %6730 = vmatpush.bf16.msra.mxu0 %v6333
    %6731 = vmatmul.bf16.gmra.mxu0 %v5859
    %v6732 = vpop.f32.mrf.mxu0
    %v6733 = vadd.f32 %v6684, %v6732
    %v6734 = vpop.f32.mrf.mxu0
    %v6735 = vadd.f32 %v6686, %v6734
    %6736 = vmatmul.bf16.gmra.mxu0 %v5868
    %v6737 = vpop.f32.mrf.mxu0
    %v6738 = vadd.f32 %v6689, %v6737
    %v6739 = vpop.f32.mrf.mxu0
    %v6740 = vadd.f32 %v6691, %v6739
    %6741 = vmatmul.bf16.gmra.mxu0 %v5877
    %v6742 = vpop.f32.mrf.mxu0
    %v6743 = vadd.f32 %v6694, %v6742
    %v6744 = vpop.f32.mrf.mxu0
    %v6745 = vadd.f32 %v6696, %v6744
    %6746 = vmatmul.bf16.gmra.mxu0 %v5886
    %v6747 = vpop.f32.mrf.mxu0
    %v6748 = vadd.f32 %v6699, %v6747
    %v6749 = vpop.f32.mrf.mxu0
    %v6750 = vadd.f32 %v6701, %v6749
    %6751 = vmatmul.bf16.gmra.mxu0 %v5895
    %v6752 = vpop.f32.mrf.mxu0
    %v6753 = vadd.f32 %v6704, %v6752
    %v6754 = vpop.f32.mrf.mxu0
    %v6755 = vadd.f32 %v6706, %v6754
    %6756 = vmatmul.bf16.gmra.mxu0 %v5904
    %v6757 = vpop.f32.mrf.mxu0
    %v6758 = vadd.f32 %v6709, %v6757
    %v6759 = vpop.f32.mrf.mxu0
    %v6760 = vadd.f32 %v6711, %v6759
    %6761 = vmatmul.bf16.gmra.mxu0 %v5913
    %v6762 = vpop.f32.mrf.mxu0
    %v6763 = vadd.f32 %v6714, %v6762
    %v6764 = vpop.f32.mrf.mxu0
    %v6765 = vadd.f32 %v6716, %v6764
    %6766 = vmatmul.bf16.gmra.mxu0 %v5922
    %v6767 = vpop.f32.mrf.mxu0
    %v6768 = vadd.f32 %v6719, %v6767
    %v6769 = vpop.f32.mrf.mxu0
    %v6770 = vadd.f32 %v6721, %v6769
    %6771 = vdwg.mxu0
    %6772 = vmatpush.bf16.msra.mxu0 %v6348
    %6773 = vmatpush.bf16.msra.mxu0 %v6347
    %6774 = vmatpush.bf16.msra.mxu0 %v6346
    %6775 = vmatpush.bf16.msra.mxu0 %v6345
    %6776 = vmatpush.bf16.msra.mxu0 %v6344
    %6777 = vmatpush.bf16.msra.mxu0 %v6343
    %6778 = vmatpush.bf16.msra.mxu0 %v6342
    %6779 = vmatpush.bf16.msra.mxu0 %v6341
    %6780 = vmatmul.bf16.gmra.mxu0 %v5860
    %v6781 = vpop.f32.mrf.mxu0
    %v6782 = vadd.f32 %v6733, %v6781
    %v6783 = vpop.f32.mrf.mxu0
    %v6784 = vadd.f32 %v6735, %v6783
    %6785 = vmatmul.bf16.gmra.mxu0 %v5869
    %v6786 = vpop.f32.mrf.mxu0
    %v6787 = vadd.f32 %v6738, %v6786
    %v6788 = vpop.f32.mrf.mxu0
    %v6789 = vadd.f32 %v6740, %v6788
    %6790 = vmatmul.bf16.gmra.mxu0 %v5878
    %v6791 = vpop.f32.mrf.mxu0
    %v6792 = vadd.f32 %v6743, %v6791
    %v6793 = vpop.f32.mrf.mxu0
    %v6794 = vadd.f32 %v6745, %v6793
    %6795 = vmatmul.bf16.gmra.mxu0 %v5887
    %v6796 = vpop.f32.mrf.mxu0
    %v6797 = vadd.f32 %v6748, %v6796
    %v6798 = vpop.f32.mrf.mxu0
    %v6799 = vadd.f32 %v6750, %v6798
    %6800 = vmatmul.bf16.gmra.mxu0 %v5896
    %v6801 = vpop.f32.mrf.mxu0
    %v6802 = vadd.f32 %v6753, %v6801
    %v6803 = vpop.f32.mrf.mxu0
    %v6804 = vadd.f32 %v6755, %v6803
    %6805 = vmatmul.bf16.gmra.mxu0 %v5905
    %v6806 = vpop.f32.mrf.mxu0
    %v6807 = vadd.f32 %v6758, %v6806
    %v6808 = vpop.f32.mrf.mxu0
    %v6809 = vadd.f32 %v6760, %v6808
    %6810 = vmatmul.bf16.gmra.mxu0 %v5914
    %v6811 = vpop.f32.mrf.mxu0
    %v6812 = vadd.f32 %v6763, %v6811
    %v6813 = vpop.f32.mrf.mxu0
    %v6814 = vadd.f32 %v6765, %v6813
    %6815 = vmatmul.bf16.gmra.mxu0 %v5923
    %v6816 = vpop.f32.mrf.mxu0
    %v6817 = vadd.f32 %v6768, %v6816
    %v6818 = vpop.f32.mrf.mxu0
    %v6819 = vadd.f32 %v6770, %v6818
    %6820 = vdwg.mxu0
    %6821 = vmatpush.bf16.msra.mxu0 %v6356
    %6822 = vmatpush.bf16.msra.mxu0 %v6355
    %6823 = vmatpush.bf16.msra.mxu0 %v6354
    %6824 = vmatpush.bf16.msra.mxu0 %v6353
    %6825 = vmatpush.bf16.msra.mxu0 %v6352
    %6826 = vmatpush.bf16.msra.mxu0 %v6351
    %6827 = vmatpush.bf16.msra.mxu0 %v6350
    %6828 = vmatpush.bf16.msra.mxu0 %v6349
    %6829 = vmatmul.bf16.gmra.mxu0 %v5861
    %v6830 = vpop.f32.mrf.mxu0
    %v6831 = vadd.f32 %v6782, %v6830
    %v6832 = vpop.f32.mrf.mxu0
    %v6833 = vadd.f32 %v6784, %v6832
    %6834 = vmatmul.bf16.gmra.mxu0 %v5870
    %v6835 = vpop.f32.mrf.mxu0
    %v6836 = vadd.f32 %v6787, %v6835
    %v6837 = vpop.f32.mrf.mxu0
    %v6838 = vadd.f32 %v6789, %v6837
    %6839 = vmatmul.bf16.gmra.mxu0 %v5879
    %v6840 = vpop.f32.mrf.mxu0
    %v6841 = vadd.f32 %v6792, %v6840
    %v6842 = vpop.f32.mrf.mxu0
    %v6843 = vadd.f32 %v6794, %v6842
    %6844 = vmatmul.bf16.gmra.mxu0 %v5888
    %v6845 = vpop.f32.mrf.mxu0
    %v6846 = vadd.f32 %v6797, %v6845
    %v6847 = vpop.f32.mrf.mxu0
    %v6848 = vadd.f32 %v6799, %v6847
    %6849 = vmatmul.bf16.gmra.mxu0 %v5897
    %v6850 = vpop.f32.mrf.mxu0
    %v6851 = vadd.f32 %v6802, %v6850
    %v6852 = vpop.f32.mrf.mxu0
    %v6853 = vadd.f32 %v6804, %v6852
    %6854 = vmatmul.bf16.gmra.mxu0 %v5906
    %v6855 = vpop.f32.mrf.mxu0
    %v6856 = vadd.f32 %v6807, %v6855
    %v6857 = vpop.f32.mrf.mxu0
    %v6858 = vadd.f32 %v6809, %v6857
    %6859 = vmatmul.bf16.gmra.mxu0 %v5915
    %v6860 = vpop.f32.mrf.mxu0
    %v6861 = vadd.f32 %v6812, %v6860
    %v6862 = vpop.f32.mrf.mxu0
    %v6863 = vadd.f32 %v6814, %v6862
    %6864 = vmatmul.bf16.gmra.mxu0 %v5924
    %v6865 = vpop.f32.mrf.mxu0
    %v6866 = vadd.f32 %v6817, %v6865
    %v6867 = vpop.f32.mrf.mxu0
    %v6868 = vadd.f32 %v6819, %v6867
    %6869 = vdwg.mxu0
    %v6870 = vadd.f32 %v6831, %v6833
    %v6871 = vadd.f32 %v6870, %v6836
    %v6872 = vadd.f32 %v6871, %v6838
    %v6873 = vadd.f32 %v6872, %v6841
    %v6874 = vadd.f32 %v6873, %v6843
    %v6875 = vadd.f32 %v6874, %v6846
    %v6876 = vadd.f32 %v6875, %v6848
    %v6877 = vadd.f32 %v6876, %v6851
    %v6878 = vadd.f32 %v6877, %v6853
    %v6879 = vadd.f32 %v6878, %v6856
    %v6880 = vadd.f32 %v6879, %v6858
    %v6881 = vadd.f32 %v6880, %v6861
    %v6882 = vadd.f32 %v6881, %v6863
    %v6883 = vadd.f32 %v6882, %v6866
    %v6884 = vadd.f32 %v6883, %v6868
    %v6885 = vrot.slane %v6884, 4
    %v6886 = vadd.f32 %v6884, %v6885
    %v6887 = vrot.slane %v6886, 2
    %v6888 = vadd.f32 %v6886, %v6887
    %v6889 = vrot.slane %v6888, 1
    %v6890 = vadd.f32 %v6888, %v6889
    %v6891 = vmul.f32 %v6890, 0.0078125
    %v6892 = vmul.f32 %v6831, %v6831
    %v6893 = vmul.f32 %v6833, %v6833
    %v6894 = vmul.f32 %v6836, %v6836
    %v6895 = vmul.f32 %v6838, %v6838
    %v6896 = vmul.f32 %v6841, %v6841
    %v6897 = vmul.f32 %v6843, %v6843
    %v6898 = vmul.f32 %v6846, %v6846
    %v6899 = vmul.f32 %v6848, %v6848
    %v6900 = vmul.f32 %v6851, %v6851
    %v6901 = vmul.f32 %v6853, %v6853
    %v6902 = vmul.f32 %v6856, %v6856
    %v6903 = vmul.f32 %v6858, %v6858
    %v6904 = vmul.f32 %v6861, %v6861
    %v6905 = vmul.f32 %v6863, %v6863
    %v6906 = vmul.f32 %v6866, %v6866
    %v6907 = vmul.f32 %v6868, %v6868
    %v6908 = vadd.f32 %v6892, %v6893
    %v6909 = vadd.f32 %v6908, %v6894
    %v6910 = vadd.f32 %v6909, %v6895
    %v6911 = vadd.f32 %v6910, %v6896
    %v6912 = vadd.f32 %v6911, %v6897
    %v6913 = vadd.f32 %v6912, %v6898
    %v6914 = vadd.f32 %v6913, %v6899
    %v6915 = vadd.f32 %v6914, %v6900
    %v6916 = vadd.f32 %v6915, %v6901
    %v6917 = vadd.f32 %v6916, %v6902
    %v6918 = vadd.f32 %v6917, %v6903
    %v6919 = vadd.f32 %v6918, %v6904
    %v6920 = vadd.f32 %v6919, %v6905
    %v6921 = vadd.f32 %v6920, %v6906
    %v6922 = vadd.f32 %v6921, %v6907
    %v6923 = vrot.slane %v6922, 4
    %v6924 = vadd.f32 %v6922, %v6923
    %v6925 = vrot.slane %v6924, 2
    %v6926 = vadd.f32 %v6924, %v6925
    %v6927 = vrot.slane %v6926, 1
    %v6928 = vadd.f32 %v6926, %v6927
    %v6929 = vmul.f32 %v6928, 0.0078125
    %v6930 = vmul.f32 %v6891, %v6891
    %v6931 = vsub.f32 %v6929, %v6930
    %v6932 = vmax.f32 %v6931, 0.0
    %v6933 = vld [vmem:[%s5] sm:$0x1]
    %v6934 = vadd.f32 %v6932, 1e-05
    %v6935 = vrsqrt.pop %v6934
    %v6936 = vmul.f32 %v6935, %v6934
    %v6937 = vmul.f32 %v6936, %v6935
    %v6938 = vmul.f32 0.5, %v6937
    %v6939 = vsub.f32 1.5, %v6938
    %v6940 = vmul.f32 %v6935, %v6939
    %vm6941 = vweird.f32 %v6934
    %vm6942 = vweird.f32 %v6935
    %vm6943 = vmor %vm6941, %vm6942
    %v6944 = vsel %vm6943, %v6935, %v6940
    %v6945 = vmul.f32 %v6933, %v6944
    %v6946 = vld [vmem:[%s6] sm:$0x1]
    %v6947 = vmul.f32 %v6891, %v6945
    %v6948 = vsub.f32 %v6946, %v6947
    %v6950 = vperm.slane %v6945, 0
    %v6952 = vmul.f32 %v6831, %v6950
    %v6953 = vmul.f32 %v6833, %v6950
    %v6954 = vmul.f32 %v6836, %v6950
    %v6955 = vmul.f32 %v6838, %v6950
    %v6956 = vmul.f32 %v6841, %v6950
    %v6957 = vmul.f32 %v6843, %v6950
    %v6958 = vmul.f32 %v6846, %v6950
    %v6959 = vmul.f32 %v6848, %v6950
    %v6960 = vmul.f32 %v6851, %v6950
    %v6961 = vmul.f32 %v6853, %v6950
    %v6962 = vmul.f32 %v6856, %v6950
    %v6963 = vmul.f32 %v6858, %v6950
    %v6964 = vmul.f32 %v6861, %v6950
    %v6965 = vmul.f32 %v6863, %v6950
    %v6966 = vmul.f32 %v6866, %v6950
    %v6967 = vmul.f32 %v6868, %v6950
    %v6969 = vperm.slane %v6948, 0
    %v6971 = vadd.f32 %v6952, %v6969
    %v6972 = vadd.f32 %v6953, %v6969
    %v6973 = vadd.f32 %v6954, %v6969
    %v6974 = vadd.f32 %v6955, %v6969
    %v6975 = vadd.f32 %v6956, %v6969
    %v6976 = vadd.f32 %v6957, %v6969
    %v6977 = vadd.f32 %v6958, %v6969
    %v6978 = vadd.f32 %v6959, %v6969
    %v6979 = vadd.f32 %v6960, %v6969
    %v6980 = vadd.f32 %v6961, %v6969
    %v6981 = vadd.f32 %v6962, %v6969
    %v6982 = vadd.f32 %v6963, %v6969
    %v6983 = vadd.f32 %v6964, %v6969
    %v6984 = vadd.f32 %v6965, %v6969
    %v6985 = vadd.f32 %v6966, %v6969
    %v6986 = vadd.f32 %v6967, %v6969
    %v6987 = vmax.f32 %v6971, 0.0
    %v6988 = vmax.f32 %v6972, 0.0
    %v6989 = vmax.f32 %v6973, 0.0
    %v6990 = vmax.f32 %v6974, 0.0
    %v6991 = vmax.f32 %v6975, 0.0
    %v6992 = vmax.f32 %v6976, 0.0
    %v6993 = vmax.f32 %v6977, 0.0
    %v6994 = vmax.f32 %v6978, 0.0
    %v6995 = vmax.f32 %v6979, 0.0
    %v6996 = vmax.f32 %v6980, 0.0
    %v6997 = vmax.f32 %v6981, 0.0
    %v6998 = vmax.f32 %v6982, 0.0
    %v6999 = vmax.f32 %v6983, 0.0
    %v7000 = vmax.f32 %v6984, 0.0
    %v7001 = vmax.f32 %v6985, 0.0
    %v7002 = vmax.f32 %v6986, 0.0
    %vm7003 = vcmask 64512
    %7004 = vst.msk [vmem:[#allocation11] sm:$0xff] %vm7003, %v6987
    %7005 = vst.msk [vmem:[#allocation11 + $0x8] sm:$0xff] %vm7003, %v6988
    %7006 = vst.msk [vmem:[#allocation11 + $0x10] sm:$0xff] %vm7003, %v6989
    %7007 = vst.msk [vmem:[#allocation11 + $0x18] sm:$0xff] %vm7003, %v6990
    %7008 = vst.msk [vmem:[#allocation11 + $0x20] sm:$0xff] %vm7003, %v6991
    %7009 = vst.msk [vmem:[#allocation11 + $0x28] sm:$0xff] %vm7003, %v6992
    %7010 = vst.msk [vmem:[#allocation11 + $0x30] sm:$0xff] %vm7003, %v6993
    %7011 = vst.msk [vmem:[#allocation11 + $0x38] sm:$0xff] %vm7003, %v6994
    %7012 = vst.msk [vmem:[#allocation11 + $0x40] sm:$0xff] %vm7003, %v6995
    %7013 = vst.msk [vmem:[#allocation11 + $0x48] sm:$0xff] %vm7003, %v6996
    %7014 = vst.msk [vmem:[#allocation11 + $0x50] sm:$0xff] %vm7003, %v6997
    %7015 = vst.msk [vmem:[#allocation11 + $0x58] sm:$0xff] %vm7003, %v6998
    %7016 = vst.msk [vmem:[#allocation11 + $0x60] sm:$0xff] %vm7003, %v6999
    %7017 = vst.msk [vmem:[#allocation11 + $0x68] sm:$0xff] %vm7003, %v7000
    %7018 = vst.msk [vmem:[#allocation11 + $0x70] sm:$0xff] %vm7003, %v7001
    %7019 = vst.msk [vmem:[#allocation11 + $0x78] sm:$0xff] %vm7003, %v7002
    // Predicated region
    $region42: #{tpu_custom_call.1} parent=1 // pred_check
      _
    $region43: #{tpu_custom_call.1} parent=1 // pred_check_branch
      %7021 = sbr.rel (0) target = $region45
    $region44: #{tpu_custom_call.1} parent=1 // pred_region
      %7023 = vsyncadd [#allocation7], 0
      %s7024 = sshll.u32 [#allocation11], 4
      %s7025 = int_to_ptr.vmem [resolvable:$true] %s7024
      %s7026 = sshll.u32 %s7, 4
      %s7027 = int_to_ptr.hbm [resolvable:$true] %s7026
      %7032 = dma.vmem_to_hbm [thread:$0]  %s7025, 2048, %s7027, [#allocation7], 128, 128, 8
    $region45: #{tpu_custom_call.1} parent=1 // pred_fallthru
      _
    // Predicated region
    $region46: #{tpu_custom_call.1} parent=1 // pred_check
      _
    $region47: #{tpu_custom_call.1} parent=1 // pred_check_branch
      %7034 = sbr.rel (0) target = $region49
    $region48: #{tpu_custom_call.1} parent=1 // pred_region
      %7036 = dma.done [#allocation7], 2048
    $region49: #{tpu_custom_call.1} parent=1 // pred_fallthru
      _
    %7037 = vsyncpa [#allocation6], 1
    %7038 = vsyncpa [#allocation9], 1
    %7039 = vsyncpa [#allocation7], 1

</llo_original>
